<compile_context>
chip_gen: v6e
topology: v6e:2x2x1
jax: 0.10.0
libtpu: 0.0.40
codegen_flags: <defaults>
</compile_context>

<pallas_src>
import functools

import jax
import jax.numpy as jnp
import numpy as np
from jax.experimental import pallas as pl
from jax.experimental.pallas import tpu as pltpu

LANE = 128


def _round_up(x, m):
    return (x + m - 1) // m * m


def _vmem_capacity_bytes():
    """Best-effort per-core VMEM capacity; conservative fallback (v7x)."""
    try:
        cap = int(pltpu.get_tpu_info().vmem_capacity_bytes)
        if cap > 0:
            return cap
    except Exception:
        pass
    return 64 * 1024 * 1024


def _pick_band_rows(Ho, Wp, cin_pad, cout_pad, K, n_images, budget):
    """Pass-1 output-row band height (multiple of 8) fitting the VMEM budget."""
    ho8 = _round_up(max(Ho, 8), 8)
    cands = list(range(8, min(128, ho8) + 1, 8))

    def step_bytes(th):
        ho_pad = _round_up(Ho, th)
        img = (ho_pad + K) * Wp * cin_pad * 2    # resident padded image (bf16), 2 bufs
        wts = K * K * cin_pad * cout_pad * 2     # grid-invariant -> effectively resident
        band_out = th * Wp * cout_pad * 2        # bf16 conv band, 2 bufs
        acc = th * Wp * cout_pad * 4             # f32 accumulator value
        taps = (th + 1) * Wp * cin_pad * 2       # band load + shifted-tap temps
        stats = 2 * 2 * cout_pad * 4
        return 2 * img + wts + 2 * band_out + acc + 3 * taps + stats

    fitting = [t for t in cands if step_bytes(t) <= budget] or [8]
    th = max(fitting)
    # keep >= 2 total grid steps so the "parallel" axis can shard across v7x's 2 TCs
    if n_images * (_round_up(Ho, th) // th) < 2:
        multi = [t for t in fitting if n_images * (_round_up(Ho, t) // t) >= 2]
        if multi:
            th = max(multi)
    return th


def _pick_pass2_band(Ho_pad, Wp, cout_pad, cout, n_images, budget):
    """Pass-2 band height (rows of the image) — decoupled from pass 1, larger."""
    divs = [m for m in range(1, Ho_pad + 1) if Ho_pad % m == 0]

    def step_bytes(m):
        rows = m * Wp
        return 2 * rows * cout_pad * 2 + 2 * rows * cout * 4 + 4 * cout_pad * 4

    fitting = [m for m in divs if step_bytes(m) <= budget] or [1]
    m = max(fitting)
    if n_images * (Ho_pad // m) < 2:
        multi = [d for d in fitting if n_images * (Ho_pad // d) >= 2]
        if multi:
            m = max(multi)
    return m


def conv_stats_kernel(x_ref, w_ref, conv_ref, stats_ref, *,
                      K, th, Wp, Wo, Ho, cin_pad, cout_pad):
    """One output-row band: K*K shifted bf16 MXU matmuls (f32 acc) + masked
    per-channel sum / sum-of-squares for the BN statistics."""
    hb = pl.program_id(1)
    row0 = hb * th
    rows = th * Wp

    acc = jnp.zeros((rows, cout_pad), jnp.float32)
    for kh in range(K):
        # (th+1) padded input rows starting at output row row0, tap row kh.
        band = x_ref[0, pl.ds(row0 + kh, th + 1), :, :]          # (th+1, Wp, Cin_pad)
        band = band.reshape((th + 1) * Wp, cin_pad)              # Wp % 16 == 0 -> layout-preserving
        for kw in range(K):
            # Shift by kw along the flattened (h, w) axis; positions that would
            # wrap into the next row are invalid output columns (w >= Wo) and
            # are masked from the stats / cropped from the output.
            tap = band[kw:kw + rows, :]
            acc = acc + jnp.dot(tap, w_ref[kh * K + kw],
                                preferred_element_type=jnp.float32)

    # bf16 intermediate (halves pass-1 writeback and pass-2 read).
    conv_ref[0] = acc.astype(conv_ref.dtype)

    # Mask out alignment-padding rows (>= Ho) and columns (>= Wo) from the BN
    # statistics; stats themselves come from the f32 accumulator.
    r3 = jax.lax.broadcasted_iota(jnp.int32, (th, Wp, cout_pad), 0)
    c3 = jax.lax.broadcasted_iota(jnp.int32, (th, Wp, cout_pad), 1)
    valid = ((r3 + row0 < Ho) & (c3 < Wo)).reshape(rows, cout_pad)
    accm = jnp.where(valid, acc, 0.0)
    stats_ref[0, 0, pl.ds(0, 1), :] = jnp.sum(accm, axis=0, keepdims=True)
    stats_ref[0, 0, pl.ds(1, 1), :] = jnp.sum(accm * acc, axis=0, keepdims=True)


def bn_relu_kernel(conv_ref, scale_ref, shift_ref, o_ref, *, add_relu, cout):
    """Streaming per-channel affine (+ ReLU); writes only the real Cout lanes."""
    y = conv_ref[0].astype(jnp.float32) * scale_ref[...] + shift_ref[...]
    if add_relu:
        y = jnp.maximum(y, 0.0)
    o_ref[0] = y[:, :cout]


def conv_bn_relu(x_nchw, weight_oihw, bias, gamma, beta, *,
                 padding=1, add_relu=True, eps=1e-5, band_rows=None):
    """Matches ConvBnRelu.forward (stride=1, groups=1, dilation=1, train-mode BN)."""
    # Per-channel conv bias added before train-mode BN is exactly cancelled by
    # the mean subtraction -> skip it (saves a full VPU pass).
    del bias

    N, Cin, H, W = x_nchw.shape
    Cout, Cin_w, KH, KW = weight_oihw.shape
    assert Cin_w == Cin and KH == KW, "groups=1, square kernel only"
    K = KH
    Ho = H + 2 * padding - K + 1
    Wo = W + 2 * padding - K + 1
    assert Ho > 0 and Wo > 0

    cin_pad = _round_up(Cin, LANE)
    cout_pad = _round_up(Cout, LANE)
    # Pad input width to a multiple of 16 (bf16 sublane tile) so the in-kernel
    # (rows, Wp, Cin) -> (rows*Wp, Cin) reshape is layout-preserving.
    Wp = _round_up(W + 2 * padding, 16)

    vmem_cap = _vmem_capacity_bytes()
    tile_budget = min(vmem_cap * 3 // 8, 40 * 1024 * 1024)   # generation-aware
    vmem_limit = int(min(vmem_cap * 3 // 4, 100 * 1024 * 1024))

    if band_rows is None:
        th = _pick_band_rows(Ho, Wp, cin_pad, cout_pad, K, N, tile_budget)
    else:
        th = int(band_rows)
    assert th > 0 and th % 8 == 0
    Ho_pad = _round_up(Ho, th)
    Hp_pad = Ho_pad + K            # covers the (th+1)-row band of the last tile
    n_hbands = Ho_pad // th

    # ---- glue: NCHW -> NHWC bf16, zero pad (conv pad + alignment pad) -------
    x_nhwc = jnp.transpose(x_nchw.astype(jnp.bfloat16), (0, 2, 3, 1))
    x_p = jnp.pad(x_nhwc, ((0, 0),
                           (padding, Hp_pad - H - padding),
                           (padding, Wp - W - padding),
                           (0, cin_pad - Cin)))

    w_taps = jnp.transpose(weight_oihw, (2, 3, 1, 0)).reshape(K * K, Cin, Cout)
    w_taps = jnp.pad(w_taps.astype(jnp.bfloat16),
                     ((0, 0), (0, cin_pad - Cin), (0, cout_pad - Cout)))

    # ---- pass 1: in-kernel tap accumulation + masked per-band stats ---------
    conv_rows, stats = pl.pallas_call(
        functools.partial(conv_stats_kernel, K=K, th=th, Wp=Wp, Wo=Wo, Ho=Ho,
                          cin_pad=cin_pad, cout_pad=cout_pad),
        grid=(N, n_hbands),
        in_specs=[
            # whole padded image, resident across the h-band axis
            pl.BlockSpec((1, Hp_pad, Wp, cin_pad), lambda n, hb: (n, 0, 0, 0)),
            # grid-invariant tap weights, resident
            pl.BlockSpec((K * K, cin_pad, cout_pad), lambda n, hb: (0, 0, 0)),
        ],
        out_specs=[
            pl.BlockSpec((1, th * Wp, cout_pad), lambda n, hb: (n, hb, 0)),
            pl.BlockSpec((1, 1, 2, cout_pad), lambda n, hb: (n, hb, 0, 0)),
        ],
        out_shape=[
            jax.ShapeDtypeStruct((N, Ho_pad * Wp, cout_pad), jnp.bfloat16),
            jax.ShapeDtypeStruct((N, n_hbands, 2, cout_pad), jnp.float32),
        ],
        compiler_params=pltpu.CompilerParams(
            dimension_semantics=("parallel", "arbitrary"),
            vmem_limit_bytes=vmem_limit),
    )(x_p, w_taps)

    # ---- tiny per-channel reduction + BN affine (plain JAX) -----------------
    totals = jnp.sum(stats, axis=(0, 1))                   # (2, Cout_pad)
    count = jnp.float32(N * Ho * Wo)
    mean = totals[0] / count
    # single-pass var = E[x^2] - mean^2 in f32 (PyTorch biased var); clamp >= 0.
    var = jnp.maximum(totals[1] / count - mean * mean, 0.0)
    gamma_p = jnp.pad(gamma.astype(jnp.float32), (0, cout_pad - Cout))
    beta_p = jnp.pad(beta.astype(jnp.float32), (0, cout_pad - Cout))
    scale = gamma_p * jax.lax.rsqrt(var + eps)
    shift = beta_p - mean * scale

    # ---- pass 2: streaming affine + ReLU, larger decoupled tiles ------------
    m2 = _pick_pass2_band(Ho_pad, Wp, cout_pad, Cout, N, tile_budget)
    rows2 = m2 * Wp
    out_rows = pl.pallas_call(
        functools.partial(bn_relu_kernel, add_relu=add_relu, cout=Cout),
        grid=(N, Ho_pad // m2),
        in_specs=[
            pl.BlockSpec((1, rows2, cout_pad), lambda n, b: (n, b, 0)),
            pl.BlockSpec((1, cout_pad), lambda n, b: (0, 0)),
            pl.BlockSpec((1, cout_pad), lambda n, b: (0, 0)),
        ],
        out_specs=pl.BlockSpec((1, rows2, Cout), lambda n, b: (n, b, 0)),
        out_shape=jax.ShapeDtypeStruct((N, Ho_pad * Wp, Cout), jnp.float32),
        compiler_params=pltpu.CompilerParams(
            dimension_semantics=("parallel", "parallel"),
            vmem_limit_bytes=vmem_limit),
    )(conv_rows, scale.reshape(1, cout_pad), shift.reshape(1, cout_pad))

    # Crop the alignment padding and go back to NCHW like the PyTorch module.
    out = out_rows.reshape(N, Ho_pad, Wp, Cout)[:, :Ho, :Wo, :]
    return jnp.transpose(out, (0, 3, 1, 2))


def reference(x_nchw, weight_oihw, bias, gamma, beta, *,
              padding=1, add_relu=True, eps=1e-5):
    """Pure-JAX f32 reference mirroring PyTorch semantics (train-mode BN)."""
    y = jax.lax.conv_general_dilated(
        x_nchw.astype(jnp.float32), weight_oihw.astype(jnp.float32),
        window_strides=(1, 1), padding=[(padding, padding)] * 2,
        dimension_numbers=('NCHW', 'OIHW', 'NCHW'))
    y = y + bias[None, :, None, None]
    mean = y.mean(axis=(0, 2, 3), keepdims=True)
    var = ((y - mean) ** 2).mean(axis=(0, 2, 3), keepdims=True)
    y = (y - mean) * jax.lax.rsqrt(var + eps)
    y = y * gamma[None, :, None, None] + beta[None, :, None, None]
    if add_relu:
        y = jnp.maximum(y, 0.0)
    return y


if __name__ == "__main__":
    def run_case(key, N, Cin, H, W, Cout, K=3, padding=1, add_relu=True,
                 band_rows=None):
        k_x, k_w, k_b, k_g, k_bt = jax.random.split(key, 5)
        x = jax.random.normal(k_x, (N, Cin, H, W), jnp.float32)
        fan_in = Cin * K * K
        bound = 1.0 / np.sqrt(fan_in)
        weight = jax.random.uniform(k_w, (Cout, Cin, K, K), jnp.float32,
                                    -bound, bound)
        bias = jax.random.uniform(k_b, (Cout,), jnp.float32, -bound, bound)
        gamma = 1.0 + 0.1 * jax.random.normal(k_g, (Cout,), jnp.float32)
        beta = 0.1 * jax.random.normal(k_bt, (Cout,), jnp.float32)

        out = conv_bn_relu(x, weight, bias, gamma, beta,
                           padding=padding, add_relu=add_relu,
                           band_rows=band_rows)
        out = jax.block_until_ready(out)
        ref = reference(x, weight, bias, gamma, beta,
                        padding=padding, add_relu=add_relu)
        # Tolerance reflects bf16 MXU operands + bf16 intermediate vs f32 ref.
        np.testing.assert_allclose(np.asarray(out), np.asarray(ref),
                                   rtol=3e-2, atol=3e-2)

    key = jax.random.PRNGKey(0)
    k1, k2, k3 = jax.random.split(key, 3)
    # single h-band per image, 2 parallel grid steps (one per image)
    run_case(k1, N=2, Cin=4, H=16, W=16, Cout=8)
    # multiple h-bands + width-alignment masking
    run_case(k2, N=2, Cin=4, H=24, W=20, Cout=8, band_rows=8)
    # N=1, Ho not a multiple of the band -> row masking; no ReLU; Cout=16
    run_case(k3, N=1, Cin=8, H=20, W=18, Cout=16, add_relu=False, band_rows=8)

    print("KERNEL_OK")
</pallas_src>

<mosaic_0001>
module attributes {stable_mosaic.version = 11 : i64} {
  func.func @conv_stats_kernel(%arg0: i32, %arg1: i32, %arg2: memref<1x19x32x128xbf16, #tpu.memory_space<vmem>>, %arg3: memref<9x128x128xbf16, #tpu.memory_space<vmem>>, %arg4: memref<1x512x128xbf16, #tpu.memory_space<vmem>>, %arg5: memref<1x1x2x128xf32, #tpu.memory_space<vmem>>) attributes {dimension_semantics = [#tpu.dimension_semantics<parallel>, #tpu.dimension_semantics<arbitrary>], iteration_bounds = array<i64: 2, 1>, scalar_prefetch = 0 : i64, scratch_operands = 0 : i64, tpu.core_type = #tpu.core_type<tc>, window_params = [{transform_indices = @transform_0, window_bounds = array<i64: 1, 19, 32, 128>}, {pipeline_mode = #tpu.pipeline_mode<synchronous>, transform_indices = @transform_1, window_bounds = array<i64: 9, 128, 128>}, {transform_indices = @transform_2, window_bounds = array<i64: 1, 512, 128>}, {transform_indices = @transform_3, window_bounds = array<i64: 1, 1, 2, 128>}]} {
    %c16_i32 = arith.constant 16 : i32
    %0 = arith.muli %arg1, %c16_i32 : i32
    %cst = arith.constant 0.000000e+00 : f32
    %1 = vector.broadcast %cst : f32 to vector<512x128xf32>
    %c0_i32 = arith.constant 0 : i32
    %2 = arith.addi %0, %c0_i32 : i32
    %c0 = arith.constant 0 : index
    %3 = arith.index_cast %2 : i32 to index
    %c0_0 = arith.constant 0 : index
    %c0_1 = arith.constant 0 : index
    %4 = vector.load %arg2[%c0, %3, %c0_0, %c0_1] : memref<1x19x32x128xbf16, #tpu.memory_space<vmem>>, vector<1x17x32x128xbf16>
    %5 = vector.shape_cast %4 : vector<1x17x32x128xbf16> to vector<17x32x128xbf16>
    %6 = vector.shape_cast %5 : vector<17x32x128xbf16> to vector<544x128xbf16>
    %7 = vector.extract_strided_slice %6 {offsets = [0, 0], sizes = [512, 128], strides = [1, 1]} : vector<544x128xbf16> to vector<512x128xbf16>
    %c0_2 = arith.constant 0 : index
    %c0_3 = arith.constant 0 : index
    %c0_4 = arith.constant 0 : index
    %8 = vector.load %arg3[%c0_2, %c0_3, %c0_4] : memref<9x128x128xbf16, #tpu.memory_space<vmem>>, vector<1x128x128xbf16>
    %9 = vector.shape_cast %8 : vector<1x128x128xbf16> to vector<128x128xbf16>
    %cst_5 = arith.constant dense<0.000000e+00> : vector<512x128xf32>
    %10 = tpu.matmul %7, %9, %cst_5 {dimension_numbers = #tpu.dot_dimension_numbers<[1], [0], [0], [1], [0, 0, 1, 1], [], []>} : vector<512x128xbf16>, vector<128x128xbf16>, vector<512x128xf32> -> vector<512x128xf32>
    %11 = arith.addf %1, %10 : vector<512x128xf32>
    %12 = vector.extract_strided_slice %6 {offsets = [1, 0], sizes = [512, 128], strides = [1, 1]} : vector<544x128xbf16> to vector<512x128xbf16>
    %c1 = arith.constant 1 : index
    %c0_6 = arith.constant 0 : index
    %c0_7 = arith.constant 0 : index
    %13 = vector.load %arg3[%c1, %c0_6, %c0_7] : memref<9x128x128xbf16, #tpu.memory_space<vmem>>, vector<1x128x128xbf16>
    %14 = vector.shape_cast %13 : vector<1x128x128xbf16> to vector<128x128xbf16>
    %cst_8 = arith.constant dense<0.000000e+00> : vector<512x128xf32>
    %15 = tpu.matmul %12, %14, %cst_8 {dimension_numbers = #tpu.dot_dimension_numbers<[1], [0], [0], [1], [0, 0, 1, 1], [], []>} : vector<512x128xbf16>, vector<128x128xbf16>, vector<512x128xf32> -> vector<512x128xf32>
    %16 = arith.addf %11, %15 : vector<512x128xf32>
    %17 = vector.extract_strided_slice %6 {offsets = [2, 0], sizes = [512, 128], strides = [1, 1]} : vector<544x128xbf16> to vector<512x128xbf16>
    %c2 = arith.constant 2 : index
    %c0_9 = arith.constant 0 : index
    %c0_10 = arith.constant 0 : index
    %18 = vector.load %arg3[%c2, %c0_9, %c0_10] : memref<9x128x128xbf16, #tpu.memory_space<vmem>>, vector<1x128x128xbf16>
    %19 = vector.shape_cast %18 : vector<1x128x128xbf16> to vector<128x128xbf16>
    %cst_11 = arith.constant dense<0.000000e+00> : vector<512x128xf32>
    %20 = tpu.matmul %17, %19, %cst_11 {dimension_numbers = #tpu.dot_dimension_numbers<[1], [0], [0], [1], [0, 0, 1, 1], [], []>} : vector<512x128xbf16>, vector<128x128xbf16>, vector<512x128xf32> -> vector<512x128xf32>
    %21 = arith.addf %16, %20 : vector<512x128xf32>
    %c1_i32 = arith.constant 1 : i32
    %22 = arith.addi %0, %c1_i32 : i32
    %c0_12 = arith.constant 0 : index
    %23 = arith.index_cast %22 : i32 to index
    %c0_13 = arith.constant 0 : index
    %c0_14 = arith.constant 0 : index
    %24 = vector.load %arg2[%c0_12, %23, %c0_13, %c0_14] : memref<1x19x32x128xbf16, #tpu.memory_space<vmem>>, vector<1x17x32x128xbf16>
    %25 = vector.shape_cast %24 : vector<1x17x32x128xbf16> to vector<17x32x128xbf16>
    %26 = vector.shape_cast %25 : vector<17x32x128xbf16> to vector<544x128xbf16>
    %27 = vector.extract_strided_slice %26 {offsets = [0, 0], sizes = [512, 128], strides = [1, 1]} : vector<544x128xbf16> to vector<512x128xbf16>
    %c3 = arith.constant 3 : index
    %c0_15 = arith.constant 0 : index
    %c0_16 = arith.constant 0 : index
    %28 = vector.load %arg3[%c3, %c0_15, %c0_16] : memref<9x128x128xbf16, #tpu.memory_space<vmem>>, vector<1x128x128xbf16>
    %29 = vector.shape_cast %28 : vector<1x128x128xbf16> to vector<128x128xbf16>
    %cst_17 = arith.constant dense<0.000000e+00> : vector<512x128xf32>
    %30 = tpu.matmul %27, %29, %cst_17 {dimension_numbers = #tpu.dot_dimension_numbers<[1], [0], [0], [1], [0, 0, 1, 1], [], []>} : vector<512x128xbf16>, vector<128x128xbf16>, vector<512x128xf32> -> vector<512x128xf32>
    %31 = arith.addf %21, %30 : vector<512x128xf32>
    %32 = vector.extract_strided_slice %26 {offsets = [1, 0], sizes = [512, 128], strides = [1, 1]} : vector<544x128xbf16> to vector<512x128xbf16>
    %c4 = arith.constant 4 : index
    %c0_18 = arith.constant 0 : index
    %c0_19 = arith.constant 0 : index
    %33 = vector.load %arg3[%c4, %c0_18, %c0_19] : memref<9x128x128xbf16, #tpu.memory_space<vmem>>, vector<1x128x128xbf16>
    %34 = vector.shape_cast %33 : vector<1x128x128xbf16> to vector<128x128xbf16>
    %cst_20 = arith.constant dense<0.000000e+00> : vector<512x128xf32>
    %35 = tpu.matmul %32, %34, %cst_20 {dimension_numbers = #tpu.dot_dimension_numbers<[1], [0], [0], [1], [0, 0, 1, 1], [], []>} : vector<512x128xbf16>, vector<128x128xbf16>, vector<512x128xf32> -> vector<512x128xf32>
    %36 = arith.addf %31, %35 : vector<512x128xf32>
    %37 = vector.extract_strided_slice %26 {offsets = [2, 0], sizes = [512, 128], strides = [1, 1]} : vector<544x128xbf16> to vector<512x128xbf16>
    %c5 = arith.constant 5 : index
    %c0_21 = arith.constant 0 : index
    %c0_22 = arith.constant 0 : index
    %38 = vector.load %arg3[%c5, %c0_21, %c0_22] : memref<9x128x128xbf16, #tpu.memory_space<vmem>>, vector<1x128x128xbf16>
    %39 = vector.shape_cast %38 : vector<1x128x128xbf16> to vector<128x128xbf16>
    %cst_23 = arith.constant dense<0.000000e+00> : vector<512x128xf32>
    %40 = tpu.matmul %37, %39, %cst_23 {dimension_numbers = #tpu.dot_dimension_numbers<[1], [0], [0], [1], [0, 0, 1, 1], [], []>} : vector<512x128xbf16>, vector<128x128xbf16>, vector<512x128xf32> -> vector<512x128xf32>
    %41 = arith.addf %36, %40 : vector<512x128xf32>
    %c2_i32 = arith.constant 2 : i32
    %42 = arith.addi %0, %c2_i32 : i32
    %c0_24 = arith.constant 0 : index
    %43 = arith.index_cast %42 : i32 to index
    %c0_25 = arith.constant 0 : index
    %c0_26 = arith.constant 0 : index
    %44 = vector.load %arg2[%c0_24, %43, %c0_25, %c0_26] : memref<1x19x32x128xbf16, #tpu.memory_space<vmem>>, vector<1x17x32x128xbf16>
    %45 = vector.shape_cast %44 : vector<1x17x32x128xbf16> to vector<17x32x128xbf16>
    %46 = vector.shape_cast %45 : vector<17x32x128xbf16> to vector<544x128xbf16>
    %47 = vector.extract_strided_slice %46 {offsets = [0, 0], sizes = [512, 128], strides = [1, 1]} : vector<544x128xbf16> to vector<512x128xbf16>
    %c6 = arith.constant 6 : index
    %c0_27 = arith.constant 0 : index
    %c0_28 = arith.constant 0 : index
    %48 = vector.load %arg3[%c6, %c0_27, %c0_28] : memref<9x128x128xbf16, #tpu.memory_space<vmem>>, vector<1x128x128xbf16>
    %49 = vector.shape_cast %48 : vector<1x128x128xbf16> to vector<128x128xbf16>
    %cst_29 = arith.constant dense<0.000000e+00> : vector<512x128xf32>
    %50 = tpu.matmul %47, %49, %cst_29 {dimension_numbers = #tpu.dot_dimension_numbers<[1], [0], [0], [1], [0, 0, 1, 1], [], []>} : vector<512x128xbf16>, vector<128x128xbf16>, vector<512x128xf32> -> vector<512x128xf32>
    %51 = arith.addf %41, %50 : vector<512x128xf32>
    %52 = vector.extract_strided_slice %46 {offsets = [1, 0], sizes = [512, 128], strides = [1, 1]} : vector<544x128xbf16> to vector<512x128xbf16>
    %c7 = arith.constant 7 : index
    %c0_30 = arith.constant 0 : index
    %c0_31 = arith.constant 0 : index
    %53 = vector.load %arg3[%c7, %c0_30, %c0_31] : memref<9x128x128xbf16, #tpu.memory_space<vmem>>, vector<1x128x128xbf16>
    %54 = vector.shape_cast %53 : vector<1x128x128xbf16> to vector<128x128xbf16>
    %cst_32 = arith.constant dense<0.000000e+00> : vector<512x128xf32>
    %55 = tpu.matmul %52, %54, %cst_32 {dimension_numbers = #tpu.dot_dimension_numbers<[1], [0], [0], [1], [0, 0, 1, 1], [], []>} : vector<512x128xbf16>, vector<128x128xbf16>, vector<512x128xf32> -> vector<512x128xf32>
    %56 = arith.addf %51, %55 : vector<512x128xf32>
    %57 = vector.extract_strided_slice %46 {offsets = [2, 0], sizes = [512, 128], strides = [1, 1]} : vector<544x128xbf16> to vector<512x128xbf16>
    %c8 = arith.constant 8 : index
    %c0_33 = arith.constant 0 : index
    %c0_34 = arith.constant 0 : index
    %58 = vector.load %arg3[%c8, %c0_33, %c0_34] : memref<9x128x128xbf16, #tpu.memory_space<vmem>>, vector<1x128x128xbf16>
    %59 = vector.shape_cast %58 : vector<1x128x128xbf16> to vector<128x128xbf16>
    %cst_35 = arith.constant dense<0.000000e+00> : vector<512x128xf32>
    %60 = tpu.matmul %57, %59, %cst_35 {dimension_numbers = #tpu.dot_dimension_numbers<[1], [0], [0], [1], [0, 0, 1, 1], [], []>} : vector<512x128xbf16>, vector<128x128xbf16>, vector<512x128xf32> -> vector<512x128xf32>
    %61 = arith.addf %56, %60 : vector<512x128xf32>
    %62 = arith.truncf %61 : vector<512x128xf32> to vector<512x128xbf16>
    %c0_36 = arith.constant 0 : index
    %c0_37 = arith.constant 0 : index
    %c0_38 = arith.constant 0 : index
    %63 = vector.load %arg4[%c0_36, %c0_37, %c0_38] : memref<1x512x128xbf16, #tpu.memory_space<vmem>>, vector<1x512x128xbf16>
    %64 = vector.shape_cast %63 : vector<1x512x128xbf16> to vector<512x128xbf16>
    %65 = vector.shape_cast %62 : vector<512x128xbf16> to vector<1x512x128xbf16>
    tpu.vector_store %arg4[%c0_36, %c0_37, %c0_38], %65 {strides = array<i32>} : memref<1x512x128xbf16, #tpu.memory_space<vmem>>, vector<1x512x128xbf16>,
    %66 = tpu.iota {dimensions = array<i32: 0>} : vector<16x32x128xi32>
    %67 = tpu.iota {dimensions = array<i32: 1>} : vector<16x32x128xi32>
    %68 = vector.broadcast %0 : i32 to vector<16x32x128xi32>
    %69 = arith.addi %66, %68 : vector<16x32x128xi32>
    %c16_i32_39 = arith.constant 16 : i32
    %70 = vector.broadcast %c16_i32_39 : i32 to vector<16x32x128xi32>
    %71 = arith.cmpi slt, %69, %70 : vector<16x32x128xi32>
    %c16_i32_40 = arith.constant 16 : i32
    %72 = vector.broadcast %c16_i32_40 : i32 to vector<16x32x128xi32>
    %73 = arith.cmpi slt, %67, %72 : vector<16x32x128xi32>
    %74 = arith.andi %71, %73 : vector<16x32x128xi1>
    %75 = vector.shape_cast %74 : vector<16x32x128xi1> to vector<512x128xi1>
    %cst_41 = arith.constant 0.000000e+00 : f32
    %76 = vector.broadcast %cst_41 : f32 to vector<512x128xf32>
    %77 = arith.select %75, %61, %76 : vector<512x128xi1>, vector<512x128xf32>
    %cst_42 = arith.constant dense<0.000000e+00> : vector<128xf32>
    %78 = vector.multi_reduction <add>, %77, %cst_42 [0] : vector<512x128xf32> to vector<128xf32>
    %79 = vector.shape_cast %78 : vector<128xf32> to vector<1x128xf32>
    %c0_43 = arith.constant 0 : index
    %c0_44 = arith.constant 0 : index
    %c0_45 = arith.constant 0 : index
    %c0_46 = arith.constant 0 : index
    %80 = vector.load %arg5[%c0_43, %c0_44, %c0_45, %c0_46] : memref<1x1x2x128xf32, #tpu.memory_space<vmem>>, vector<1x1x1x128xf32>
    %81 = vector.shape_cast %80 : vector<1x1x1x128xf32> to vector<1x128xf32>
    %82 = vector.shape_cast %79 : vector<1x128xf32> to vector<1x1x1x128xf32>
    tpu.vector_store %arg5[%c0_43, %c0_44, %c0_45, %c0_46], %82 {strides = array<i32>} : memref<1x1x2x128xf32, #tpu.memory_space<vmem>>, vector<1x1x1x128xf32>,
    %83 = arith.mulf %77, %61 : vector<512x128xf32>
    %cst_47 = arith.constant dense<0.000000e+00> : vector<128xf32>
    %84 = vector.multi_reduction <add>, %83, %cst_47 [0] : vector<512x128xf32> to vector<128xf32>
    %85 = vector.shape_cast %84 : vector<128xf32> to vector<1x128xf32>
    %c0_48 = arith.constant 0 : index
    %c0_49 = arith.constant 0 : index
    %c1_50 = arith.constant 1 : index
    %c0_51 = arith.constant 0 : index
    %86 = vector.load %arg5[%c0_48, %c0_49, %c1_50, %c0_51] : memref<1x1x2x128xf32, #tpu.memory_space<vmem>>, vector<1x1x1x128xf32>
    %87 = vector.shape_cast %86 : vector<1x1x1x128xf32> to vector<1x128xf32>
    %88 = vector.shape_cast %85 : vector<1x128xf32> to vector<1x1x1x128xf32>
    tpu.vector_store %arg5[%c0_48, %c0_49, %c1_50, %c0_51], %88 {strides = array<i32>} : memref<1x1x2x128xf32, #tpu.memory_space<vmem>>, vector<1x1x1x128xf32>,
    return
  }
  func.func @transform_0(%arg0: i32, %arg1: i32) -> (i32, i32, i32, i32) {
    %c0_i32 = arith.constant 0 : i32
    %c0_i32_0 = arith.constant 0 : i32
    %c0_i32_1 = arith.constant 0 : i32
    %c0_i32_2 = arith.constant 0 : i32
    return %arg0, %c0_i32, %c0_i32_0, %c0_i32_1 : i32, i32, i32, i32
  }
  func.func @transform_1(%arg0: i32, %arg1: i32) -> (i32, i32, i32) {
    %c0_i32 = arith.constant 0 : i32
    %c0_i32_0 = arith.constant 0 : i32
    %c0_i32_1 = arith.constant 0 : i32
    %c0_i32_2 = arith.constant 0 : i32
    return %c0_i32, %c0_i32_0, %c0_i32_1 : i32, i32, i32
  }
  func.func @transform_2(%arg0: i32, %arg1: i32) -> (i32, i32, i32) {
    %c0_i32 = arith.constant 0 : i32
    %c0_i32_0 = arith.constant 0 : i32
    return %arg0, %arg1, %c0_i32 : i32, i32, i32
  }
  func.func @transform_3(%arg0: i32, %arg1: i32) -> (i32, i32, i32, i32) {
    %c0_i32 = arith.constant 0 : i32
    %c0_i32_0 = arith.constant 0 : i32
    %c0_i32_1 = arith.constant 0 : i32
    return %arg0, %arg1, %c0_i32, %c0_i32_0 : i32, i32, i32, i32
  }
}

</mosaic_0001>

<llo_original>
// kernel: tpu_custom_call.1
$region0: #{tpu_custom_call.1}
  #allocation0 [shape = 'u32[]', space=smem, size = 0x4, offset = 0x4, fixed_abs, tag = 'smem constant byte address 0x4 - core index']
  #allocation1 [shape = 'u32[144,128]{1,0:T(1,128)}', space=vmem, size = 0x12000, scoped, tag = 'internal scratch']
  %s0 = inlined_call_operand.hbm [shape: bf16[2,19,32,128], index: 0, kind: input, shape index: {}]
  %s1 = inlined_call_operand.hbm [shape: bf16[9,128,128], index: 1, kind: input, shape index: {}]
  %s2 = inlined_call_operand.hbm [shape: bf16[2,512,128], index: 2, kind: output, shape index: {0}]
  %s3 = inlined_call_operand.hbm [shape: f32[2,1,2,128], index: 3, kind: output, shape index: {1}]
  %4 = xla_tuple %s2, %s3
  %s5 = sld [smem:[#allocation0]]
  $region57: #{tpu_custom_call.1} parent=0
    _
  %s7 = ssub.s32 1, %s5
  %s8 = scalar_select 0, %s7, %s5
  $region1: #{tpu_custom_call.1} parent=0
    #allocation2 [shape = 'u8[311296]{0}', space=vmem, size = 0x4c000, scoped, tag = 'input window, operand 0']
    #allocation3 [shape = 's32[2]{0}', space=sflag, size = 0x8, scoped, tag = 'scoped memory for tpu_custom_call.1']
    #allocation4 [shape = 's32[2]{0}', space=sflag, size = 0x8, scoped, tag = 'scoped memory for tpu_custom_call.1']
    #allocation5 [shape = 'u8[294912]{0}', space=vmem, size = 0x48000, scoped, tag = 'input window, operand 1, single buffered']
    #allocation6 [shape = 's32[1]{0}', space=sflag, size = 0x4, scoped, tag = 'scoped memory for tpu_custom_call.1']
    #allocation7 [shape = 'u8[262144]{0}', space=vmem, size = 0x40000, scoped, tag = 'output window, operand 0']
    #allocation8 [shape = 'u8[2048]{0}', space=vmem, size = 0x800, scoped, tag = 'output window, operand 1']
    #allocation9 [shape = 's32[2]{0}', space=sflag, size = 0x8, scoped, tag = 'scoped memory for tpu_custom_call.1']
    %9 = vsyncpa [#allocation3], 0
    %s10 = scalar_lea.sflag [#allocation3], 1
    %11 = vsyncpa %s10, 0
    %12 = vsyncpa [#allocation6], 0
    %13 = vsyncpa [#allocation4], 0
    %s14 = scalar_lea.sflag [#allocation4], 1
    %15 = vsyncpa %s14, 0
    %16 = vsyncpa [#allocation9], 0
    %s17 = scalar_lea.sflag [#allocation9], 1
    %18 = vsyncpa %s17, 0
    loop: start=0, step=1, limit=4
    $region2: #{tpu_custom_call.1} parent=1 // loop_pre_header
      _
    $region3: #{tpu_custom_call.1} parent=1 // loop_header
      %s20 = sphi 0, %s24
      %p21 = scmp.ge.s32.totalorder %s20, 4
      %s27 = sphi 0, %s39
      %s28 = sphi 0, %s35
      %s29 = sphi 0, %s27
      %s30 = sphi 0, %s28
      %s31 = sphi 0, %s29
      %s32 = sphi 0, %s30
      %s42 = sphi 0, %s44
      %s45 = sphi 0, %s42
      %s46 = sphi 0, %s45
      %s62 = sphi 0, %s46
      %s66 = sphi 0, %s66
      %s68 = sphi 0, %s66
      %s69 = sphi 0, %s68
      %s83 = sphi 0, %s69
      %s91 = sphi 0, %s93
      %s94 = sphi 0, %s91
      %s95 = sphi 0, %s94
      %s111 = sphi 0, %s95
      %s119 = sphi 0, %s121
      %s122 = sphi 0, %s119
      %s123 = sphi 0, %s122
      %s139 = sphi 0, %s123
    $region4: #{tpu_custom_call.1} parent=1 // loop_header_branch
      %23 = sbr.rel (%p21) target = $region8
    $region5: #{tpu_custom_call.1} parent=1 // loop_body
      %s25 = ssub.s32 %s20, 1
      %s26 = ssub.s32 %s20, 2
      %s33 = sadd.s32 1, %s28
      %p34 = scmp.ge.s32.totalorder %s33, 1
      %s35 = scalar_select %p34, 0, %s33
      %s36 = sadd.s32 1, %s27
      %s37 = scalar_select %p34, %s36, %s27
      %p38 = scmp.ge.s32.totalorder %s37, 2
      %s39 = scalar_select %p38, 0, %s37
      %s40 = ssub.s32 %s27, %s39
      %p41 = scmp.eq.s32.totalorder %s40, 0
      %s43 = sadd.s32 %s42, 1
      %s44 = scalar_select %p41, %s42, %s43
      %p47 = pneg %p41
      %p48 = scmp.eq.s32.totalorder %s20, 1
      %p49 = por %p47, %p48
      %p50 = scmp.ne.s32.totalorder %s42, %s45
      %p51 = scmp.eq.s32.totalorder %s20, 0
      %p52 = por %p50, %p51
      %p53 = scmp.ne.s32.totalorder %s42, %s45
      %p54 = scmp.eq.s32.totalorder %s25, 1
      %p55 = por %p53, %p54
      %p56 = scmp.ne.s32.totalorder %s45, %s46
      %p57 = scmp.eq.s32.totalorder %s25, 0
      %p58 = por %p56, %p57
      %p59 = scmp.ne.s32.totalorder %s45, %s46
      %p60 = scmp.eq.s32.totalorder %s26, 1
      %p61 = por %p59, %p60
      %p63 = scmp.ne.s32.totalorder %s46, %s62
      %p64 = scmp.eq.s32.totalorder %s26, 0
      %p65 = por %p63, %p64
      %s67 = sadd.s32 %s66, 1
      %p70 = scmp.eq.s32.totalorder %s20, 1
      %p71 = scmp.ne.s32.totalorder %s66, %s68
      %p72 = scmp.eq.s32.totalorder %s20, 0
      %p73 = por %p71, %p72
      %p74 = scmp.ne.s32.totalorder %s66, %s68
      %p75 = scmp.eq.s32.totalorder %s25, 1
      %p76 = por %p74, %p75
      %p77 = scmp.ne.s32.totalorder %s68, %s69
      %p78 = scmp.eq.s32.totalorder %s25, 0
      %p79 = por %p77, %p78
      %p80 = scmp.ne.s32.totalorder %s68, %s69
      %p81 = scmp.eq.s32.totalorder %s26, 1
      %p82 = por %p80, %p81
      %p84 = scmp.ne.s32.totalorder %s69, %s83
      %p85 = scmp.eq.s32.totalorder %s26, 0
      %p86 = por %p84, %p85
      %s87 = ssub.s32 %s27, %s39
      %s88 = ssub.s32 %s28, %s35
      %s89 = sor.u32 %s87, %s88
      %p90 = scmp.eq.s32.totalorder %s89, 0
      %s92 = sadd.s32 %s91, 1
      %s93 = scalar_select %p90, %s91, %s92
      %p96 = pneg %p90
      %p97 = scmp.eq.s32.totalorder %s20, 1
      %p98 = por %p96, %p97
      %p99 = scmp.ne.s32.totalorder %s91, %s94
      %p100 = scmp.eq.s32.totalorder %s20, 0
      %p101 = por %p99, %p100
      %p102 = scmp.ne.s32.totalorder %s91, %s94
      %p103 = scmp.eq.s32.totalorder %s25, 1
      %p104 = por %p102, %p103
      %p105 = scmp.ne.s32.totalorder %s94, %s95
      %p106 = scmp.eq.s32.totalorder %s25, 0
      %p107 = por %p105, %p106
      %p108 = scmp.ne.s32.totalorder %s94, %s95
      %p109 = scmp.eq.s32.totalorder %s26, 1
      %p110 = por %p108, %p109
      %p112 = scmp.ne.s32.totalorder %s95, %s111
      %p113 = scmp.eq.s32.totalorder %s26, 0
      %p114 = por %p112, %p113
      %s115 = ssub.s32 %s27, %s39
      %s116 = ssub.s32 %s28, %s35
      %s117 = sor.u32 %s115, %s116
      %p118 = scmp.eq.s32.totalorder %s117, 0
      %s120 = sadd.s32 %s119, 1
      %s121 = scalar_select %p118, %s119, %s120
      %p124 = pneg %p118
      %p125 = scmp.eq.s32.totalorder %s20, 1
      %p126 = por %p124, %p125
      %p127 = scmp.ne.s32.totalorder %s119, %s122
      %p128 = scmp.eq.s32.totalorder %s20, 0
      %p129 = por %p127, %p128
      %p130 = scmp.ne.s32.totalorder %s119, %s122
      %p131 = scmp.eq.s32.totalorder %s25, 1
      %p132 = por %p130, %p131
      %p133 = scmp.ne.s32.totalorder %s122, %s123
      %p134 = scmp.eq.s32.totalorder %s25, 0
      %p135 = por %p133, %p134
      %p136 = scmp.ne.s32.totalorder %s122, %s123
      %p137 = scmp.eq.s32.totalorder %s26, 1
      %p138 = por %p136, %p137
      %p140 = scmp.ne.s32.totalorder %s123, %s139
      %p141 = scmp.eq.s32.totalorder %s26, 0
      %p142 = por %p140, %p141
      %p143 = scmp.le.s32.totalorder 1, %s20
      %p144 = scmp.lt.s32.totalorder %s20, 3
      %p145 = pnand %p143, %p144
      %p146 = pneg %p145
      // Predicated region
      $region9: #{tpu_custom_call.1} parent=5 // pred_check
        _
      $region10: #{tpu_custom_call.1} parent=5 // pred_check_branch
        %148 = sbr.rel (%p145) target = $region12
      $region11: #{tpu_custom_call.1} parent=5 // pred_region
        %s149 = ssub.s32 %s20, 1
        // Predicated region
        $region13: #{tpu_custom_call.1} parent=11 // pred_check
          %p150 = pneg %p79
        $region14: #{tpu_custom_call.1} parent=11 // pred_check_branch
          %152 = sbr.rel (%p150) target = $region16
        $region15: #{tpu_custom_call.1} parent=11 // pred_region
          %s154 = ssub.s32 9216, 9216
          %155 = vsyncadd [#allocation6], %s154
          %s156 = sshll.u32 [#allocation5], 4
          %s157 = int_to_ptr.vmem [resolvable:$true] %s156
          %162 = dma.hbm_to_vmem [thread:$0]  %s1, 9216, %s157, [#allocation6], 64, 64, 4
        $region16: #{tpu_custom_call.1} parent=11 // pred_fallthru
          _
      $region12: #{tpu_custom_call.1} parent=5 // pred_fallthru
        _
      %p163 = scmp.lt.s32.totalorder %s20, 2
      // Predicated region
      $region17: #{tpu_custom_call.1} parent=5 // pred_check
        %p164 = pneg %p163
      $region18: #{tpu_custom_call.1} parent=5 // pred_check_branch
        %166 = sbr.rel (%p164) target = $region20
      $region19: #{tpu_custom_call.1} parent=5 // pred_region
        // Predicated region
        $region21: #{tpu_custom_call.1} parent=19 // pred_check
          %p167 = pneg %p52
        $region22: #{tpu_custom_call.1} parent=19 // pred_check_branch
          %169 = sbr.rel (%p167) target = $region24
        $region23: #{tpu_custom_call.1} parent=19 // pred_region
          %s170 = sand.u32 %s42, 1
          %s171 = scalar_lea.sflag [#allocation3], %s170
          %s172 = sand.u32 %s42, 1
          %s173 = smul.addr %s172, 304
          %s174 = scalar_lea.vmem [#allocation2], %s173
          %s176 = ssub.s32 4864, 4864
          %177 = vsyncadd %s171, %s176
          %s178 = smul.addr %s27, 76
          %s179 = smul.addr %s178, 64
          %s180 = scalar_lea.hbm %s0, %s179
          %s181 = sshll.u32 %s174, 4
          %s182 = int_to_ptr.vmem [resolvable:$true] %s181
          %187 = dma.hbm_to_vmem [thread:$0]  %s180, 4864, %s182, %s171, 64, 64, 4
        $region24: #{tpu_custom_call.1} parent=19 // pred_fallthru
          _
      $region20: #{tpu_custom_call.1} parent=5 // pred_fallthru
        _
      %p188 = scmp.le.s32.totalorder 1, %s20
      %p189 = scmp.lt.s32.totalorder %s20, 3
      %p190 = pnand %p188, %p189
      %p191 = pneg %p190
      // Predicated region
      $region25: #{tpu_custom_call.1} parent=5 // pred_check
        _
      $region26: #{tpu_custom_call.1} parent=5 // pred_check_branch
        %193 = sbr.rel (%p190) target = $region28
      $region27: #{tpu_custom_call.1} parent=5 // pred_region
        %s194 = ssub.s32 %s20, 1
        %s195 = sand.u32 %s45, 1
        %s196 = scalar_lea.sflag [#allocation3], %s195
        %s197 = sand.u32 %s45, 1
        %s198 = smul.addr %s197, 304
        %s199 = scalar_lea.vmem [#allocation2], %s198
        // Predicated region
        $region29: #{tpu_custom_call.1} parent=27 // pred_check
          %p200 = pneg %p58
        $region30: #{tpu_custom_call.1} parent=27 // pred_check_branch
          %202 = sbr.rel (%p200) target = $region32
        $region31: #{tpu_custom_call.1} parent=27 // pred_region
          %203 = dma.done %s196, 4864
        $region32: #{tpu_custom_call.1} parent=27 // pred_fallthru
          _
        // Predicated region
        $region33: #{tpu_custom_call.1} parent=27 // pred_check
          %p204 = pneg %p79
        $region34: #{tpu_custom_call.1} parent=27 // pred_check_branch
          %206 = sbr.rel (%p204) target = $region36
        $region35: #{tpu_custom_call.1} parent=27 // pred_region
          %207 = dma.done [#allocation6], 9216
        $region36: #{tpu_custom_call.1} parent=27 // pred_fallthru
          _
        %s208 = sand.u32 %s45, 1
        %s209 = scalar_lea.sflag [#allocation3], %s208
        %s210 = sand.u32 %s45, 1
        %s211 = smul.addr %s210, 304
        %s212 = scalar_lea.vmem [#allocation2], %s211
        %p213 = pneg %p58
        %p214 = pneg %p55
        %p215 = pneg %p79
        %p216 = pneg %p76
        %p217 = pneg %p107
        %p218 = pneg %p104
        %s219 = sand.u32 %s94, 1
        %s220 = scalar_lea.sflag [#allocation4], %s219
        %s221 = sand.u32 %s94, 1
        %s222 = smul.addr %s221, 256
        %s223 = scalar_lea.vmem [#allocation7], %s222
        %p224 = pneg %p135
        %p225 = pneg %p132
        %s226 = sand.u32 %s122, 1
        %s227 = scalar_lea.sflag [#allocation9], %s226
        %s228 = sand.u32 %s122, 1
        %s229 = smul.addr %s228, 2
        %s230 = scalar_lea.vmem [#allocation8], %s229
        %s231 = smul.u32 64, %s30
        %s233 = smul.u32 %s30, 16
        %s234 = smul.u32 %s233, 4
        %s235 = smul.addr %s234, 4
        %s236 = scalar_lea.vmem %s199, %s235 [#allocation2]
        %v237 = vld [vmem:[%s236] sm:$0xf]
        %v238 = vld [vmem:[%s236 + $0x4] sm:$0xf]
        %v239 = vld [vmem:[%s236 + $0x8] sm:$0xf]
        %v240 = vld [vmem:[%s236 + $0xc] sm:$0xf]
        %v241 = vld [vmem:[%s236 + $0x10] sm:$0xf]
        %v242 = vld [vmem:[%s236 + $0x14] sm:$0xf]
        %v243 = vld [vmem:[%s236 + $0x18] sm:$0xf]
        %v244 = vld [vmem:[%s236 + $0x1c] sm:$0xf]
        %v245 = vld [vmem:[%s236 + $0x20] sm:$0xf]
        %v246 = vld [vmem:[%s236 + $0x24] sm:$0xf]
        %v247 = vld [vmem:[%s236 + $0x28] sm:$0xf]
        %v248 = vld [vmem:[%s236 + $0x2c] sm:$0xf]
        %v249 = vld [vmem:[%s236 + $0x30] sm:$0xf]
        %v250 = vld [vmem:[%s236 + $0x34] sm:$0xf]
        %v251 = vld [vmem:[%s236 + $0x38] sm:$0xf]
        %v252 = vld [vmem:[%s236 + $0x3c] sm:$0xf]
        %v253 = vld [vmem:[%s236 + $0x40] sm:$0xf]
        %v254 = vld [vmem:[%s236 + $0x44] sm:$0xf]
        %v255 = vld [vmem:[%s236 + $0x48] sm:$0xf]
        %v256 = vld [vmem:[%s236 + $0x4c] sm:$0xf]
        %v257 = vld [vmem:[%s236 + $0x50] sm:$0xf]
        %v258 = vld [vmem:[%s236 + $0x54] sm:$0xf]
        %v259 = vld [vmem:[%s236 + $0x58] sm:$0xf]
        %v260 = vld [vmem:[%s236 + $0x5c] sm:$0xf]
        %v261 = vld [vmem:[%s236 + $0x60] sm:$0xf]
        %v262 = vld [vmem:[%s236 + $0x64] sm:$0xf]
        %v263 = vld [vmem:[%s236 + $0x68] sm:$0xf]
        %v264 = vld [vmem:[%s236 + $0x6c] sm:$0xf]
        %v265 = vld [vmem:[%s236 + $0x70] sm:$0xf]
        %v266 = vld [vmem:[%s236 + $0x74] sm:$0xf]
        %v267 = vld [vmem:[%s236 + $0x78] sm:$0xf]
        %v268 = vld [vmem:[%s236 + $0x7c] sm:$0xf]
        %v269 = vld [vmem:[%s236 + $0x80] sm:$0xf]
        %v270 = vld [vmem:[%s236 + $0x84] sm:$0xf]
        %v271 = vld [vmem:[%s236 + $0x88] sm:$0xf]
        %v272 = vld [vmem:[%s236 + $0x8c] sm:$0xf]
        %v273 = vld [vmem:[%s236 + $0x90] sm:$0xf]
        %v274 = vld [vmem:[%s236 + $0x94] sm:$0xf]
        %v275 = vld [vmem:[%s236 + $0x98] sm:$0xf]
        %v276 = vld [vmem:[%s236 + $0x9c] sm:$0xf]
        %v277 = vld [vmem:[%s236 + $0xa0] sm:$0xf]
        %v278 = vld [vmem:[%s236 + $0xa4] sm:$0xf]
        %v279 = vld [vmem:[%s236 + $0xa8] sm:$0xf]
        %v280 = vld [vmem:[%s236 + $0xac] sm:$0xf]
        %v281 = vld [vmem:[%s236 + $0xb0] sm:$0xf]
        %v282 = vld [vmem:[%s236 + $0xb4] sm:$0xf]
        %v283 = vld [vmem:[%s236 + $0xb8] sm:$0xf]
        %v284 = vld [vmem:[%s236 + $0xbc] sm:$0xf]
        %v285 = vld [vmem:[%s236 + $0xc0] sm:$0xf]
        %v286 = vld [vmem:[%s236 + $0xc4] sm:$0xf]
        %v287 = vld [vmem:[%s236 + $0xc8] sm:$0xf]
        %v288 = vld [vmem:[%s236 + $0xcc] sm:$0xf]
        %v289 = vld [vmem:[%s236 + $0xd0] sm:$0xf]
        %v290 = vld [vmem:[%s236 + $0xd4] sm:$0xf]
        %v291 = vld [vmem:[%s236 + $0xd8] sm:$0xf]
        %v292 = vld [vmem:[%s236 + $0xdc] sm:$0xf]
        %v293 = vld [vmem:[%s236 + $0xe0] sm:$0xf]
        %v294 = vld [vmem:[%s236 + $0xe4] sm:$0xf]
        %v295 = vld [vmem:[%s236 + $0xe8] sm:$0xf]
        %v296 = vld [vmem:[%s236 + $0xec] sm:$0xf]
        %v297 = vld [vmem:[%s236 + $0xf0] sm:$0xf]
        %v298 = vld [vmem:[%s236 + $0xf4] sm:$0xf]
        %v299 = vld [vmem:[%s236 + $0xf8] sm:$0xf]
        %v300 = vld [vmem:[%s236 + $0xfc] sm:$0xf]
        %v301 = vld [vmem:[%s236 + $0x100] sm:$0xf]
        %v302 = vld [vmem:[#allocation5] sm:$0xf]
        %v303 = vld [vmem:[#allocation5 + $0x4] sm:$0xf]
        %v304 = vld [vmem:[#allocation5 + $0x8] sm:$0xf]
        %v305 = vld [vmem:[#allocation5 + $0xc] sm:$0xf]
        %v306 = vld [vmem:[#allocation5 + $0x10] sm:$0xf]
        %v307 = vld [vmem:[#allocation5 + $0x14] sm:$0xf]
        %v308 = vld [vmem:[#allocation5 + $0x18] sm:$0xf]
        %v309 = vld [vmem:[#allocation5 + $0x1c] sm:$0xf]
        %v310 = vld [vmem:[#allocation5 + $0x20] sm:$0xf]
        %v311 = vld [vmem:[#allocation5 + $0x24] sm:$0xf]
        %v312 = vld [vmem:[#allocation5 + $0x28] sm:$0xf]
        %v313 = vld [vmem:[#allocation5 + $0x2c] sm:$0xf]
        %v314 = vld [vmem:[#allocation5 + $0x30] sm:$0xf]
        %v315 = vld [vmem:[#allocation5 + $0x34] sm:$0xf]
        %v316 = vld [vmem:[#allocation5 + $0x38] sm:$0xf]
        %v317 = vld [vmem:[#allocation5 + $0x3c] sm:$0xf]
        %s318 = scalar_lea.vmem [#allocation5], 64
        %v319 = vld [vmem:[%s318] sm:$0xf]
        %v320 = vld [vmem:[%s318 + $0x4] sm:$0xf]
        %v321 = vld [vmem:[%s318 + $0x8] sm:$0xf]
        %v322 = vld [vmem:[%s318 + $0xc] sm:$0xf]
        %v323 = vld [vmem:[%s318 + $0x10] sm:$0xf]
        %v324 = vld [vmem:[%s318 + $0x14] sm:$0xf]
        %v325 = vld [vmem:[%s318 + $0x18] sm:$0xf]
        %v326 = vld [vmem:[%s318 + $0x1c] sm:$0xf]
        %v327 = vld [vmem:[%s318 + $0x20] sm:$0xf]
        %v328 = vld [vmem:[%s318 + $0x24] sm:$0xf]
        %v329 = vld [vmem:[%s318 + $0x28] sm:$0xf]
        %v330 = vld [vmem:[%s318 + $0x2c] sm:$0xf]
        %v331 = vld [vmem:[%s318 + $0x30] sm:$0xf]
        %v332 = vld [vmem:[%s318 + $0x34] sm:$0xf]
        %v333 = vld [vmem:[%s318 + $0x38] sm:$0xf]
        %v334 = vld [vmem:[%s318 + $0x3c] sm:$0xf]
        %v400 = vunpack.c.l.b16 %v237
        %v401 = vunpack.c.l.b16 %v238
        %v402 = vunpack.c.l.b16 %v239
        %v403 = vunpack.c.l.b16 %v240
        %v404 = vunpack.c.l.b16 %v241
        %v405 = vunpack.c.l.b16 %v242
        %v406 = vunpack.c.l.b16 %v243
        %v407 = vunpack.c.l.b16 %v244
        %v408 = vunpack.c.l.b16 %v245
        %v409 = vunpack.c.l.b16 %v246
        %v410 = vunpack.c.l.b16 %v247
        %v411 = vunpack.c.l.b16 %v248
        %v412 = vunpack.c.l.b16 %v249
        %v413 = vunpack.c.l.b16 %v250
        %v414 = vunpack.c.l.b16 %v251
        %v415 = vunpack.c.l.b16 %v252
        %v416 = vunpack.c.l.b16 %v253
        %v417 = vunpack.c.l.b16 %v254
        %v418 = vunpack.c.l.b16 %v255
        %v419 = vunpack.c.l.b16 %v256
        %v420 = vunpack.c.l.b16 %v257
        %v421 = vunpack.c.l.b16 %v258
        %v422 = vunpack.c.l.b16 %v259
        %v423 = vunpack.c.l.b16 %v260
        %v424 = vunpack.c.l.b16 %v261
        %v425 = vunpack.c.l.b16 %v262
        %v426 = vunpack.c.l.b16 %v263
        %v427 = vunpack.c.l.b16 %v264
        %v428 = vunpack.c.l.b16 %v265
        %v429 = vunpack.c.l.b16 %v266
        %v430 = vunpack.c.l.b16 %v267
        %v431 = vunpack.c.l.b16 %v268
        %v432 = vunpack.c.l.b16 %v269
        %v433 = vunpack.c.l.b16 %v270
        %v434 = vunpack.c.l.b16 %v271
        %v435 = vunpack.c.l.b16 %v272
        %v436 = vunpack.c.l.b16 %v273
        %v437 = vunpack.c.l.b16 %v274
        %v438 = vunpack.c.l.b16 %v275
        %v439 = vunpack.c.l.b16 %v276
        %v440 = vunpack.c.l.b16 %v277
        %v441 = vunpack.c.l.b16 %v278
        %v442 = vunpack.c.l.b16 %v279
        %v443 = vunpack.c.l.b16 %v280
        %v444 = vunpack.c.l.b16 %v281
        %v445 = vunpack.c.l.b16 %v282
        %v446 = vunpack.c.l.b16 %v283
        %v447 = vunpack.c.l.b16 %v284
        %v448 = vunpack.c.l.b16 %v285
        %v449 = vunpack.c.l.b16 %v286
        %v450 = vunpack.c.l.b16 %v287
        %v451 = vunpack.c.l.b16 %v288
        %v452 = vunpack.c.l.b16 %v289
        %v453 = vunpack.c.l.b16 %v290
        %v454 = vunpack.c.l.b16 %v291
        %v455 = vunpack.c.l.b16 %v292
        %v456 = vunpack.c.l.b16 %v293
        %v457 = vunpack.c.l.b16 %v294
        %v458 = vunpack.c.l.b16 %v295
        %v459 = vunpack.c.l.b16 %v296
        %v460 = vunpack.c.l.b16 %v297
        %v461 = vunpack.c.l.b16 %v298
        %v462 = vunpack.c.l.b16 %v299
        %v463 = vunpack.c.l.b16 %v300
        %v464 = vunpack.c.l.b16 %v301
        %v465 = vpack.c.b16 %v401, %v400
        %v466 = vpack.c.b16 %v403, %v402
        %v467 = vpack.c.b16 %v405, %v404
        %v468 = vpack.c.b16 %v407, %v406
        %v469 = vpack.c.b16 %v409, %v408
        %v470 = vpack.c.b16 %v411, %v410
        %v471 = vpack.c.b16 %v413, %v412
        %v472 = vpack.c.b16 %v415, %v414
        %v473 = vpack.c.b16 %v417, %v416
        %v474 = vpack.c.b16 %v419, %v418
        %v475 = vpack.c.b16 %v421, %v420
        %v476 = vpack.c.b16 %v423, %v422
        %v477 = vpack.c.b16 %v425, %v424
        %v478 = vpack.c.b16 %v427, %v426
        %v479 = vpack.c.b16 %v429, %v428
        %v480 = vpack.c.b16 %v431, %v430
        %v481 = vpack.c.b16 %v433, %v432
        %v482 = vpack.c.b16 %v435, %v434
        %v483 = vpack.c.b16 %v437, %v436
        %v484 = vpack.c.b16 %v439, %v438
        %v485 = vpack.c.b16 %v441, %v440
        %v486 = vpack.c.b16 %v443, %v442
        %v487 = vpack.c.b16 %v445, %v444
        %v488 = vpack.c.b16 %v447, %v446
        %v489 = vpack.c.b16 %v449, %v448
        %v490 = vpack.c.b16 %v451, %v450
        %v491 = vpack.c.b16 %v453, %v452
        %v492 = vpack.c.b16 %v455, %v454
        %v493 = vpack.c.b16 %v457, %v456
        %v494 = vpack.c.b16 %v459, %v458
        %v495 = vpack.c.b16 %v461, %v460
        %v496 = vpack.c.b16 %v463, %v462
        %v497 = vpack.c.b16 %v464, %v464
        %vm498 = vsmask.f32 7424
        %v500 = vshrl.u32 %v465, 16
        %v502 = vshll.u32 %v465, 16
        %v504 = vrot.slane %v502, 1
        %v505 = vor.u32 %v500, %v504
        %v507 = vshll.u32 %v466, 16
        %v509 = vrot.slane %v507, 1
        %v510 = vsel %vm498, %v505, %v509
        %v511 = vshrl.u32 %v466, 16
        %v513 = vor.u32 %v511, %v509
        %v515 = vshll.u32 %v467, 16
        %v517 = vrot.slane %v515, 1
        %v518 = vsel %vm498, %v513, %v517
        %v519 = vshrl.u32 %v467, 16
        %v521 = vor.u32 %v519, %v517
        %v523 = vshll.u32 %v468, 16
        %v525 = vrot.slane %v523, 1
        %v526 = vsel %vm498, %v521, %v525
        %v527 = vshrl.u32 %v468, 16
        %v529 = vor.u32 %v527, %v525
        %v531 = vshll.u32 %v469, 16
        %v533 = vrot.slane %v531, 1
        %v534 = vsel %vm498, %v529, %v533
        %v535 = vshrl.u32 %v469, 16
        %v537 = vor.u32 %v535, %v533
        %v539 = vshll.u32 %v470, 16
        %v541 = vrot.slane %v539, 1
        %v542 = vsel %vm498, %v537, %v541
        %v543 = vshrl.u32 %v470, 16
        %v545 = vor.u32 %v543, %v541
        %v547 = vshll.u32 %v471, 16
        %v549 = vrot.slane %v547, 1
        %v550 = vsel %vm498, %v545, %v549
        %v551 = vshrl.u32 %v471, 16
        %v553 = vor.u32 %v551, %v549
        %v555 = vshll.u32 %v472, 16
        %v557 = vrot.slane %v555, 1
        %v558 = vsel %vm498, %v553, %v557
        %v559 = vshrl.u32 %v472, 16
        %v561 = vor.u32 %v559, %v557
        %v563 = vshll.u32 %v473, 16
        %v565 = vrot.slane %v563, 1
        %v566 = vsel %vm498, %v561, %v565
        %v567 = vshrl.u32 %v473, 16
        %v569 = vor.u32 %v567, %v565
        %v571 = vshll.u32 %v474, 16
        %v573 = vrot.slane %v571, 1
        %v574 = vsel %vm498, %v569, %v573
        %v575 = vshrl.u32 %v474, 16
        %v577 = vor.u32 %v575, %v573
        %v579 = vshll.u32 %v475, 16
        %v581 = vrot.slane %v579, 1
        %v582 = vsel %vm498, %v577, %v581
        %v583 = vshrl.u32 %v475, 16
        %v585 = vor.u32 %v583, %v581
        %v587 = vshll.u32 %v476, 16
        %v589 = vrot.slane %v587, 1
        %v590 = vsel %vm498, %v585, %v589
        %v591 = vshrl.u32 %v476, 16
        %v593 = vor.u32 %v591, %v589
        %v595 = vshll.u32 %v477, 16
        %v597 = vrot.slane %v595, 1
        %v598 = vsel %vm498, %v593, %v597
        %v599 = vshrl.u32 %v477, 16
        %v601 = vor.u32 %v599, %v597
        %v603 = vshll.u32 %v478, 16
        %v605 = vrot.slane %v603, 1
        %v606 = vsel %vm498, %v601, %v605
        %v607 = vshrl.u32 %v478, 16
        %v609 = vor.u32 %v607, %v605
        %v611 = vshll.u32 %v479, 16
        %v613 = vrot.slane %v611, 1
        %v614 = vsel %vm498, %v609, %v613
        %v615 = vshrl.u32 %v479, 16
        %v617 = vor.u32 %v615, %v613
        %v619 = vshll.u32 %v480, 16
        %v621 = vrot.slane %v619, 1
        %v622 = vsel %vm498, %v617, %v621
        %v623 = vshrl.u32 %v480, 16
        %v625 = vor.u32 %v623, %v621
        %v627 = vshll.u32 %v481, 16
        %v629 = vrot.slane %v627, 1
        %v630 = vsel %vm498, %v625, %v629
        %v631 = vshrl.u32 %v481, 16
        %v633 = vor.u32 %v631, %v629
        %v635 = vshll.u32 %v482, 16
        %v637 = vrot.slane %v635, 1
        %v638 = vsel %vm498, %v633, %v637
        %v639 = vshrl.u32 %v482, 16
        %v641 = vor.u32 %v639, %v637
        %v643 = vshll.u32 %v483, 16
        %v645 = vrot.slane %v643, 1
        %v646 = vsel %vm498, %v641, %v645
        %v647 = vshrl.u32 %v483, 16
        %v649 = vor.u32 %v647, %v645
        %v651 = vshll.u32 %v484, 16
        %v653 = vrot.slane %v651, 1
        %v654 = vsel %vm498, %v649, %v653
        %v655 = vshrl.u32 %v484, 16
        %v657 = vor.u32 %v655, %v653
        %v659 = vshll.u32 %v485, 16
        %v661 = vrot.slane %v659, 1
        %v662 = vsel %vm498, %v657, %v661
        %v663 = vshrl.u32 %v485, 16
        %v665 = vor.u32 %v663, %v661
        %v667 = vshll.u32 %v486, 16
        %v669 = vrot.slane %v667, 1
        %v670 = vsel %vm498, %v665, %v669
        %v671 = vshrl.u32 %v486, 16
        %v673 = vor.u32 %v671, %v669
        %v675 = vshll.u32 %v487, 16
        %v677 = vrot.slane %v675, 1
        %v678 = vsel %vm498, %v673, %v677
        %v679 = vshrl.u32 %v487, 16
        %v681 = vor.u32 %v679, %v677
        %v683 = vshll.u32 %v488, 16
        %v685 = vrot.slane %v683, 1
        %v686 = vsel %vm498, %v681, %v685
        %v687 = vshrl.u32 %v488, 16
        %v689 = vor.u32 %v687, %v685
        %v691 = vshll.u32 %v489, 16
        %v693 = vrot.slane %v691, 1
        %v694 = vsel %vm498, %v689, %v693
        %v695 = vshrl.u32 %v489, 16
        %v697 = vor.u32 %v695, %v693
        %v699 = vshll.u32 %v490, 16
        %v701 = vrot.slane %v699, 1
        %v702 = vsel %vm498, %v697, %v701
        %v703 = vshrl.u32 %v490, 16
        %v705 = vor.u32 %v703, %v701
        %v707 = vshll.u32 %v491, 16
        %v709 = vrot.slane %v707, 1
        %v710 = vsel %vm498, %v705, %v709
        %v711 = vshrl.u32 %v491, 16
        %v713 = vor.u32 %v711, %v709
        %v715 = vshll.u32 %v492, 16
        %v717 = vrot.slane %v715, 1
        %v718 = vsel %vm498, %v713, %v717
        %v719 = vshrl.u32 %v492, 16
        %v721 = vor.u32 %v719, %v717
        %v723 = vshll.u32 %v493, 16
        %v725 = vrot.slane %v723, 1
        %v726 = vsel %vm498, %v721, %v725
        %v727 = vshrl.u32 %v493, 16
        %v729 = vor.u32 %v727, %v725
        %v731 = vshll.u32 %v494, 16
        %v733 = vrot.slane %v731, 1
        %v734 = vsel %vm498, %v729, %v733
        %v735 = vshrl.u32 %v494, 16
        %v737 = vor.u32 %v735, %v733
        %v739 = vshll.u32 %v495, 16
        %v741 = vrot.slane %v739, 1
        %v742 = vsel %vm498, %v737, %v741
        %v743 = vshrl.u32 %v495, 16
        %v745 = vor.u32 %v743, %v741
        %v747 = vshll.u32 %v496, 16
        %v749 = vrot.slane %v747, 1
        %v750 = vsel %vm498, %v745, %v749
        %v751 = vshrl.u32 %v496, 16
        %v753 = vor.u32 %v751, %v749
        %v755 = vshll.u32 %v497, 16
        %v757 = vrot.slane %v755, 1
        %v758 = vsel %vm498, %v753, %v757
        %v807 = vunpack.c.l.b16 %v319
        %v808 = vunpack.c.l.b16 %v320
        %v809 = vunpack.c.l.b16 %v321
        %v810 = vunpack.c.l.b16 %v322
        %v811 = vunpack.c.l.b16 %v323
        %v812 = vunpack.c.l.b16 %v324
        %v813 = vunpack.c.l.b16 %v325
        %v814 = vunpack.c.l.b16 %v326
        %v815 = vunpack.c.l.b16 %v327
        %v816 = vunpack.c.l.b16 %v328
        %v817 = vunpack.c.l.b16 %v329
        %v818 = vunpack.c.l.b16 %v330
        %v819 = vunpack.c.l.b16 %v331
        %v820 = vunpack.c.l.b16 %v332
        %v821 = vunpack.c.l.b16 %v333
        %v822 = vunpack.c.l.b16 %v334
        %v823 = vpack.c.b16 %v808, %v807
        %v824 = vpack.c.b16 %v810, %v809
        %v825 = vpack.c.b16 %v812, %v811
        %v826 = vpack.c.b16 %v814, %v813
        %v827 = vpack.c.b16 %v816, %v815
        %v828 = vpack.c.b16 %v818, %v817
        %v829 = vpack.c.b16 %v820, %v819
        %v830 = vpack.c.b16 %v822, %v821
        %839 = vmatprep.subr.bf16.mxu0 0
        %840 = vmatpush1.bf16.msra.mxu0 %v830
        %841 = vmatprep.subr.bf16.mxu0 0
        %842 = vmatpush1.bf16.msra.mxu0 %v829
        %843 = vmatprep.subr.bf16.mxu0 0
        %844 = vmatpush1.bf16.msra.mxu0 %v828
        %845 = vmatprep.subr.bf16.mxu0 0
        %846 = vmatpush1.bf16.msra.mxu0 %v827
        %847 = vmatprep.subr.bf16.mxu0 0
        %848 = vmatpush1.bf16.msra.mxu0 %v826
        %849 = vmatprep.subr.bf16.mxu0 0
        %850 = vmatpush1.bf16.msra.mxu0 %v825
        %851 = vmatprep.subr.bf16.mxu0 0
        %852 = vmatpush1.bf16.msra.mxu0 %v824
        %853 = vmatprep.subr.bf16.mxu0 0
        %854 = vmatpush1.bf16.msra.mxu0 %v823
        %855 = vmatprep.subr.bf16.mxu0 0
        %856 = vmatpush2.bf16.msra.mxu0 0
        %857 = vmatprep.subr.bf16.mxu0 0
        %858 = vmatpush2.bf16.msra.mxu0 0
        %859 = vmatprep.subr.bf16.mxu0 0
        %860 = vmatpush2.bf16.msra.mxu0 0
        %861 = vmatprep.subr.bf16.mxu0 0
        %862 = vmatpush2.bf16.msra.mxu0 0
        %863 = vmatprep.subr.bf16.mxu0 0
        %864 = vmatpush2.bf16.msra.mxu0 0
        %865 = vmatprep.subr.bf16.mxu0 0
        %866 = vmatpush2.bf16.msra.mxu0 0
        %867 = vmatprep.subr.bf16.mxu0 0
        %868 = vmatpush2.bf16.msra.mxu0 0
        %869 = vmatprep.subr.bf16.mxu0 0
        %870 = vmatpush2.bf16.msra.mxu0 0
        %871 = vmatprep.mubr.bf16.mxu0 0
        %872 = vmatmul.mubr.bf16.gmra.mxu0 %v510
        %v873 = vpop.f32.mrf.mxu0
        %v874 = vadd.f32 0.0, %v873
        %v875 = vpop.f32.mrf.mxu0
        %v876 = vpop.f32.mrf.mxu0
        %v877 = vadd.f32 0.0, %v876
        %v878 = vpop.f32.mrf.mxu0
        %879 = vmatprep.mubr.bf16.mxu0 0
        %880 = vmatmul.mubr.bf16.gmra.mxu0 %v518
        %v881 = vpop.f32.mrf.mxu0
        %v882 = vadd.f32 0.0, %v881
        %v883 = vpop.f32.mrf.mxu0
        %v884 = vpop.f32.mrf.mxu0
        %v885 = vadd.f32 0.0, %v884
        %v886 = vpop.f32.mrf.mxu0
        %887 = vmatprep.mubr.bf16.mxu0 0
        %888 = vmatmul.mubr.bf16.gmra.mxu0 %v526
        %v889 = vpop.f32.mrf.mxu0
        %v890 = vadd.f32 0.0, %v889
        %v891 = vpop.f32.mrf.mxu0
        %v892 = vpop.f32.mrf.mxu0
        %v893 = vadd.f32 0.0, %v892
        %v894 = vpop.f32.mrf.mxu0
        %895 = vmatprep.mubr.bf16.mxu0 0
        %896 = vmatmul.mubr.bf16.gmra.mxu0 %v534
        %v897 = vpop.f32.mrf.mxu0
        %v898 = vadd.f32 0.0, %v897
        %v899 = vpop.f32.mrf.mxu0
        %v900 = vpop.f32.mrf.mxu0
        %v901 = vadd.f32 0.0, %v900
        %v902 = vpop.f32.mrf.mxu0
        %903 = vmatprep.mubr.bf16.mxu0 0
        %904 = vmatmul.mubr.bf16.gmra.mxu0 %v542
        %v905 = vpop.f32.mrf.mxu0
        %v906 = vadd.f32 0.0, %v905
        %v907 = vpop.f32.mrf.mxu0
        %v908 = vpop.f32.mrf.mxu0
        %v909 = vadd.f32 0.0, %v908
        %v910 = vpop.f32.mrf.mxu0
        %911 = vmatprep.mubr.bf16.mxu0 0
        %912 = vmatmul.mubr.bf16.gmra.mxu0 %v550
        %v913 = vpop.f32.mrf.mxu0
        %v914 = vadd.f32 0.0, %v913
        %v915 = vpop.f32.mrf.mxu0
        %v916 = vpop.f32.mrf.mxu0
        %v917 = vadd.f32 0.0, %v916
        %v918 = vpop.f32.mrf.mxu0
        %919 = vmatprep.mubr.bf16.mxu0 0
        %920 = vmatmul.mubr.bf16.gmra.mxu0 %v558
        %v921 = vpop.f32.mrf.mxu0
        %v922 = vadd.f32 0.0, %v921
        %v923 = vpop.f32.mrf.mxu0
        %v924 = vpop.f32.mrf.mxu0
        %v925 = vadd.f32 0.0, %v924
        %v926 = vpop.f32.mrf.mxu0
        %927 = vmatprep.mubr.bf16.mxu0 0
        %928 = vmatmul.mubr.bf16.gmra.mxu0 %v566
        %v929 = vpop.f32.mrf.mxu0
        %v930 = vadd.f32 0.0, %v929
        %v931 = vpop.f32.mrf.mxu0
        %v932 = vpop.f32.mrf.mxu0
        %v933 = vadd.f32 0.0, %v932
        %v934 = vpop.f32.mrf.mxu0
        %935 = vmatprep.mubr.bf16.mxu0 0
        %936 = vmatmul.mubr.bf16.gmra.mxu0 %v574
        %v937 = vpop.f32.mrf.mxu0
        %v938 = vadd.f32 0.0, %v937
        %v939 = vpop.f32.mrf.mxu0
        %v940 = vpop.f32.mrf.mxu0
        %v941 = vadd.f32 0.0, %v940
        %v942 = vpop.f32.mrf.mxu0
        %943 = vmatprep.mubr.bf16.mxu0 0
        %944 = vmatmul.mubr.bf16.gmra.mxu0 %v582
        %v945 = vpop.f32.mrf.mxu0
        %v946 = vadd.f32 0.0, %v945
        %v947 = vpop.f32.mrf.mxu0
        %v948 = vpop.f32.mrf.mxu0
        %v949 = vadd.f32 0.0, %v948
        %v950 = vpop.f32.mrf.mxu0
        %951 = vmatprep.mubr.bf16.mxu0 0
        %952 = vmatmul.mubr.bf16.gmra.mxu0 %v590
        %v953 = vpop.f32.mrf.mxu0
        %v954 = vadd.f32 0.0, %v953
        %v955 = vpop.f32.mrf.mxu0
        %v956 = vpop.f32.mrf.mxu0
        %v957 = vadd.f32 0.0, %v956
        %v958 = vpop.f32.mrf.mxu0
        %959 = vmatprep.mubr.bf16.mxu0 0
        %960 = vmatmul.mubr.bf16.gmra.mxu0 %v598
        %v961 = vpop.f32.mrf.mxu0
        %v962 = vadd.f32 0.0, %v961
        %v963 = vpop.f32.mrf.mxu0
        %v964 = vpop.f32.mrf.mxu0
        %v965 = vadd.f32 0.0, %v964
        %v966 = vpop.f32.mrf.mxu0
        %967 = vmatprep.mubr.bf16.mxu0 0
        %968 = vmatmul.mubr.bf16.gmra.mxu0 %v606
        %v969 = vpop.f32.mrf.mxu0
        %v970 = vadd.f32 0.0, %v969
        %v971 = vpop.f32.mrf.mxu0
        %v972 = vpop.f32.mrf.mxu0
        %v973 = vadd.f32 0.0, %v972
        %v974 = vpop.f32.mrf.mxu0
        %975 = vmatprep.mubr.bf16.mxu0 0
        %976 = vmatmul.mubr.bf16.gmra.mxu0 %v614
        %v977 = vpop.f32.mrf.mxu0
        %v978 = vadd.f32 0.0, %v977
        %v979 = vpop.f32.mrf.mxu0
        %v980 = vpop.f32.mrf.mxu0
        %v981 = vadd.f32 0.0, %v980
        %v982 = vpop.f32.mrf.mxu0
        %983 = vmatprep.mubr.bf16.mxu0 0
        %984 = vmatmul.mubr.bf16.gmra.mxu0 %v622
        %v985 = vpop.f32.mrf.mxu0
        %v986 = vadd.f32 0.0, %v985
        %v987 = vpop.f32.mrf.mxu0
        %v988 = vpop.f32.mrf.mxu0
        %v989 = vadd.f32 0.0, %v988
        %v990 = vpop.f32.mrf.mxu0
        %991 = vmatprep.mubr.bf16.mxu0 0
        %992 = vmatmul.mubr.bf16.gmra.mxu0 %v630
        %v993 = vpop.f32.mrf.mxu0
        %v994 = vadd.f32 0.0, %v993
        %v995 = vpop.f32.mrf.mxu0
        %v996 = vpop.f32.mrf.mxu0
        %v997 = vadd.f32 0.0, %v996
        %v998 = vpop.f32.mrf.mxu0
        %999 = vmatprep.mubr.bf16.mxu0 0
        %1000 = vmatmul.mubr.bf16.gmra.mxu0 %v638
        %v1001 = vpop.f32.mrf.mxu0
        %v1002 = vadd.f32 0.0, %v1001
        %v1003 = vpop.f32.mrf.mxu0
        %v1004 = vpop.f32.mrf.mxu0
        %v1005 = vadd.f32 0.0, %v1004
        %v1006 = vpop.f32.mrf.mxu0
        %1007 = vmatprep.mubr.bf16.mxu0 0
        %1008 = vmatmul.mubr.bf16.gmra.mxu0 %v646
        %v1009 = vpop.f32.mrf.mxu0
        %v1010 = vadd.f32 0.0, %v1009
        %v1011 = vpop.f32.mrf.mxu0
        %v1012 = vpop.f32.mrf.mxu0
        %v1013 = vadd.f32 0.0, %v1012
        %v1014 = vpop.f32.mrf.mxu0
        %1015 = vmatprep.mubr.bf16.mxu0 0
        %1016 = vmatmul.mubr.bf16.gmra.mxu0 %v654
        %v1017 = vpop.f32.mrf.mxu0
        %v1018 = vadd.f32 0.0, %v1017
        %v1019 = vpop.f32.mrf.mxu0
        %v1020 = vpop.f32.mrf.mxu0
        %v1021 = vadd.f32 0.0, %v1020
        %v1022 = vpop.f32.mrf.mxu0
        %1023 = vmatprep.mubr.bf16.mxu0 0
        %1024 = vmatmul.mubr.bf16.gmra.mxu0 %v662
        %v1025 = vpop.f32.mrf.mxu0
        %v1026 = vadd.f32 0.0, %v1025
        %v1027 = vpop.f32.mrf.mxu0
        %v1028 = vpop.f32.mrf.mxu0
        %v1029 = vadd.f32 0.0, %v1028
        %v1030 = vpop.f32.mrf.mxu0
        %1031 = vmatprep.mubr.bf16.mxu0 0
        %1032 = vmatmul.mubr.bf16.gmra.mxu0 %v670
        %v1033 = vpop.f32.mrf.mxu0
        %v1034 = vadd.f32 0.0, %v1033
        %v1035 = vpop.f32.mrf.mxu0
        %v1036 = vpop.f32.mrf.mxu0
        %v1037 = vadd.f32 0.0, %v1036
        %v1038 = vpop.f32.mrf.mxu0
        %1039 = vmatprep.mubr.bf16.mxu0 0
        %1040 = vmatmul.mubr.bf16.gmra.mxu0 %v678
        %v1041 = vpop.f32.mrf.mxu0
        %v1042 = vadd.f32 0.0, %v1041
        %v1043 = vpop.f32.mrf.mxu0
        %v1044 = vpop.f32.mrf.mxu0
        %v1045 = vadd.f32 0.0, %v1044
        %v1046 = vpop.f32.mrf.mxu0
        %1047 = vmatprep.mubr.bf16.mxu0 0
        %1048 = vmatmul.mubr.bf16.gmra.mxu0 %v686
        %v1049 = vpop.f32.mrf.mxu0
        %v1050 = vadd.f32 0.0, %v1049
        %v1051 = vpop.f32.mrf.mxu0
        %v1052 = vpop.f32.mrf.mxu0
        %v1053 = vadd.f32 0.0, %v1052
        %v1054 = vpop.f32.mrf.mxu0
        %1055 = vmatprep.mubr.bf16.mxu0 0
        %1056 = vmatmul.mubr.bf16.gmra.mxu0 %v694
        %v1057 = vpop.f32.mrf.mxu0
        %v1058 = vadd.f32 0.0, %v1057
        %v1059 = vpop.f32.mrf.mxu0
        %v1060 = vpop.f32.mrf.mxu0
        %v1061 = vadd.f32 0.0, %v1060
        %v1062 = vpop.f32.mrf.mxu0
        %1063 = vmatprep.mubr.bf16.mxu0 0
        %1064 = vmatmul.mubr.bf16.gmra.mxu0 %v702
        %v1065 = vpop.f32.mrf.mxu0
        %v1066 = vadd.f32 0.0, %v1065
        %v1067 = vpop.f32.mrf.mxu0
        %v1068 = vpop.f32.mrf.mxu0
        %v1069 = vadd.f32 0.0, %v1068
        %v1070 = vpop.f32.mrf.mxu0
        %1071 = vmatprep.mubr.bf16.mxu0 0
        %1072 = vmatmul.mubr.bf16.gmra.mxu0 %v710
        %v1073 = vpop.f32.mrf.mxu0
        %v1074 = vadd.f32 0.0, %v1073
        %v1075 = vpop.f32.mrf.mxu0
        %v1076 = vpop.f32.mrf.mxu0
        %v1077 = vadd.f32 0.0, %v1076
        %v1078 = vpop.f32.mrf.mxu0
        %1079 = vmatprep.mubr.bf16.mxu0 0
        %1080 = vmatmul.mubr.bf16.gmra.mxu0 %v718
        %v1081 = vpop.f32.mrf.mxu0
        %v1082 = vadd.f32 0.0, %v1081
        %v1083 = vpop.f32.mrf.mxu0
        %v1084 = vpop.f32.mrf.mxu0
        %v1085 = vadd.f32 0.0, %v1084
        %v1086 = vpop.f32.mrf.mxu0
        %1087 = vmatprep.mubr.bf16.mxu0 0
        %1088 = vmatmul.mubr.bf16.gmra.mxu0 %v726
        %v1089 = vpop.f32.mrf.mxu0
        %v1090 = vadd.f32 0.0, %v1089
        %v1091 = vpop.f32.mrf.mxu0
        %v1092 = vpop.f32.mrf.mxu0
        %v1093 = vadd.f32 0.0, %v1092
        %v1094 = vpop.f32.mrf.mxu0
        %1095 = vmatprep.mubr.bf16.mxu0 0
        %1096 = vmatmul.mubr.bf16.gmra.mxu0 %v734
        %v1097 = vpop.f32.mrf.mxu0
        %v1098 = vadd.f32 0.0, %v1097
        %v1099 = vpop.f32.mrf.mxu0
        %v1100 = vpop.f32.mrf.mxu0
        %v1101 = vadd.f32 0.0, %v1100
        %v1102 = vpop.f32.mrf.mxu0
        %1103 = vmatprep.mubr.bf16.mxu0 0
        %1104 = vmatmul.mubr.bf16.gmra.mxu0 %v742
        %v1105 = vpop.f32.mrf.mxu0
        %v1106 = vadd.f32 0.0, %v1105
        %v1107 = vpop.f32.mrf.mxu0
        %v1108 = vpop.f32.mrf.mxu0
        %v1109 = vadd.f32 0.0, %v1108
        %v1110 = vpop.f32.mrf.mxu0
        %1111 = vmatprep.mubr.bf16.mxu0 0
        %1112 = vmatmul.mubr.bf16.gmra.mxu0 %v750
        %v1113 = vpop.f32.mrf.mxu0
        %v1114 = vadd.f32 0.0, %v1113
        %v1115 = vpop.f32.mrf.mxu0
        %v1116 = vpop.f32.mrf.mxu0
        %v1117 = vadd.f32 0.0, %v1116
        %v1118 = vpop.f32.mrf.mxu0
        %1119 = vmatprep.mubr.bf16.mxu0 0
        %1120 = vmatmul.mubr.bf16.gmra.mxu0 %v758
        %v1121 = vpop.f32.mrf.mxu0
        %v1122 = vadd.f32 0.0, %v1121
        %v1123 = vpop.f32.mrf.mxu0
        %v1124 = vpop.f32.mrf.mxu0
        %v1125 = vadd.f32 0.0, %v1124
        %v1126 = vpop.f32.mrf.mxu0
        %1127 = vdwg.mxu0
        %v1176 = vunpack.c.l.b16 %v302
        %v1177 = vunpack.c.l.b16 %v303
        %v1178 = vunpack.c.l.b16 %v304
        %v1179 = vunpack.c.l.b16 %v305
        %v1180 = vunpack.c.l.b16 %v306
        %v1181 = vunpack.c.l.b16 %v307
        %v1182 = vunpack.c.l.b16 %v308
        %v1183 = vunpack.c.l.b16 %v309
        %v1184 = vunpack.c.l.b16 %v310
        %v1185 = vunpack.c.l.b16 %v311
        %v1186 = vunpack.c.l.b16 %v312
        %v1187 = vunpack.c.l.b16 %v313
        %v1188 = vunpack.c.l.b16 %v314
        %v1189 = vunpack.c.l.b16 %v315
        %v1190 = vunpack.c.l.b16 %v316
        %v1191 = vunpack.c.l.b16 %v317
        %v1192 = vpack.c.b16 %v1177, %v1176
        %v1193 = vpack.c.b16 %v1179, %v1178
        %v1194 = vpack.c.b16 %v1181, %v1180
        %v1195 = vpack.c.b16 %v1183, %v1182
        %v1196 = vpack.c.b16 %v1185, %v1184
        %v1197 = vpack.c.b16 %v1187, %v1186
        %v1198 = vpack.c.b16 %v1189, %v1188
        %v1199 = vpack.c.b16 %v1191, %v1190
        %1208 = vmatprep.subr.bf16.mxu0 0
        %1209 = vmatpush1.bf16.msra.mxu0 %v1199
        %1210 = vmatprep.subr.bf16.mxu0 0
        %1211 = vmatpush1.bf16.msra.mxu0 %v1198
        %1212 = vmatprep.subr.bf16.mxu0 0
        %1213 = vmatpush1.bf16.msra.mxu0 %v1197
        %1214 = vmatprep.subr.bf16.mxu0 0
        %1215 = vmatpush1.bf16.msra.mxu0 %v1196
        %1216 = vmatprep.subr.bf16.mxu0 0
        %1217 = vmatpush1.bf16.msra.mxu0 %v1195
        %1218 = vmatprep.subr.bf16.mxu0 0
        %1219 = vmatpush1.bf16.msra.mxu0 %v1194
        %1220 = vmatprep.subr.bf16.mxu0 0
        %1221 = vmatpush1.bf16.msra.mxu0 %v1193
        %1222 = vmatprep.subr.bf16.mxu0 0
        %1223 = vmatpush1.bf16.msra.mxu0 %v1192
        %1224 = vmatprep.subr.bf16.mxu0 0
        %1225 = vmatpush2.bf16.msra.mxu0 0
        %1226 = vmatprep.subr.bf16.mxu0 0
        %1227 = vmatpush2.bf16.msra.mxu0 0
        %1228 = vmatprep.subr.bf16.mxu0 0
        %1229 = vmatpush2.bf16.msra.mxu0 0
        %1230 = vmatprep.subr.bf16.mxu0 0
        %1231 = vmatpush2.bf16.msra.mxu0 0
        %1232 = vmatprep.subr.bf16.mxu0 0
        %1233 = vmatpush2.bf16.msra.mxu0 0
        %1234 = vmatprep.subr.bf16.mxu0 0
        %1235 = vmatpush2.bf16.msra.mxu0 0
        %1236 = vmatprep.subr.bf16.mxu0 0
        %1237 = vmatpush2.bf16.msra.mxu0 0
        %1238 = vmatprep.subr.bf16.mxu0 0
        %1239 = vmatpush2.bf16.msra.mxu0 0
        %1240 = vmatprep.mubr.bf16.mxu0 0
        %1241 = vmatmul.mubr.bf16.gmra.mxu0 %v465
        %v1242 = vpop.f32.mrf.mxu0
        %v1243 = vadd.f32 %v874, %v1242
        %v1244 = vpop.f32.mrf.mxu0
        %v1245 = vpop.f32.mrf.mxu0
        %v1246 = vadd.f32 %v877, %v1245
        %v1247 = vpop.f32.mrf.mxu0
        %1248 = vmatprep.mubr.bf16.mxu0 0
        %1249 = vmatmul.mubr.bf16.gmra.mxu0 %v466
        %v1250 = vpop.f32.mrf.mxu0
        %v1251 = vadd.f32 %v882, %v1250
        %v1252 = vpop.f32.mrf.mxu0
        %v1253 = vpop.f32.mrf.mxu0
        %v1254 = vadd.f32 %v885, %v1253
        %v1255 = vpop.f32.mrf.mxu0
        %1256 = vmatprep.mubr.bf16.mxu0 0
        %1257 = vmatmul.mubr.bf16.gmra.mxu0 %v467
        %v1258 = vpop.f32.mrf.mxu0
        %v1259 = vadd.f32 %v890, %v1258
        %v1260 = vpop.f32.mrf.mxu0
        %v1261 = vpop.f32.mrf.mxu0
        %v1262 = vadd.f32 %v893, %v1261
        %v1263 = vpop.f32.mrf.mxu0
        %1264 = vmatprep.mubr.bf16.mxu0 0
        %1265 = vmatmul.mubr.bf16.gmra.mxu0 %v468
        %v1266 = vpop.f32.mrf.mxu0
        %v1267 = vadd.f32 %v898, %v1266
        %v1268 = vpop.f32.mrf.mxu0
        %v1269 = vpop.f32.mrf.mxu0
        %v1270 = vadd.f32 %v901, %v1269
        %v1271 = vpop.f32.mrf.mxu0
        %1272 = vmatprep.mubr.bf16.mxu0 0
        %1273 = vmatmul.mubr.bf16.gmra.mxu0 %v469
        %v1274 = vpop.f32.mrf.mxu0
        %v1275 = vadd.f32 %v906, %v1274
        %v1276 = vpop.f32.mrf.mxu0
        %v1277 = vpop.f32.mrf.mxu0
        %v1278 = vadd.f32 %v909, %v1277
        %v1279 = vpop.f32.mrf.mxu0
        %1280 = vmatprep.mubr.bf16.mxu0 0
        %1281 = vmatmul.mubr.bf16.gmra.mxu0 %v470
        %v1282 = vpop.f32.mrf.mxu0
        %v1283 = vadd.f32 %v914, %v1282
        %v1284 = vpop.f32.mrf.mxu0
        %v1285 = vpop.f32.mrf.mxu0
        %v1286 = vadd.f32 %v917, %v1285
        %v1287 = vpop.f32.mrf.mxu0
        %1288 = vmatprep.mubr.bf16.mxu0 0
        %1289 = vmatmul.mubr.bf16.gmra.mxu0 %v471
        %v1290 = vpop.f32.mrf.mxu0
        %v1291 = vadd.f32 %v922, %v1290
        %v1292 = vpop.f32.mrf.mxu0
        %v1293 = vpop.f32.mrf.mxu0
        %v1294 = vadd.f32 %v925, %v1293
        %v1295 = vpop.f32.mrf.mxu0
        %1296 = vmatprep.mubr.bf16.mxu0 0
        %1297 = vmatmul.mubr.bf16.gmra.mxu0 %v472
        %v1298 = vpop.f32.mrf.mxu0
        %v1299 = vadd.f32 %v930, %v1298
        %v1300 = vpop.f32.mrf.mxu0
        %v1301 = vpop.f32.mrf.mxu0
        %v1302 = vadd.f32 %v933, %v1301
        %v1303 = vpop.f32.mrf.mxu0
        %1304 = vmatprep.mubr.bf16.mxu0 0
        %1305 = vmatmul.mubr.bf16.gmra.mxu0 %v473
        %v1306 = vpop.f32.mrf.mxu0
        %v1307 = vadd.f32 %v938, %v1306
        %v1308 = vpop.f32.mrf.mxu0
        %v1309 = vpop.f32.mrf.mxu0
        %v1310 = vadd.f32 %v941, %v1309
        %v1311 = vpop.f32.mrf.mxu0
        %1312 = vmatprep.mubr.bf16.mxu0 0
        %1313 = vmatmul.mubr.bf16.gmra.mxu0 %v474
        %v1314 = vpop.f32.mrf.mxu0
        %v1315 = vadd.f32 %v946, %v1314
        %v1316 = vpop.f32.mrf.mxu0
        %v1317 = vpop.f32.mrf.mxu0
        %v1318 = vadd.f32 %v949, %v1317
        %v1319 = vpop.f32.mrf.mxu0
        %1320 = vmatprep.mubr.bf16.mxu0 0
        %1321 = vmatmul.mubr.bf16.gmra.mxu0 %v475
        %v1322 = vpop.f32.mrf.mxu0
        %v1323 = vadd.f32 %v954, %v1322
        %v1324 = vpop.f32.mrf.mxu0
        %v1325 = vpop.f32.mrf.mxu0
        %v1326 = vadd.f32 %v957, %v1325
        %v1327 = vpop.f32.mrf.mxu0
        %1328 = vmatprep.mubr.bf16.mxu0 0
        %1329 = vmatmul.mubr.bf16.gmra.mxu0 %v476
        %v1330 = vpop.f32.mrf.mxu0
        %v1331 = vadd.f32 %v962, %v1330
        %v1332 = vpop.f32.mrf.mxu0
        %v1333 = vpop.f32.mrf.mxu0
        %v1334 = vadd.f32 %v965, %v1333
        %v1335 = vpop.f32.mrf.mxu0
        %1336 = vmatprep.mubr.bf16.mxu0 0
        %1337 = vmatmul.mubr.bf16.gmra.mxu0 %v477
        %v1338 = vpop.f32.mrf.mxu0
        %v1339 = vadd.f32 %v970, %v1338
        %v1340 = vpop.f32.mrf.mxu0
        %v1341 = vpop.f32.mrf.mxu0
        %v1342 = vadd.f32 %v973, %v1341
        %v1343 = vpop.f32.mrf.mxu0
        %1344 = vmatprep.mubr.bf16.mxu0 0
        %1345 = vmatmul.mubr.bf16.gmra.mxu0 %v478
        %v1346 = vpop.f32.mrf.mxu0
        %v1347 = vadd.f32 %v978, %v1346
        %v1348 = vpop.f32.mrf.mxu0
        %v1349 = vpop.f32.mrf.mxu0
        %v1350 = vadd.f32 %v981, %v1349
        %v1351 = vpop.f32.mrf.mxu0
        %1352 = vmatprep.mubr.bf16.mxu0 0
        %1353 = vmatmul.mubr.bf16.gmra.mxu0 %v479
        %v1354 = vpop.f32.mrf.mxu0
        %v1355 = vadd.f32 %v986, %v1354
        %v1356 = vpop.f32.mrf.mxu0
        %v1357 = vpop.f32.mrf.mxu0
        %v1358 = vadd.f32 %v989, %v1357
        %v1359 = vpop.f32.mrf.mxu0
        %1360 = vmatprep.mubr.bf16.mxu0 0
        %1361 = vmatmul.mubr.bf16.gmra.mxu0 %v480
        %v1362 = vpop.f32.mrf.mxu0
        %v1363 = vadd.f32 %v994, %v1362
        %v1364 = vpop.f32.mrf.mxu0
        %v1365 = vpop.f32.mrf.mxu0
        %v1366 = vadd.f32 %v997, %v1365
        %v1367 = vpop.f32.mrf.mxu0
        %1368 = vmatprep.mubr.bf16.mxu0 0
        %1369 = vmatmul.mubr.bf16.gmra.mxu0 %v481
        %v1370 = vpop.f32.mrf.mxu0
        %v1371 = vadd.f32 %v1002, %v1370
        %v1372 = vpop.f32.mrf.mxu0
        %v1373 = vpop.f32.mrf.mxu0
        %v1374 = vadd.f32 %v1005, %v1373
        %v1375 = vpop.f32.mrf.mxu0
        %1376 = vmatprep.mubr.bf16.mxu0 0
        %1377 = vmatmul.mubr.bf16.gmra.mxu0 %v482
        %v1378 = vpop.f32.mrf.mxu0
        %v1379 = vadd.f32 %v1010, %v1378
        %v1380 = vpop.f32.mrf.mxu0
        %v1381 = vpop.f32.mrf.mxu0
        %v1382 = vadd.f32 %v1013, %v1381
        %v1383 = vpop.f32.mrf.mxu0
        %1384 = vmatprep.mubr.bf16.mxu0 0
        %1385 = vmatmul.mubr.bf16.gmra.mxu0 %v483
        %v1386 = vpop.f32.mrf.mxu0
        %v1387 = vadd.f32 %v1018, %v1386
        %v1388 = vpop.f32.mrf.mxu0
        %v1389 = vpop.f32.mrf.mxu0
        %v1390 = vadd.f32 %v1021, %v1389
        %v1391 = vpop.f32.mrf.mxu0
        %1392 = vmatprep.mubr.bf16.mxu0 0
        %1393 = vmatmul.mubr.bf16.gmra.mxu0 %v484
        %v1394 = vpop.f32.mrf.mxu0
        %v1395 = vadd.f32 %v1026, %v1394
        %v1396 = vpop.f32.mrf.mxu0
        %v1397 = vpop.f32.mrf.mxu0
        %v1398 = vadd.f32 %v1029, %v1397
        %v1399 = vpop.f32.mrf.mxu0
        %1400 = vmatprep.mubr.bf16.mxu0 0
        %1401 = vmatmul.mubr.bf16.gmra.mxu0 %v485
        %v1402 = vpop.f32.mrf.mxu0
        %v1403 = vadd.f32 %v1034, %v1402
        %v1404 = vpop.f32.mrf.mxu0
        %v1405 = vpop.f32.mrf.mxu0
        %v1406 = vadd.f32 %v1037, %v1405
        %v1407 = vpop.f32.mrf.mxu0
        %1408 = vmatprep.mubr.bf16.mxu0 0
        %1409 = vmatmul.mubr.bf16.gmra.mxu0 %v486
        %v1410 = vpop.f32.mrf.mxu0
        %v1411 = vadd.f32 %v1042, %v1410
        %v1412 = vpop.f32.mrf.mxu0
        %v1413 = vpop.f32.mrf.mxu0
        %v1414 = vadd.f32 %v1045, %v1413
        %v1415 = vpop.f32.mrf.mxu0
        %1416 = vmatprep.mubr.bf16.mxu0 0
        %1417 = vmatmul.mubr.bf16.gmra.mxu0 %v487
        %v1418 = vpop.f32.mrf.mxu0
        %v1419 = vadd.f32 %v1050, %v1418
        %v1420 = vpop.f32.mrf.mxu0
        %v1421 = vpop.f32.mrf.mxu0
        %v1422 = vadd.f32 %v1053, %v1421
        %v1423 = vpop.f32.mrf.mxu0
        %1424 = vmatprep.mubr.bf16.mxu0 0
        %1425 = vmatmul.mubr.bf16.gmra.mxu0 %v488
        %v1426 = vpop.f32.mrf.mxu0
        %v1427 = vadd.f32 %v1058, %v1426
        %v1428 = vpop.f32.mrf.mxu0
        %v1429 = vpop.f32.mrf.mxu0
        %v1430 = vadd.f32 %v1061, %v1429
        %v1431 = vpop.f32.mrf.mxu0
        %1432 = vmatprep.mubr.bf16.mxu0 0
        %1433 = vmatmul.mubr.bf16.gmra.mxu0 %v489
        %v1434 = vpop.f32.mrf.mxu0
        %v1435 = vadd.f32 %v1066, %v1434
        %v1436 = vpop.f32.mrf.mxu0
        %v1437 = vpop.f32.mrf.mxu0
        %v1438 = vadd.f32 %v1069, %v1437
        %v1439 = vpop.f32.mrf.mxu0
        %1440 = vmatprep.mubr.bf16.mxu0 0
        %1441 = vmatmul.mubr.bf16.gmra.mxu0 %v490
        %v1442 = vpop.f32.mrf.mxu0
        %v1443 = vadd.f32 %v1074, %v1442
        %v1444 = vpop.f32.mrf.mxu0
        %v1445 = vpop.f32.mrf.mxu0
        %v1446 = vadd.f32 %v1077, %v1445
        %v1447 = vpop.f32.mrf.mxu0
        %1448 = vmatprep.mubr.bf16.mxu0 0
        %1449 = vmatmul.mubr.bf16.gmra.mxu0 %v491
        %v1450 = vpop.f32.mrf.mxu0
        %v1451 = vadd.f32 %v1082, %v1450
        %v1452 = vpop.f32.mrf.mxu0
        %v1453 = vpop.f32.mrf.mxu0
        %v1454 = vadd.f32 %v1085, %v1453
        %v1455 = vpop.f32.mrf.mxu0
        %1456 = vmatprep.mubr.bf16.mxu0 0
        %1457 = vmatmul.mubr.bf16.gmra.mxu0 %v492
        %v1458 = vpop.f32.mrf.mxu0
        %v1459 = vadd.f32 %v1090, %v1458
        %v1460 = vpop.f32.mrf.mxu0
        %v1461 = vpop.f32.mrf.mxu0
        %v1462 = vadd.f32 %v1093, %v1461
        %v1463 = vpop.f32.mrf.mxu0
        %1464 = vmatprep.mubr.bf16.mxu0 0
        %1465 = vmatmul.mubr.bf16.gmra.mxu0 %v493
        %v1466 = vpop.f32.mrf.mxu0
        %v1467 = vadd.f32 %v1098, %v1466
        %v1468 = vpop.f32.mrf.mxu0
        %v1469 = vpop.f32.mrf.mxu0
        %v1470 = vadd.f32 %v1101, %v1469
        %v1471 = vpop.f32.mrf.mxu0
        %1472 = vmatprep.mubr.bf16.mxu0 0
        %1473 = vmatmul.mubr.bf16.gmra.mxu0 %v494
        %v1474 = vpop.f32.mrf.mxu0
        %v1475 = vadd.f32 %v1106, %v1474
        %v1476 = vpop.f32.mrf.mxu0
        %v1477 = vpop.f32.mrf.mxu0
        %v1478 = vadd.f32 %v1109, %v1477
        %v1479 = vpop.f32.mrf.mxu0
        %1480 = vmatprep.mubr.bf16.mxu0 0
        %1481 = vmatmul.mubr.bf16.gmra.mxu0 %v495
        %v1482 = vpop.f32.mrf.mxu0
        %v1483 = vadd.f32 %v1114, %v1482
        %v1484 = vpop.f32.mrf.mxu0
        %v1485 = vpop.f32.mrf.mxu0
        %v1486 = vadd.f32 %v1117, %v1485
        %v1487 = vpop.f32.mrf.mxu0
        %1488 = vmatprep.mubr.bf16.mxu0 0
        %1489 = vmatmul.mubr.bf16.gmra.mxu0 %v496
        %v1490 = vpop.f32.mrf.mxu0
        %v1491 = vadd.f32 %v1122, %v1490
        %v1492 = vpop.f32.mrf.mxu0
        %v1493 = vpop.f32.mrf.mxu0
        %v1494 = vadd.f32 %v1125, %v1493
        %v1495 = vpop.f32.mrf.mxu0
        %1496 = vdwg.mxu0
        %s1497 = scalar_lea.vmem [#allocation5], 128
        %v1498 = vld [vmem:[%s1497] sm:$0xf]
        %v1499 = vld [vmem:[%s1497 + $0x4] sm:$0xf]
        %v1500 = vld [vmem:[%s1497 + $0x8] sm:$0xf]
        %v1501 = vld [vmem:[%s1497 + $0xc] sm:$0xf]
        %v1502 = vld [vmem:[%s1497 + $0x10] sm:$0xf]
        %v1503 = vld [vmem:[%s1497 + $0x14] sm:$0xf]
        %v1504 = vld [vmem:[%s1497 + $0x18] sm:$0xf]
        %v1505 = vld [vmem:[%s1497 + $0x1c] sm:$0xf]
        %v1506 = vld [vmem:[%s1497 + $0x20] sm:$0xf]
        %v1507 = vld [vmem:[%s1497 + $0x24] sm:$0xf]
        %v1508 = vld [vmem:[%s1497 + $0x28] sm:$0xf]
        %v1509 = vld [vmem:[%s1497 + $0x2c] sm:$0xf]
        %v1510 = vld [vmem:[%s1497 + $0x30] sm:$0xf]
        %v1511 = vld [vmem:[%s1497 + $0x34] sm:$0xf]
        %v1512 = vld [vmem:[%s1497 + $0x38] sm:$0xf]
        %v1513 = vld [vmem:[%s1497 + $0x3c] sm:$0xf]
        %vm1514 = vcmask 1046528
        %v1515 = vrot.slane %v465, 1
        %v1516 = vrot.slane %v466, 1
        %v1517 = vsel %vm1514, %v1515, %v1516
        %v1518 = vrot.slane %v467, 1
        %v1519 = vsel %vm1514, %v1516, %v1518
        %v1520 = vrot.slane %v468, 1
        %v1521 = vsel %vm1514, %v1518, %v1520
        %v1522 = vrot.slane %v469, 1
        %v1523 = vsel %vm1514, %v1520, %v1522
        %v1524 = vrot.slane %v470, 1
        %v1525 = vsel %vm1514, %v1522, %v1524
        %v1526 = vrot.slane %v471, 1
        %v1527 = vsel %vm1514, %v1524, %v1526
        %v1528 = vrot.slane %v472, 1
        %v1529 = vsel %vm1514, %v1526, %v1528
        %v1530 = vrot.slane %v473, 1
        %v1531 = vsel %vm1514, %v1528, %v1530
        %v1532 = vrot.slane %v474, 1
        %v1533 = vsel %vm1514, %v1530, %v1532
        %v1534 = vrot.slane %v475, 1
        %v1535 = vsel %vm1514, %v1532, %v1534
        %v1536 = vrot.slane %v476, 1
        %v1537 = vsel %vm1514, %v1534, %v1536
        %v1538 = vrot.slane %v477, 1
        %v1539 = vsel %vm1514, %v1536, %v1538
        %v1540 = vrot.slane %v478, 1
        %v1541 = vsel %vm1514, %v1538, %v1540
        %v1542 = vrot.slane %v479, 1
        %v1543 = vsel %vm1514, %v1540, %v1542
        %v1544 = vrot.slane %v480, 1
        %v1545 = vsel %vm1514, %v1542, %v1544
        %v1546 = vrot.slane %v481, 1
        %v1547 = vsel %vm1514, %v1544, %v1546
        %v1548 = vrot.slane %v482, 1
        %v1549 = vsel %vm1514, %v1546, %v1548
        %v1550 = vrot.slane %v483, 1
        %v1551 = vsel %vm1514, %v1548, %v1550
        %v1552 = vrot.slane %v484, 1
        %v1553 = vsel %vm1514, %v1550, %v1552
        %v1554 = vrot.slane %v485, 1
        %v1555 = vsel %vm1514, %v1552, %v1554
        %v1556 = vrot.slane %v486, 1
        %v1557 = vsel %vm1514, %v1554, %v1556
        %v1558 = vrot.slane %v487, 1
        %v1559 = vsel %vm1514, %v1556, %v1558
        %v1560 = vrot.slane %v488, 1
        %v1561 = vsel %vm1514, %v1558, %v1560
        %v1562 = vrot.slane %v489, 1
        %v1563 = vsel %vm1514, %v1560, %v1562
        %v1564 = vrot.slane %v490, 1
        %v1565 = vsel %vm1514, %v1562, %v1564
        %v1566 = vrot.slane %v491, 1
        %v1567 = vsel %vm1514, %v1564, %v1566
        %v1568 = vrot.slane %v492, 1
        %v1569 = vsel %vm1514, %v1566, %v1568
        %v1570 = vrot.slane %v493, 1
        %v1571 = vsel %vm1514, %v1568, %v1570
        %v1572 = vrot.slane %v494, 1
        %v1573 = vsel %vm1514, %v1570, %v1572
        %v1574 = vrot.slane %v495, 1
        %v1575 = vsel %vm1514, %v1572, %v1574
        %v1576 = vrot.slane %v496, 1
        %v1577 = vsel %vm1514, %v1574, %v1576
        %v1578 = vrot.slane %v497, 1
        %v1579 = vsel %vm1514, %v1576, %v1578
        %v1628 = vunpack.c.l.b16 %v1498
        %v1629 = vunpack.c.l.b16 %v1499
        %v1630 = vunpack.c.l.b16 %v1500
        %v1631 = vunpack.c.l.b16 %v1501
        %v1632 = vunpack.c.l.b16 %v1502
        %v1633 = vunpack.c.l.b16 %v1503
        %v1634 = vunpack.c.l.b16 %v1504
        %v1635 = vunpack.c.l.b16 %v1505
        %v1636 = vunpack.c.l.b16 %v1506
        %v1637 = vunpack.c.l.b16 %v1507
        %v1638 = vunpack.c.l.b16 %v1508
        %v1639 = vunpack.c.l.b16 %v1509
        %v1640 = vunpack.c.l.b16 %v1510
        %v1641 = vunpack.c.l.b16 %v1511
        %v1642 = vunpack.c.l.b16 %v1512
        %v1643 = vunpack.c.l.b16 %v1513
        %v1644 = vpack.c.b16 %v1629, %v1628
        %v1645 = vpack.c.b16 %v1631, %v1630
        %v1646 = vpack.c.b16 %v1633, %v1632
        %v1647 = vpack.c.b16 %v1635, %v1634
        %v1648 = vpack.c.b16 %v1637, %v1636
        %v1649 = vpack.c.b16 %v1639, %v1638
        %v1650 = vpack.c.b16 %v1641, %v1640
        %v1651 = vpack.c.b16 %v1643, %v1642
        %1660 = vmatprep.subr.bf16.mxu0 0
        %1661 = vmatpush1.bf16.msra.mxu0 %v1651
        %1662 = vmatprep.subr.bf16.mxu0 0
        %1663 = vmatpush1.bf16.msra.mxu0 %v1650
        %1664 = vmatprep.subr.bf16.mxu0 0
        %1665 = vmatpush1.bf16.msra.mxu0 %v1649
        %1666 = vmatprep.subr.bf16.mxu0 0
        %1667 = vmatpush1.bf16.msra.mxu0 %v1648
        %1668 = vmatprep.subr.bf16.mxu0 0
        %1669 = vmatpush1.bf16.msra.mxu0 %v1647
        %1670 = vmatprep.subr.bf16.mxu0 0
        %1671 = vmatpush1.bf16.msra.mxu0 %v1646
        %1672 = vmatprep.subr.bf16.mxu0 0
        %1673 = vmatpush1.bf16.msra.mxu0 %v1645
        %1674 = vmatprep.subr.bf16.mxu0 0
        %1675 = vmatpush1.bf16.msra.mxu0 %v1644
        %1676 = vmatprep.subr.bf16.mxu0 0
        %1677 = vmatpush2.bf16.msra.mxu0 0
        %1678 = vmatprep.subr.bf16.mxu0 0
        %1679 = vmatpush2.bf16.msra.mxu0 0
        %1680 = vmatprep.subr.bf16.mxu0 0
        %1681 = vmatpush2.bf16.msra.mxu0 0
        %1682 = vmatprep.subr.bf16.mxu0 0
        %1683 = vmatpush2.bf16.msra.mxu0 0
        %1684 = vmatprep.subr.bf16.mxu0 0
        %1685 = vmatpush2.bf16.msra.mxu0 0
        %1686 = vmatprep.subr.bf16.mxu0 0
        %1687 = vmatpush2.bf16.msra.mxu0 0
        %1688 = vmatprep.subr.bf16.mxu0 0
        %1689 = vmatpush2.bf16.msra.mxu0 0
        %1690 = vmatprep.subr.bf16.mxu0 0
        %1691 = vmatpush2.bf16.msra.mxu0 0
        %1692 = vmatprep.mubr.bf16.mxu0 0
        %1693 = vmatmul.mubr.bf16.gmra.mxu0 %v1517
        %v1694 = vpop.f32.mrf.mxu0
        %v1695 = vadd.f32 0.0, %v1694
        %v1696 = vpop.f32.mrf.mxu0
        %v1697 = vpop.f32.mrf.mxu0
        %v1698 = vadd.f32 0.0, %v1697
        %v1699 = vpop.f32.mrf.mxu0
        %1700 = vmatprep.mubr.bf16.mxu0 0
        %1701 = vmatmul.mubr.bf16.gmra.mxu0 %v1519
        %v1702 = vpop.f32.mrf.mxu0
        %v1703 = vadd.f32 0.0, %v1702
        %v1704 = vpop.f32.mrf.mxu0
        %v1705 = vpop.f32.mrf.mxu0
        %v1706 = vadd.f32 0.0, %v1705
        %v1707 = vpop.f32.mrf.mxu0
        %1708 = vmatprep.mubr.bf16.mxu0 0
        %1709 = vmatmul.mubr.bf16.gmra.mxu0 %v1521
        %v1710 = vpop.f32.mrf.mxu0
        %v1711 = vadd.f32 0.0, %v1710
        %v1712 = vpop.f32.mrf.mxu0
        %v1713 = vpop.f32.mrf.mxu0
        %v1714 = vadd.f32 0.0, %v1713
        %v1715 = vpop.f32.mrf.mxu0
        %1716 = vmatprep.mubr.bf16.mxu0 0
        %1717 = vmatmul.mubr.bf16.gmra.mxu0 %v1523
        %v1718 = vpop.f32.mrf.mxu0
        %v1719 = vadd.f32 0.0, %v1718
        %v1720 = vpop.f32.mrf.mxu0
        %v1721 = vpop.f32.mrf.mxu0
        %v1722 = vadd.f32 0.0, %v1721
        %v1723 = vpop.f32.mrf.mxu0
        %1724 = vmatprep.mubr.bf16.mxu0 0
        %1725 = vmatmul.mubr.bf16.gmra.mxu0 %v1525
        %v1726 = vpop.f32.mrf.mxu0
        %v1727 = vadd.f32 0.0, %v1726
        %v1728 = vpop.f32.mrf.mxu0
        %v1729 = vpop.f32.mrf.mxu0
        %v1730 = vadd.f32 0.0, %v1729
        %v1731 = vpop.f32.mrf.mxu0
        %1732 = vmatprep.mubr.bf16.mxu0 0
        %1733 = vmatmul.mubr.bf16.gmra.mxu0 %v1527
        %v1734 = vpop.f32.mrf.mxu0
        %v1735 = vadd.f32 0.0, %v1734
        %v1736 = vpop.f32.mrf.mxu0
        %v1737 = vpop.f32.mrf.mxu0
        %v1738 = vadd.f32 0.0, %v1737
        %v1739 = vpop.f32.mrf.mxu0
        %1740 = vmatprep.mubr.bf16.mxu0 0
        %1741 = vmatmul.mubr.bf16.gmra.mxu0 %v1529
        %v1742 = vpop.f32.mrf.mxu0
        %v1743 = vadd.f32 0.0, %v1742
        %v1744 = vpop.f32.mrf.mxu0
        %v1745 = vpop.f32.mrf.mxu0
        %v1746 = vadd.f32 0.0, %v1745
        %v1747 = vpop.f32.mrf.mxu0
        %1748 = vmatprep.mubr.bf16.mxu0 0
        %1749 = vmatmul.mubr.bf16.gmra.mxu0 %v1531
        %v1750 = vpop.f32.mrf.mxu0
        %v1751 = vadd.f32 0.0, %v1750
        %v1752 = vpop.f32.mrf.mxu0
        %v1753 = vpop.f32.mrf.mxu0
        %v1754 = vadd.f32 0.0, %v1753
        %v1755 = vpop.f32.mrf.mxu0
        %1756 = vmatprep.mubr.bf16.mxu0 0
        %1757 = vmatmul.mubr.bf16.gmra.mxu0 %v1533
        %v1758 = vpop.f32.mrf.mxu0
        %v1759 = vadd.f32 0.0, %v1758
        %v1760 = vpop.f32.mrf.mxu0
        %v1761 = vpop.f32.mrf.mxu0
        %v1762 = vadd.f32 0.0, %v1761
        %v1763 = vpop.f32.mrf.mxu0
        %1764 = vmatprep.mubr.bf16.mxu0 0
        %1765 = vmatmul.mubr.bf16.gmra.mxu0 %v1535
        %v1766 = vpop.f32.mrf.mxu0
        %v1767 = vadd.f32 0.0, %v1766
        %v1768 = vpop.f32.mrf.mxu0
        %v1769 = vpop.f32.mrf.mxu0
        %v1770 = vadd.f32 0.0, %v1769
        %v1771 = vpop.f32.mrf.mxu0
        %1772 = vmatprep.mubr.bf16.mxu0 0
        %1773 = vmatmul.mubr.bf16.gmra.mxu0 %v1537
        %v1774 = vpop.f32.mrf.mxu0
        %v1775 = vadd.f32 0.0, %v1774
        %v1776 = vpop.f32.mrf.mxu0
        %v1777 = vpop.f32.mrf.mxu0
        %v1778 = vadd.f32 0.0, %v1777
        %v1779 = vpop.f32.mrf.mxu0
        %1780 = vmatprep.mubr.bf16.mxu0 0
        %1781 = vmatmul.mubr.bf16.gmra.mxu0 %v1539
        %v1782 = vpop.f32.mrf.mxu0
        %v1783 = vadd.f32 0.0, %v1782
        %v1784 = vpop.f32.mrf.mxu0
        %v1785 = vpop.f32.mrf.mxu0
        %v1786 = vadd.f32 0.0, %v1785
        %v1787 = vpop.f32.mrf.mxu0
        %1788 = vmatprep.mubr.bf16.mxu0 0
        %1789 = vmatmul.mubr.bf16.gmra.mxu0 %v1541
        %v1790 = vpop.f32.mrf.mxu0
        %v1791 = vadd.f32 0.0, %v1790
        %v1792 = vpop.f32.mrf.mxu0
        %v1793 = vpop.f32.mrf.mxu0
        %v1794 = vadd.f32 0.0, %v1793
        %v1795 = vpop.f32.mrf.mxu0
        %1796 = vmatprep.mubr.bf16.mxu0 0
        %1797 = vmatmul.mubr.bf16.gmra.mxu0 %v1543
        %v1798 = vpop.f32.mrf.mxu0
        %v1799 = vadd.f32 0.0, %v1798
        %v1800 = vpop.f32.mrf.mxu0
        %v1801 = vpop.f32.mrf.mxu0
        %v1802 = vadd.f32 0.0, %v1801
        %v1803 = vpop.f32.mrf.mxu0
        %1804 = vmatprep.mubr.bf16.mxu0 0
        %1805 = vmatmul.mubr.bf16.gmra.mxu0 %v1545
        %v1806 = vpop.f32.mrf.mxu0
        %v1807 = vadd.f32 0.0, %v1806
        %v1808 = vpop.f32.mrf.mxu0
        %v1809 = vpop.f32.mrf.mxu0
        %v1810 = vadd.f32 0.0, %v1809
        %v1811 = vpop.f32.mrf.mxu0
        %1812 = vmatprep.mubr.bf16.mxu0 0
        %1813 = vmatmul.mubr.bf16.gmra.mxu0 %v1547
        %v1814 = vpop.f32.mrf.mxu0
        %v1815 = vadd.f32 0.0, %v1814
        %v1816 = vpop.f32.mrf.mxu0
        %v1817 = vpop.f32.mrf.mxu0
        %v1818 = vadd.f32 0.0, %v1817
        %v1819 = vpop.f32.mrf.mxu0
        %1820 = vmatprep.mubr.bf16.mxu0 0
        %1821 = vmatmul.mubr.bf16.gmra.mxu0 %v1549
        %v1822 = vpop.f32.mrf.mxu0
        %v1823 = vadd.f32 0.0, %v1822
        %v1824 = vpop.f32.mrf.mxu0
        %v1825 = vpop.f32.mrf.mxu0
        %v1826 = vadd.f32 0.0, %v1825
        %v1827 = vpop.f32.mrf.mxu0
        %1828 = vmatprep.mubr.bf16.mxu0 0
        %1829 = vmatmul.mubr.bf16.gmra.mxu0 %v1551
        %v1830 = vpop.f32.mrf.mxu0
        %v1831 = vadd.f32 0.0, %v1830
        %v1832 = vpop.f32.mrf.mxu0
        %v1833 = vpop.f32.mrf.mxu0
        %v1834 = vadd.f32 0.0, %v1833
        %v1835 = vpop.f32.mrf.mxu0
        %1836 = vmatprep.mubr.bf16.mxu0 0
        %1837 = vmatmul.mubr.bf16.gmra.mxu0 %v1553
        %v1838 = vpop.f32.mrf.mxu0
        %v1839 = vadd.f32 0.0, %v1838
        %v1840 = vpop.f32.mrf.mxu0
        %v1841 = vpop.f32.mrf.mxu0
        %v1842 = vadd.f32 0.0, %v1841
        %v1843 = vpop.f32.mrf.mxu0
        %1844 = vmatprep.mubr.bf16.mxu0 0
        %1845 = vmatmul.mubr.bf16.gmra.mxu0 %v1555
        %v1846 = vpop.f32.mrf.mxu0
        %v1847 = vadd.f32 0.0, %v1846
        %v1848 = vpop.f32.mrf.mxu0
        %v1849 = vpop.f32.mrf.mxu0
        %v1850 = vadd.f32 0.0, %v1849
        %v1851 = vpop.f32.mrf.mxu0
        %1852 = vmatprep.mubr.bf16.mxu0 0
        %1853 = vmatmul.mubr.bf16.gmra.mxu0 %v1557
        %v1854 = vpop.f32.mrf.mxu0
        %v1855 = vadd.f32 0.0, %v1854
        %v1856 = vpop.f32.mrf.mxu0
        %v1857 = vpop.f32.mrf.mxu0
        %v1858 = vadd.f32 0.0, %v1857
        %v1859 = vpop.f32.mrf.mxu0
        %1860 = vmatprep.mubr.bf16.mxu0 0
        %1861 = vmatmul.mubr.bf16.gmra.mxu0 %v1559
        %v1862 = vpop.f32.mrf.mxu0
        %v1863 = vadd.f32 0.0, %v1862
        %v1864 = vpop.f32.mrf.mxu0
        %v1865 = vpop.f32.mrf.mxu0
        %v1866 = vadd.f32 0.0, %v1865
        %v1867 = vpop.f32.mrf.mxu0
        %1868 = vmatprep.mubr.bf16.mxu0 0
        %1869 = vmatmul.mubr.bf16.gmra.mxu0 %v1561
        %v1870 = vpop.f32.mrf.mxu0
        %v1871 = vadd.f32 0.0, %v1870
        %v1872 = vpop.f32.mrf.mxu0
        %v1873 = vpop.f32.mrf.mxu0
        %v1874 = vadd.f32 0.0, %v1873
        %v1875 = vpop.f32.mrf.mxu0
        %1876 = vmatprep.mubr.bf16.mxu0 0
        %1877 = vmatmul.mubr.bf16.gmra.mxu0 %v1563
        %v1878 = vpop.f32.mrf.mxu0
        %v1879 = vadd.f32 0.0, %v1878
        %v1880 = vpop.f32.mrf.mxu0
        %v1881 = vpop.f32.mrf.mxu0
        %v1882 = vadd.f32 0.0, %v1881
        %v1883 = vpop.f32.mrf.mxu0
        %1884 = vmatprep.mubr.bf16.mxu0 0
        %1885 = vmatmul.mubr.bf16.gmra.mxu0 %v1565
        %v1886 = vpop.f32.mrf.mxu0
        %v1887 = vadd.f32 0.0, %v1886
        %v1888 = vpop.f32.mrf.mxu0
        %v1889 = vpop.f32.mrf.mxu0
        %v1890 = vadd.f32 0.0, %v1889
        %v1891 = vpop.f32.mrf.mxu0
        %1892 = vmatprep.mubr.bf16.mxu0 0
        %1893 = vmatmul.mubr.bf16.gmra.mxu0 %v1567
        %v1894 = vpop.f32.mrf.mxu0
        %v1895 = vadd.f32 0.0, %v1894
        %v1896 = vpop.f32.mrf.mxu0
        %v1897 = vpop.f32.mrf.mxu0
        %v1898 = vadd.f32 0.0, %v1897
        %v1899 = vpop.f32.mrf.mxu0
        %1900 = vmatprep.mubr.bf16.mxu0 0
        %1901 = vmatmul.mubr.bf16.gmra.mxu0 %v1569
        %v1902 = vpop.f32.mrf.mxu0
        %v1903 = vadd.f32 0.0, %v1902
        %v1904 = vpop.f32.mrf.mxu0
        %v1905 = vpop.f32.mrf.mxu0
        %v1906 = vadd.f32 0.0, %v1905
        %v1907 = vpop.f32.mrf.mxu0
        %1908 = vmatprep.mubr.bf16.mxu0 0
        %1909 = vmatmul.mubr.bf16.gmra.mxu0 %v1571
        %v1910 = vpop.f32.mrf.mxu0
        %v1911 = vadd.f32 0.0, %v1910
        %v1912 = vpop.f32.mrf.mxu0
        %v1913 = vpop.f32.mrf.mxu0
        %v1914 = vadd.f32 0.0, %v1913
        %v1915 = vpop.f32.mrf.mxu0
        %1916 = vmatprep.mubr.bf16.mxu0 0
        %1917 = vmatmul.mubr.bf16.gmra.mxu0 %v1573
        %v1918 = vpop.f32.mrf.mxu0
        %v1919 = vadd.f32 0.0, %v1918
        %v1920 = vpop.f32.mrf.mxu0
        %v1921 = vpop.f32.mrf.mxu0
        %v1922 = vadd.f32 0.0, %v1921
        %v1923 = vpop.f32.mrf.mxu0
        %1924 = vmatprep.mubr.bf16.mxu0 0
        %1925 = vmatmul.mubr.bf16.gmra.mxu0 %v1575
        %v1926 = vpop.f32.mrf.mxu0
        %v1927 = vadd.f32 0.0, %v1926
        %v1928 = vpop.f32.mrf.mxu0
        %v1929 = vpop.f32.mrf.mxu0
        %v1930 = vadd.f32 0.0, %v1929
        %v1931 = vpop.f32.mrf.mxu0
        %1932 = vmatprep.mubr.bf16.mxu0 0
        %1933 = vmatmul.mubr.bf16.gmra.mxu0 %v1577
        %v1934 = vpop.f32.mrf.mxu0
        %v1935 = vadd.f32 0.0, %v1934
        %v1936 = vpop.f32.mrf.mxu0
        %v1937 = vpop.f32.mrf.mxu0
        %v1938 = vadd.f32 0.0, %v1937
        %v1939 = vpop.f32.mrf.mxu0
        %1940 = vmatprep.mubr.bf16.mxu0 0
        %1941 = vmatmul.mubr.bf16.gmra.mxu0 %v1579
        %v1942 = vpop.f32.mrf.mxu0
        %v1943 = vadd.f32 0.0, %v1942
        %v1944 = vpop.f32.mrf.mxu0
        %v1945 = vpop.f32.mrf.mxu0
        %v1946 = vadd.f32 0.0, %v1945
        %v1947 = vpop.f32.mrf.mxu0
        %1948 = vdwg.mxu0
        %v1949 = vadd.f32 %v1243, %v1695
        %v1950 = vadd.f32 %v1246, %v1698
        %v1951 = vadd.f32 %v1251, %v1703
        %v1952 = vadd.f32 %v1254, %v1706
        %v1953 = vadd.f32 %v1259, %v1711
        %v1954 = vadd.f32 %v1262, %v1714
        %v1955 = vadd.f32 %v1267, %v1719
        %v1956 = vadd.f32 %v1270, %v1722
        %v1957 = vadd.f32 %v1275, %v1727
        %v1958 = vadd.f32 %v1278, %v1730
        %v1959 = vadd.f32 %v1283, %v1735
        %v1960 = vadd.f32 %v1286, %v1738
        %v1961 = vadd.f32 %v1291, %v1743
        %v1962 = vadd.f32 %v1294, %v1746
        %v1963 = vadd.f32 %v1299, %v1751
        %v1964 = vadd.f32 %v1302, %v1754
        %v1965 = vadd.f32 %v1307, %v1759
        %v1966 = vadd.f32 %v1310, %v1762
        %v1967 = vadd.f32 %v1315, %v1767
        %v1968 = vadd.f32 %v1318, %v1770
        %v1969 = vadd.f32 %v1323, %v1775
        %v1970 = vadd.f32 %v1326, %v1778
        %v1971 = vadd.f32 %v1331, %v1783
        %v1972 = vadd.f32 %v1334, %v1786
        %v1973 = vadd.f32 %v1339, %v1791
        %v1974 = vadd.f32 %v1342, %v1794
        %v1975 = vadd.f32 %v1347, %v1799
        %v1976 = vadd.f32 %v1350, %v1802
        %v1977 = vadd.f32 %v1355, %v1807
        %v1978 = vadd.f32 %v1358, %v1810
        %v1979 = vadd.f32 %v1363, %v1815
        %v1980 = vadd.f32 %v1366, %v1818
        %v1981 = vadd.f32 %v1371, %v1823
        %v1982 = vadd.f32 %v1374, %v1826
        %v1983 = vadd.f32 %v1379, %v1831
        %v1984 = vadd.f32 %v1382, %v1834
        %v1985 = vadd.f32 %v1387, %v1839
        %v1986 = vadd.f32 %v1390, %v1842
        %v1987 = vadd.f32 %v1395, %v1847
        %v1988 = vadd.f32 %v1398, %v1850
        %v1989 = vadd.f32 %v1403, %v1855
        %v1990 = vadd.f32 %v1406, %v1858
        %v1991 = vadd.f32 %v1411, %v1863
        %v1992 = vadd.f32 %v1414, %v1866
        %v1993 = vadd.f32 %v1419, %v1871
        %v1994 = vadd.f32 %v1422, %v1874
        %v1995 = vadd.f32 %v1427, %v1879
        %v1996 = vadd.f32 %v1430, %v1882
        %v1997 = vadd.f32 %v1435, %v1887
        %v1998 = vadd.f32 %v1438, %v1890
        %v1999 = vadd.f32 %v1443, %v1895
        %v2000 = vadd.f32 %v1446, %v1898
        %v2001 = vadd.f32 %v1451, %v1903
        %v2002 = vadd.f32 %v1454, %v1906
        %v2003 = vadd.f32 %v1459, %v1911
        %v2004 = vadd.f32 %v1462, %v1914
        %v2005 = vadd.f32 %v1467, %v1919
        %v2006 = vadd.f32 %v1470, %v1922
        %v2007 = vadd.f32 %v1475, %v1927
        %v2008 = vadd.f32 %v1478, %v1930
        %v2009 = vadd.f32 %v1483, %v1935
        %v2010 = vadd.f32 %v1486, %v1938
        %v2011 = vadd.f32 %v1491, %v1943
        %v2012 = vadd.f32 %v1494, %v1946
        %s2013 = sadd.s32 %s233, 1
        %s2014 = smul.u32 %s2013, 4
        %s2015 = smul.addr %s2014, 4
        %s2016 = scalar_lea.vmem %s199, %s2015 [#allocation2]
        %v2017 = vld [vmem:[%s2016] sm:$0xf]
        %v2018 = vld [vmem:[%s2016 + $0x4] sm:$0xf]
        %v2019 = vld [vmem:[%s2016 + $0x8] sm:$0xf]
        %v2020 = vld [vmem:[%s2016 + $0xc] sm:$0xf]
        %v2021 = vld [vmem:[%s2016 + $0x10] sm:$0xf]
        %v2022 = vld [vmem:[%s2016 + $0x14] sm:$0xf]
        %v2023 = vld [vmem:[%s2016 + $0x18] sm:$0xf]
        %v2024 = vld [vmem:[%s2016 + $0x1c] sm:$0xf]
        %v2025 = vld [vmem:[%s2016 + $0x20] sm:$0xf]
        %v2026 = vld [vmem:[%s2016 + $0x24] sm:$0xf]
        %v2027 = vld [vmem:[%s2016 + $0x28] sm:$0xf]
        %v2028 = vld [vmem:[%s2016 + $0x2c] sm:$0xf]
        %v2029 = vld [vmem:[%s2016 + $0x30] sm:$0xf]
        %v2030 = vld [vmem:[%s2016 + $0x34] sm:$0xf]
        %v2031 = vld [vmem:[%s2016 + $0x38] sm:$0xf]
        %v2032 = vld [vmem:[%s2016 + $0x3c] sm:$0xf]
        %v2033 = vld [vmem:[%s2016 + $0x40] sm:$0xf]
        %v2034 = vld [vmem:[%s2016 + $0x44] sm:$0xf]
        %v2035 = vld [vmem:[%s2016 + $0x48] sm:$0xf]
        %v2036 = vld [vmem:[%s2016 + $0x4c] sm:$0xf]
        %v2037 = vld [vmem:[%s2016 + $0x50] sm:$0xf]
        %v2038 = vld [vmem:[%s2016 + $0x54] sm:$0xf]
        %v2039 = vld [vmem:[%s2016 + $0x58] sm:$0xf]
        %v2040 = vld [vmem:[%s2016 + $0x5c] sm:$0xf]
        %v2041 = vld [vmem:[%s2016 + $0x60] sm:$0xf]
        %v2042 = vld [vmem:[%s2016 + $0x64] sm:$0xf]
        %v2043 = vld [vmem:[%s2016 + $0x68] sm:$0xf]
        %v2044 = vld [vmem:[%s2016 + $0x6c] sm:$0xf]
        %v2045 = vld [vmem:[%s2016 + $0x70] sm:$0xf]
        %v2046 = vld [vmem:[%s2016 + $0x74] sm:$0xf]
        %v2047 = vld [vmem:[%s2016 + $0x78] sm:$0xf]
        %v2048 = vld [vmem:[%s2016 + $0x7c] sm:$0xf]
        %v2049 = vld [vmem:[%s2016 + $0x80] sm:$0xf]
        %v2050 = vld [vmem:[%s2016 + $0x84] sm:$0xf]
        %v2051 = vld [vmem:[%s2016 + $0x88] sm:$0xf]
        %v2052 = vld [vmem:[%s2016 + $0x8c] sm:$0xf]
        %v2053 = vld [vmem:[%s2016 + $0x90] sm:$0xf]
        %v2054 = vld [vmem:[%s2016 + $0x94] sm:$0xf]
        %v2055 = vld [vmem:[%s2016 + $0x98] sm:$0xf]
        %v2056 = vld [vmem:[%s2016 + $0x9c] sm:$0xf]
        %v2057 = vld [vmem:[%s2016 + $0xa0] sm:$0xf]
        %v2058 = vld [vmem:[%s2016 + $0xa4] sm:$0xf]
        %v2059 = vld [vmem:[%s2016 + $0xa8] sm:$0xf]
        %v2060 = vld [vmem:[%s2016 + $0xac] sm:$0xf]
        %v2061 = vld [vmem:[%s2016 + $0xb0] sm:$0xf]
        %v2062 = vld [vmem:[%s2016 + $0xb4] sm:$0xf]
        %v2063 = vld [vmem:[%s2016 + $0xb8] sm:$0xf]
        %v2064 = vld [vmem:[%s2016 + $0xbc] sm:$0xf]
        %v2065 = vld [vmem:[%s2016 + $0xc0] sm:$0xf]
        %v2066 = vld [vmem:[%s2016 + $0xc4] sm:$0xf]
        %v2067 = vld [vmem:[%s2016 + $0xc8] sm:$0xf]
        %v2068 = vld [vmem:[%s2016 + $0xcc] sm:$0xf]
        %v2069 = vld [vmem:[%s2016 + $0xd0] sm:$0xf]
        %v2070 = vld [vmem:[%s2016 + $0xd4] sm:$0xf]
        %v2071 = vld [vmem:[%s2016 + $0xd8] sm:$0xf]
        %v2072 = vld [vmem:[%s2016 + $0xdc] sm:$0xf]
        %v2073 = vld [vmem:[%s2016 + $0xe0] sm:$0xf]
        %v2074 = vld [vmem:[%s2016 + $0xe4] sm:$0xf]
        %v2075 = vld [vmem:[%s2016 + $0xe8] sm:$0xf]
        %v2076 = vld [vmem:[%s2016 + $0xec] sm:$0xf]
        %v2077 = vld [vmem:[%s2016 + $0xf0] sm:$0xf]
        %v2078 = vld [vmem:[%s2016 + $0xf4] sm:$0xf]
        %v2079 = vld [vmem:[%s2016 + $0xf8] sm:$0xf]
        %v2080 = vld [vmem:[%s2016 + $0xfc] sm:$0xf]
        %v2081 = vld [vmem:[%s2016 + $0x100] sm:$0xf]
        %s2082 = scalar_lea.vmem [#allocation5], 192
        %v2083 = vld [vmem:[%s2082] sm:$0xf]
        %v2084 = vld [vmem:[%s2082 + $0x4] sm:$0xf]
        %v2085 = vld [vmem:[%s2082 + $0x8] sm:$0xf]
        %v2086 = vld [vmem:[%s2082 + $0xc] sm:$0xf]
        %v2087 = vld [vmem:[%s2082 + $0x10] sm:$0xf]
        %v2088 = vld [vmem:[%s2082 + $0x14] sm:$0xf]
        %v2089 = vld [vmem:[%s2082 + $0x18] sm:$0xf]
        %v2090 = vld [vmem:[%s2082 + $0x1c] sm:$0xf]
        %v2091 = vld [vmem:[%s2082 + $0x20] sm:$0xf]
        %v2092 = vld [vmem:[%s2082 + $0x24] sm:$0xf]
        %v2093 = vld [vmem:[%s2082 + $0x28] sm:$0xf]
        %v2094 = vld [vmem:[%s2082 + $0x2c] sm:$0xf]
        %v2095 = vld [vmem:[%s2082 + $0x30] sm:$0xf]
        %v2096 = vld [vmem:[%s2082 + $0x34] sm:$0xf]
        %v2097 = vld [vmem:[%s2082 + $0x38] sm:$0xf]
        %v2098 = vld [vmem:[%s2082 + $0x3c] sm:$0xf]
        %v2163 = vunpack.c.l.b16 %v2017
        %v2164 = vunpack.c.l.b16 %v2018
        %v2165 = vunpack.c.l.b16 %v2019
        %v2166 = vunpack.c.l.b16 %v2020
        %v2167 = vunpack.c.l.b16 %v2021
        %v2168 = vunpack.c.l.b16 %v2022
        %v2169 = vunpack.c.l.b16 %v2023
        %v2170 = vunpack.c.l.b16 %v2024
        %v2171 = vunpack.c.l.b16 %v2025
        %v2172 = vunpack.c.l.b16 %v2026
        %v2173 = vunpack.c.l.b16 %v2027
        %v2174 = vunpack.c.l.b16 %v2028
        %v2175 = vunpack.c.l.b16 %v2029
        %v2176 = vunpack.c.l.b16 %v2030
        %v2177 = vunpack.c.l.b16 %v2031
        %v2178 = vunpack.c.l.b16 %v2032
        %v2179 = vunpack.c.l.b16 %v2033
        %v2180 = vunpack.c.l.b16 %v2034
        %v2181 = vunpack.c.l.b16 %v2035
        %v2182 = vunpack.c.l.b16 %v2036
        %v2183 = vunpack.c.l.b16 %v2037
        %v2184 = vunpack.c.l.b16 %v2038
        %v2185 = vunpack.c.l.b16 %v2039
        %v2186 = vunpack.c.l.b16 %v2040
        %v2187 = vunpack.c.l.b16 %v2041
        %v2188 = vunpack.c.l.b16 %v2042
        %v2189 = vunpack.c.l.b16 %v2043
        %v2190 = vunpack.c.l.b16 %v2044
        %v2191 = vunpack.c.l.b16 %v2045
        %v2192 = vunpack.c.l.b16 %v2046
        %v2193 = vunpack.c.l.b16 %v2047
        %v2194 = vunpack.c.l.b16 %v2048
        %v2195 = vunpack.c.l.b16 %v2049
        %v2196 = vunpack.c.l.b16 %v2050
        %v2197 = vunpack.c.l.b16 %v2051
        %v2198 = vunpack.c.l.b16 %v2052
        %v2199 = vunpack.c.l.b16 %v2053
        %v2200 = vunpack.c.l.b16 %v2054
        %v2201 = vunpack.c.l.b16 %v2055
        %v2202 = vunpack.c.l.b16 %v2056
        %v2203 = vunpack.c.l.b16 %v2057
        %v2204 = vunpack.c.l.b16 %v2058
        %v2205 = vunpack.c.l.b16 %v2059
        %v2206 = vunpack.c.l.b16 %v2060
        %v2207 = vunpack.c.l.b16 %v2061
        %v2208 = vunpack.c.l.b16 %v2062
        %v2209 = vunpack.c.l.b16 %v2063
        %v2210 = vunpack.c.l.b16 %v2064
        %v2211 = vunpack.c.l.b16 %v2065
        %v2212 = vunpack.c.l.b16 %v2066
        %v2213 = vunpack.c.l.b16 %v2067
        %v2214 = vunpack.c.l.b16 %v2068
        %v2215 = vunpack.c.l.b16 %v2069
        %v2216 = vunpack.c.l.b16 %v2070
        %v2217 = vunpack.c.l.b16 %v2071
        %v2218 = vunpack.c.l.b16 %v2072
        %v2219 = vunpack.c.l.b16 %v2073
        %v2220 = vunpack.c.l.b16 %v2074
        %v2221 = vunpack.c.l.b16 %v2075
        %v2222 = vunpack.c.l.b16 %v2076
        %v2223 = vunpack.c.l.b16 %v2077
        %v2224 = vunpack.c.l.b16 %v2078
        %v2225 = vunpack.c.l.b16 %v2079
        %v2226 = vunpack.c.l.b16 %v2080
        %v2227 = vpack.c.b16 %v2164, %v2163
        %v2228 = vpack.c.b16 %v2166, %v2165
        %v2229 = vpack.c.b16 %v2168, %v2167
        %v2230 = vpack.c.b16 %v2170, %v2169
        %v2231 = vpack.c.b16 %v2172, %v2171
        %v2232 = vpack.c.b16 %v2174, %v2173
        %v2233 = vpack.c.b16 %v2176, %v2175
        %v2234 = vpack.c.b16 %v2178, %v2177
        %v2235 = vpack.c.b16 %v2180, %v2179
        %v2236 = vpack.c.b16 %v2182, %v2181
        %v2237 = vpack.c.b16 %v2184, %v2183
        %v2238 = vpack.c.b16 %v2186, %v2185
        %v2239 = vpack.c.b16 %v2188, %v2187
        %v2240 = vpack.c.b16 %v2190, %v2189
        %v2241 = vpack.c.b16 %v2192, %v2191
        %v2242 = vpack.c.b16 %v2194, %v2193
        %v2243 = vpack.c.b16 %v2196, %v2195
        %v2244 = vpack.c.b16 %v2198, %v2197
        %v2245 = vpack.c.b16 %v2200, %v2199
        %v2246 = vpack.c.b16 %v2202, %v2201
        %v2247 = vpack.c.b16 %v2204, %v2203
        %v2248 = vpack.c.b16 %v2206, %v2205
        %v2249 = vpack.c.b16 %v2208, %v2207
        %v2250 = vpack.c.b16 %v2210, %v2209
        %v2251 = vpack.c.b16 %v2212, %v2211
        %v2252 = vpack.c.b16 %v2214, %v2213
        %v2253 = vpack.c.b16 %v2216, %v2215
        %v2254 = vpack.c.b16 %v2218, %v2217
        %v2255 = vpack.c.b16 %v2220, %v2219
        %v2256 = vpack.c.b16 %v2222, %v2221
        %v2257 = vpack.c.b16 %v2224, %v2223
        %v2258 = vpack.c.b16 %v2226, %v2225
        %v2307 = vunpack.c.l.b16 %v2083
        %v2308 = vunpack.c.l.b16 %v2084
        %v2309 = vunpack.c.l.b16 %v2085
        %v2310 = vunpack.c.l.b16 %v2086
        %v2311 = vunpack.c.l.b16 %v2087
        %v2312 = vunpack.c.l.b16 %v2088
        %v2313 = vunpack.c.l.b16 %v2089
        %v2314 = vunpack.c.l.b16 %v2090
        %v2315 = vunpack.c.l.b16 %v2091
        %v2316 = vunpack.c.l.b16 %v2092
        %v2317 = vunpack.c.l.b16 %v2093
        %v2318 = vunpack.c.l.b16 %v2094
        %v2319 = vunpack.c.l.b16 %v2095
        %v2320 = vunpack.c.l.b16 %v2096
        %v2321 = vunpack.c.l.b16 %v2097
        %v2322 = vunpack.c.l.b16 %v2098
        %v2323 = vpack.c.b16 %v2308, %v2307
        %v2324 = vpack.c.b16 %v2310, %v2309
        %v2325 = vpack.c.b16 %v2312, %v2311
        %v2326 = vpack.c.b16 %v2314, %v2313
        %v2327 = vpack.c.b16 %v2316, %v2315
        %v2328 = vpack.c.b16 %v2318, %v2317
        %v2329 = vpack.c.b16 %v2320, %v2319
        %v2330 = vpack.c.b16 %v2322, %v2321
        %2339 = vmatprep.subr.bf16.mxu0 0
        %2340 = vmatpush1.bf16.msra.mxu0 %v2330
        %2341 = vmatprep.subr.bf16.mxu0 0
        %2342 = vmatpush1.bf16.msra.mxu0 %v2329
        %2343 = vmatprep.subr.bf16.mxu0 0
        %2344 = vmatpush1.bf16.msra.mxu0 %v2328
        %2345 = vmatprep.subr.bf16.mxu0 0
        %2346 = vmatpush1.bf16.msra.mxu0 %v2327
        %2347 = vmatprep.subr.bf16.mxu0 0
        %2348 = vmatpush1.bf16.msra.mxu0 %v2326
        %2349 = vmatprep.subr.bf16.mxu0 0
        %2350 = vmatpush1.bf16.msra.mxu0 %v2325
        %2351 = vmatprep.subr.bf16.mxu0 0
        %2352 = vmatpush1.bf16.msra.mxu0 %v2324
        %2353 = vmatprep.subr.bf16.mxu0 0
        %2354 = vmatpush1.bf16.msra.mxu0 %v2323
        %2355 = vmatprep.subr.bf16.mxu0 0
        %2356 = vmatpush2.bf16.msra.mxu0 0
        %2357 = vmatprep.subr.bf16.mxu0 0
        %2358 = vmatpush2.bf16.msra.mxu0 0
        %2359 = vmatprep.subr.bf16.mxu0 0
        %2360 = vmatpush2.bf16.msra.mxu0 0
        %2361 = vmatprep.subr.bf16.mxu0 0
        %2362 = vmatpush2.bf16.msra.mxu0 0
        %2363 = vmatprep.subr.bf16.mxu0 0
        %2364 = vmatpush2.bf16.msra.mxu0 0
        %2365 = vmatprep.subr.bf16.mxu0 0
        %2366 = vmatpush2.bf16.msra.mxu0 0
        %2367 = vmatprep.subr.bf16.mxu0 0
        %2368 = vmatpush2.bf16.msra.mxu0 0
        %2369 = vmatprep.subr.bf16.mxu0 0
        %2370 = vmatpush2.bf16.msra.mxu0 0
        %2371 = vmatprep.mubr.bf16.mxu0 0
        %2372 = vmatmul.mubr.bf16.gmra.mxu0 %v2227
        %v2373 = vpop.f32.mrf.mxu0
        %v2374 = vadd.f32 0.0, %v2373
        %v2375 = vpop.f32.mrf.mxu0
        %v2376 = vpop.f32.mrf.mxu0
        %v2377 = vadd.f32 0.0, %v2376
        %v2378 = vpop.f32.mrf.mxu0
        %2379 = vmatprep.mubr.bf16.mxu0 0
        %2380 = vmatmul.mubr.bf16.gmra.mxu0 %v2228
        %v2381 = vpop.f32.mrf.mxu0
        %v2382 = vadd.f32 0.0, %v2381
        %v2383 = vpop.f32.mrf.mxu0
        %v2384 = vpop.f32.mrf.mxu0
        %v2385 = vadd.f32 0.0, %v2384
        %v2386 = vpop.f32.mrf.mxu0
        %2387 = vmatprep.mubr.bf16.mxu0 0
        %2388 = vmatmul.mubr.bf16.gmra.mxu0 %v2229
        %v2389 = vpop.f32.mrf.mxu0
        %v2390 = vadd.f32 0.0, %v2389
        %v2391 = vpop.f32.mrf.mxu0
        %v2392 = vpop.f32.mrf.mxu0
        %v2393 = vadd.f32 0.0, %v2392
        %v2394 = vpop.f32.mrf.mxu0
        %2395 = vmatprep.mubr.bf16.mxu0 0
        %2396 = vmatmul.mubr.bf16.gmra.mxu0 %v2230
        %v2397 = vpop.f32.mrf.mxu0
        %v2398 = vadd.f32 0.0, %v2397
        %v2399 = vpop.f32.mrf.mxu0
        %v2400 = vpop.f32.mrf.mxu0
        %v2401 = vadd.f32 0.0, %v2400
        %v2402 = vpop.f32.mrf.mxu0
        %2403 = vmatprep.mubr.bf16.mxu0 0
        %2404 = vmatmul.mubr.bf16.gmra.mxu0 %v2231
        %v2405 = vpop.f32.mrf.mxu0
        %v2406 = vadd.f32 0.0, %v2405
        %v2407 = vpop.f32.mrf.mxu0
        %v2408 = vpop.f32.mrf.mxu0
        %v2409 = vadd.f32 0.0, %v2408
        %v2410 = vpop.f32.mrf.mxu0
        %2411 = vmatprep.mubr.bf16.mxu0 0
        %2412 = vmatmul.mubr.bf16.gmra.mxu0 %v2232
        %v2413 = vpop.f32.mrf.mxu0
        %v2414 = vadd.f32 0.0, %v2413
        %v2415 = vpop.f32.mrf.mxu0
        %v2416 = vpop.f32.mrf.mxu0
        %v2417 = vadd.f32 0.0, %v2416
        %v2418 = vpop.f32.mrf.mxu0
        %2419 = vmatprep.mubr.bf16.mxu0 0
        %2420 = vmatmul.mubr.bf16.gmra.mxu0 %v2233
        %v2421 = vpop.f32.mrf.mxu0
        %v2422 = vadd.f32 0.0, %v2421
        %v2423 = vpop.f32.mrf.mxu0
        %v2424 = vpop.f32.mrf.mxu0
        %v2425 = vadd.f32 0.0, %v2424
        %v2426 = vpop.f32.mrf.mxu0
        %2427 = vmatprep.mubr.bf16.mxu0 0
        %2428 = vmatmul.mubr.bf16.gmra.mxu0 %v2234
        %v2429 = vpop.f32.mrf.mxu0
        %v2430 = vadd.f32 0.0, %v2429
        %v2431 = vpop.f32.mrf.mxu0
        %v2432 = vpop.f32.mrf.mxu0
        %v2433 = vadd.f32 0.0, %v2432
        %v2434 = vpop.f32.mrf.mxu0
        %2435 = vmatprep.mubr.bf16.mxu0 0
        %2436 = vmatmul.mubr.bf16.gmra.mxu0 %v2235
        %v2437 = vpop.f32.mrf.mxu0
        %v2438 = vadd.f32 0.0, %v2437
        %v2439 = vpop.f32.mrf.mxu0
        %v2440 = vpop.f32.mrf.mxu0
        %v2441 = vadd.f32 0.0, %v2440
        %v2442 = vpop.f32.mrf.mxu0
        %2443 = vmatprep.mubr.bf16.mxu0 0
        %2444 = vmatmul.mubr.bf16.gmra.mxu0 %v2236
        %v2445 = vpop.f32.mrf.mxu0
        %v2446 = vadd.f32 0.0, %v2445
        %v2447 = vpop.f32.mrf.mxu0
        %v2448 = vpop.f32.mrf.mxu0
        %v2449 = vadd.f32 0.0, %v2448
        %v2450 = vpop.f32.mrf.mxu0
        %2451 = vmatprep.mubr.bf16.mxu0 0
        %2452 = vmatmul.mubr.bf16.gmra.mxu0 %v2237
        %v2453 = vpop.f32.mrf.mxu0
        %v2454 = vadd.f32 0.0, %v2453
        %v2455 = vpop.f32.mrf.mxu0
        %v2456 = vpop.f32.mrf.mxu0
        %v2457 = vadd.f32 0.0, %v2456
        %v2458 = vpop.f32.mrf.mxu0
        %2459 = vmatprep.mubr.bf16.mxu0 0
        %2460 = vmatmul.mubr.bf16.gmra.mxu0 %v2238
        %v2461 = vpop.f32.mrf.mxu0
        %v2462 = vadd.f32 0.0, %v2461
        %v2463 = vpop.f32.mrf.mxu0
        %v2464 = vpop.f32.mrf.mxu0
        %v2465 = vadd.f32 0.0, %v2464
        %v2466 = vpop.f32.mrf.mxu0
        %2467 = vmatprep.mubr.bf16.mxu0 0
        %2468 = vmatmul.mubr.bf16.gmra.mxu0 %v2239
        %v2469 = vpop.f32.mrf.mxu0
        %v2470 = vadd.f32 0.0, %v2469
        %v2471 = vpop.f32.mrf.mxu0
        %v2472 = vpop.f32.mrf.mxu0
        %v2473 = vadd.f32 0.0, %v2472
        %v2474 = vpop.f32.mrf.mxu0
        %2475 = vmatprep.mubr.bf16.mxu0 0
        %2476 = vmatmul.mubr.bf16.gmra.mxu0 %v2240
        %v2477 = vpop.f32.mrf.mxu0
        %v2478 = vadd.f32 0.0, %v2477
        %v2479 = vpop.f32.mrf.mxu0
        %v2480 = vpop.f32.mrf.mxu0
        %v2481 = vadd.f32 0.0, %v2480
        %v2482 = vpop.f32.mrf.mxu0
        %2483 = vmatprep.mubr.bf16.mxu0 0
        %2484 = vmatmul.mubr.bf16.gmra.mxu0 %v2241
        %v2485 = vpop.f32.mrf.mxu0
        %v2486 = vadd.f32 0.0, %v2485
        %v2487 = vpop.f32.mrf.mxu0
        %v2488 = vpop.f32.mrf.mxu0
        %v2489 = vadd.f32 0.0, %v2488
        %v2490 = vpop.f32.mrf.mxu0
        %2491 = vmatprep.mubr.bf16.mxu0 0
        %2492 = vmatmul.mubr.bf16.gmra.mxu0 %v2242
        %v2493 = vpop.f32.mrf.mxu0
        %v2494 = vadd.f32 0.0, %v2493
        %v2495 = vpop.f32.mrf.mxu0
        %v2496 = vpop.f32.mrf.mxu0
        %v2497 = vadd.f32 0.0, %v2496
        %v2498 = vpop.f32.mrf.mxu0
        %2499 = vmatprep.mubr.bf16.mxu0 0
        %2500 = vmatmul.mubr.bf16.gmra.mxu0 %v2243
        %v2501 = vpop.f32.mrf.mxu0
        %v2502 = vadd.f32 0.0, %v2501
        %v2503 = vpop.f32.mrf.mxu0
        %v2504 = vpop.f32.mrf.mxu0
        %v2505 = vadd.f32 0.0, %v2504
        %v2506 = vpop.f32.mrf.mxu0
        %2507 = vmatprep.mubr.bf16.mxu0 0
        %2508 = vmatmul.mubr.bf16.gmra.mxu0 %v2244
        %v2509 = vpop.f32.mrf.mxu0
        %v2510 = vadd.f32 0.0, %v2509
        %v2511 = vpop.f32.mrf.mxu0
        %v2512 = vpop.f32.mrf.mxu0
        %v2513 = vadd.f32 0.0, %v2512
        %v2514 = vpop.f32.mrf.mxu0
        %2515 = vmatprep.mubr.bf16.mxu0 0
        %2516 = vmatmul.mubr.bf16.gmra.mxu0 %v2245
        %v2517 = vpop.f32.mrf.mxu0
        %v2518 = vadd.f32 0.0, %v2517
        %v2519 = vpop.f32.mrf.mxu0
        %v2520 = vpop.f32.mrf.mxu0
        %v2521 = vadd.f32 0.0, %v2520
        %v2522 = vpop.f32.mrf.mxu0
        %2523 = vmatprep.mubr.bf16.mxu0 0
        %2524 = vmatmul.mubr.bf16.gmra.mxu0 %v2246
        %v2525 = vpop.f32.mrf.mxu0
        %v2526 = vadd.f32 0.0, %v2525
        %v2527 = vpop.f32.mrf.mxu0
        %v2528 = vpop.f32.mrf.mxu0
        %v2529 = vadd.f32 0.0, %v2528
        %v2530 = vpop.f32.mrf.mxu0
        %2531 = vmatprep.mubr.bf16.mxu0 0
        %2532 = vmatmul.mubr.bf16.gmra.mxu0 %v2247
        %v2533 = vpop.f32.mrf.mxu0
        %v2534 = vadd.f32 0.0, %v2533
        %v2535 = vpop.f32.mrf.mxu0
        %v2536 = vpop.f32.mrf.mxu0
        %v2537 = vadd.f32 0.0, %v2536
        %v2538 = vpop.f32.mrf.mxu0
        %2539 = vmatprep.mubr.bf16.mxu0 0
        %2540 = vmatmul.mubr.bf16.gmra.mxu0 %v2248
        %v2541 = vpop.f32.mrf.mxu0
        %v2542 = vadd.f32 0.0, %v2541
        %v2543 = vpop.f32.mrf.mxu0
        %v2544 = vpop.f32.mrf.mxu0
        %v2545 = vadd.f32 0.0, %v2544
        %v2546 = vpop.f32.mrf.mxu0
        %2547 = vmatprep.mubr.bf16.mxu0 0
        %2548 = vmatmul.mubr.bf16.gmra.mxu0 %v2249
        %v2549 = vpop.f32.mrf.mxu0
        %v2550 = vadd.f32 0.0, %v2549
        %v2551 = vpop.f32.mrf.mxu0
        %v2552 = vpop.f32.mrf.mxu0
        %v2553 = vadd.f32 0.0, %v2552
        %v2554 = vpop.f32.mrf.mxu0
        %2555 = vmatprep.mubr.bf16.mxu0 0
        %2556 = vmatmul.mubr.bf16.gmra.mxu0 %v2250
        %v2557 = vpop.f32.mrf.mxu0
        %v2558 = vadd.f32 0.0, %v2557
        %v2559 = vpop.f32.mrf.mxu0
        %v2560 = vpop.f32.mrf.mxu0
        %v2561 = vadd.f32 0.0, %v2560
        %v2562 = vpop.f32.mrf.mxu0
        %2563 = vmatprep.mubr.bf16.mxu0 0
        %2564 = vmatmul.mubr.bf16.gmra.mxu0 %v2251
        %v2565 = vpop.f32.mrf.mxu0
        %v2566 = vadd.f32 0.0, %v2565
        %v2567 = vpop.f32.mrf.mxu0
        %v2568 = vpop.f32.mrf.mxu0
        %v2569 = vadd.f32 0.0, %v2568
        %v2570 = vpop.f32.mrf.mxu0
        %2571 = vmatprep.mubr.bf16.mxu0 0
        %2572 = vmatmul.mubr.bf16.gmra.mxu0 %v2252
        %v2573 = vpop.f32.mrf.mxu0
        %v2574 = vadd.f32 0.0, %v2573
        %v2575 = vpop.f32.mrf.mxu0
        %v2576 = vpop.f32.mrf.mxu0
        %v2577 = vadd.f32 0.0, %v2576
        %v2578 = vpop.f32.mrf.mxu0
        %2579 = vmatprep.mubr.bf16.mxu0 0
        %2580 = vmatmul.mubr.bf16.gmra.mxu0 %v2253
        %v2581 = vpop.f32.mrf.mxu0
        %v2582 = vadd.f32 0.0, %v2581
        %v2583 = vpop.f32.mrf.mxu0
        %v2584 = vpop.f32.mrf.mxu0
        %v2585 = vadd.f32 0.0, %v2584
        %v2586 = vpop.f32.mrf.mxu0
        %2587 = vmatprep.mubr.bf16.mxu0 0
        %2588 = vmatmul.mubr.bf16.gmra.mxu0 %v2254
        %v2589 = vpop.f32.mrf.mxu0
        %v2590 = vadd.f32 0.0, %v2589
        %v2591 = vpop.f32.mrf.mxu0
        %v2592 = vpop.f32.mrf.mxu0
        %v2593 = vadd.f32 0.0, %v2592
        %v2594 = vpop.f32.mrf.mxu0
        %2595 = vmatprep.mubr.bf16.mxu0 0
        %2596 = vmatmul.mubr.bf16.gmra.mxu0 %v2255
        %v2597 = vpop.f32.mrf.mxu0
        %v2598 = vadd.f32 0.0, %v2597
        %v2599 = vpop.f32.mrf.mxu0
        %v2600 = vpop.f32.mrf.mxu0
        %v2601 = vadd.f32 0.0, %v2600
        %v2602 = vpop.f32.mrf.mxu0
        %2603 = vmatprep.mubr.bf16.mxu0 0
        %2604 = vmatmul.mubr.bf16.gmra.mxu0 %v2256
        %v2605 = vpop.f32.mrf.mxu0
        %v2606 = vadd.f32 0.0, %v2605
        %v2607 = vpop.f32.mrf.mxu0
        %v2608 = vpop.f32.mrf.mxu0
        %v2609 = vadd.f32 0.0, %v2608
        %v2610 = vpop.f32.mrf.mxu0
        %2611 = vmatprep.mubr.bf16.mxu0 0
        %2612 = vmatmul.mubr.bf16.gmra.mxu0 %v2257
        %v2613 = vpop.f32.mrf.mxu0
        %v2614 = vadd.f32 0.0, %v2613
        %v2615 = vpop.f32.mrf.mxu0
        %v2616 = vpop.f32.mrf.mxu0
        %v2617 = vadd.f32 0.0, %v2616
        %v2618 = vpop.f32.mrf.mxu0
        %2619 = vmatprep.mubr.bf16.mxu0 0
        %2620 = vmatmul.mubr.bf16.gmra.mxu0 %v2258
        %v2621 = vpop.f32.mrf.mxu0
        %v2622 = vadd.f32 0.0, %v2621
        %v2623 = vpop.f32.mrf.mxu0
        %v2624 = vpop.f32.mrf.mxu0
        %v2625 = vadd.f32 0.0, %v2624
        %v2626 = vpop.f32.mrf.mxu0
        %2627 = vdwg.mxu0
        %v2628 = vadd.f32 %v1949, %v2374
        %v2629 = vadd.f32 %v1950, %v2377
        %v2630 = vadd.f32 %v1951, %v2382
        %v2631 = vadd.f32 %v1952, %v2385
        %v2632 = vadd.f32 %v1953, %v2390
        %v2633 = vadd.f32 %v1954, %v2393
        %v2634 = vadd.f32 %v1955, %v2398
        %v2635 = vadd.f32 %v1956, %v2401
        %v2636 = vadd.f32 %v1957, %v2406
        %v2637 = vadd.f32 %v1958, %v2409
        %v2638 = vadd.f32 %v1959, %v2414
        %v2639 = vadd.f32 %v1960, %v2417
        %v2640 = vadd.f32 %v1961, %v2422
        %v2641 = vadd.f32 %v1962, %v2425
        %v2642 = vadd.f32 %v1963, %v2430
        %v2643 = vadd.f32 %v1964, %v2433
        %v2644 = vadd.f32 %v1965, %v2438
        %v2645 = vadd.f32 %v1966, %v2441
        %v2646 = vadd.f32 %v1967, %v2446
        %v2647 = vadd.f32 %v1968, %v2449
        %v2648 = vadd.f32 %v1969, %v2454
        %v2649 = vadd.f32 %v1970, %v2457
        %v2650 = vadd.f32 %v1971, %v2462
        %v2651 = vadd.f32 %v1972, %v2465
        %v2652 = vadd.f32 %v1973, %v2470
        %v2653 = vadd.f32 %v1974, %v2473
        %v2654 = vadd.f32 %v1975, %v2478
        %v2655 = vadd.f32 %v1976, %v2481
        %v2656 = vadd.f32 %v1977, %v2486
        %v2657 = vadd.f32 %v1978, %v2489
        %v2658 = vadd.f32 %v1979, %v2494
        %v2659 = vadd.f32 %v1980, %v2497
        %v2660 = vadd.f32 %v1981, %v2502
        %v2661 = vadd.f32 %v1982, %v2505
        %v2662 = vadd.f32 %v1983, %v2510
        %v2663 = vadd.f32 %v1984, %v2513
        %v2664 = vadd.f32 %v1985, %v2518
        %v2665 = vadd.f32 %v1986, %v2521
        %v2666 = vadd.f32 %v1987, %v2526
        %v2667 = vadd.f32 %v1988, %v2529
        %v2668 = vadd.f32 %v1989, %v2534
        %v2669 = vadd.f32 %v1990, %v2537
        %v2670 = vadd.f32 %v1991, %v2542
        %v2671 = vadd.f32 %v1992, %v2545
        %v2672 = vadd.f32 %v1993, %v2550
        %v2673 = vadd.f32 %v1994, %v2553
        %v2674 = vadd.f32 %v1995, %v2558
        %v2675 = vadd.f32 %v1996, %v2561
        %v2676 = vadd.f32 %v1997, %v2566
        %v2677 = vadd.f32 %v1998, %v2569
        %v2678 = vadd.f32 %v1999, %v2574
        %v2679 = vadd.f32 %v2000, %v2577
        %v2680 = vadd.f32 %v2001, %v2582
        %v2681 = vadd.f32 %v2002, %v2585
        %v2682 = vadd.f32 %v2003, %v2590
        %v2683 = vadd.f32 %v2004, %v2593
        %v2684 = vadd.f32 %v2005, %v2598
        %v2685 = vadd.f32 %v2006, %v2601
        %v2686 = vadd.f32 %v2007, %v2606
        %v2687 = vadd.f32 %v2008, %v2609
        %v2688 = vadd.f32 %v2009, %v2614
        %v2689 = vadd.f32 %v2010, %v2617
        %v2690 = vadd.f32 %v2011, %v2622
        %v2691 = vadd.f32 %v2012, %v2625
        %s2692 = scalar_lea.vmem [#allocation5], 256
        %v2693 = vld [vmem:[%s2692] sm:$0xf]
        %v2694 = vld [vmem:[%s2692 + $0x4] sm:$0xf]
        %v2695 = vld [vmem:[%s2692 + $0x8] sm:$0xf]
        %v2696 = vld [vmem:[%s2692 + $0xc] sm:$0xf]
        %v2697 = vld [vmem:[%s2692 + $0x10] sm:$0xf]
        %v2698 = vld [vmem:[%s2692 + $0x14] sm:$0xf]
        %v2699 = vld [vmem:[%s2692 + $0x18] sm:$0xf]
        %v2700 = vld [vmem:[%s2692 + $0x1c] sm:$0xf]
        %v2701 = vld [vmem:[%s2692 + $0x20] sm:$0xf]
        %v2702 = vld [vmem:[%s2692 + $0x24] sm:$0xf]
        %v2703 = vld [vmem:[%s2692 + $0x28] sm:$0xf]
        %v2704 = vld [vmem:[%s2692 + $0x2c] sm:$0xf]
        %v2705 = vld [vmem:[%s2692 + $0x30] sm:$0xf]
        %v2706 = vld [vmem:[%s2692 + $0x34] sm:$0xf]
        %v2707 = vld [vmem:[%s2692 + $0x38] sm:$0xf]
        %v2708 = vld [vmem:[%s2692 + $0x3c] sm:$0xf]
        %v2710 = vunpack.c.l.b16 %v2081
        %v2711 = vpack.c.b16 %v2710, %v2710
        %v2713 = vshrl.u32 %v2227, 16
        %v2715 = vshll.u32 %v2227, 16
        %v2717 = vrot.slane %v2715, 1
        %v2718 = vor.u32 %v2713, %v2717
        %v2720 = vshll.u32 %v2228, 16
        %v2722 = vrot.slane %v2720, 1
        %v2723 = vsel %vm498, %v2718, %v2722
        %v2724 = vshrl.u32 %v2228, 16
        %v2726 = vor.u32 %v2724, %v2722
        %v2728 = vshll.u32 %v2229, 16
        %v2730 = vrot.slane %v2728, 1
        %v2731 = vsel %vm498, %v2726, %v2730
        %v2732 = vshrl.u32 %v2229, 16
        %v2734 = vor.u32 %v2732, %v2730
        %v2736 = vshll.u32 %v2230, 16
        %v2738 = vrot.slane %v2736, 1
        %v2739 = vsel %vm498, %v2734, %v2738
        %v2740 = vshrl.u32 %v2230, 16
        %v2742 = vor.u32 %v2740, %v2738
        %v2744 = vshll.u32 %v2231, 16
        %v2746 = vrot.slane %v2744, 1
        %v2747 = vsel %vm498, %v2742, %v2746
        %v2748 = vshrl.u32 %v2231, 16
        %v2750 = vor.u32 %v2748, %v2746
        %v2752 = vshll.u32 %v2232, 16
        %v2754 = vrot.slane %v2752, 1
        %v2755 = vsel %vm498, %v2750, %v2754
        %v2756 = vshrl.u32 %v2232, 16
        %v2758 = vor.u32 %v2756, %v2754
        %v2760 = vshll.u32 %v2233, 16
        %v2762 = vrot.slane %v2760, 1
        %v2763 = vsel %vm498, %v2758, %v2762
        %v2764 = vshrl.u32 %v2233, 16
        %v2766 = vor.u32 %v2764, %v2762
        %v2768 = vshll.u32 %v2234, 16
        %v2770 = vrot.slane %v2768, 1
        %v2771 = vsel %vm498, %v2766, %v2770
        %v2772 = vshrl.u32 %v2234, 16
        %v2774 = vor.u32 %v2772, %v2770
        %v2776 = vshll.u32 %v2235, 16
        %v2778 = vrot.slane %v2776, 1
        %v2779 = vsel %vm498, %v2774, %v2778
        %v2780 = vshrl.u32 %v2235, 16
        %v2782 = vor.u32 %v2780, %v2778
        %v2784 = vshll.u32 %v2236, 16
        %v2786 = vrot.slane %v2784, 1
        %v2787 = vsel %vm498, %v2782, %v2786
        %v2788 = vshrl.u32 %v2236, 16
        %v2790 = vor.u32 %v2788, %v2786
        %v2792 = vshll.u32 %v2237, 16
        %v2794 = vrot.slane %v2792, 1
        %v2795 = vsel %vm498, %v2790, %v2794
        %v2796 = vshrl.u32 %v2237, 16
        %v2798 = vor.u32 %v2796, %v2794
        %v2800 = vshll.u32 %v2238, 16
        %v2802 = vrot.slane %v2800, 1
        %v2803 = vsel %vm498, %v2798, %v2802
        %v2804 = vshrl.u32 %v2238, 16
        %v2806 = vor.u32 %v2804, %v2802
        %v2808 = vshll.u32 %v2239, 16
        %v2810 = vrot.slane %v2808, 1
        %v2811 = vsel %vm498, %v2806, %v2810
        %v2812 = vshrl.u32 %v2239, 16
        %v2814 = vor.u32 %v2812, %v2810
        %v2816 = vshll.u32 %v2240, 16
        %v2818 = vrot.slane %v2816, 1
        %v2819 = vsel %vm498, %v2814, %v2818
        %v2820 = vshrl.u32 %v2240, 16
        %v2822 = vor.u32 %v2820, %v2818
        %v2824 = vshll.u32 %v2241, 16
        %v2826 = vrot.slane %v2824, 1
        %v2827 = vsel %vm498, %v2822, %v2826
        %v2828 = vshrl.u32 %v2241, 16
        %v2830 = vor.u32 %v2828, %v2826
        %v2832 = vshll.u32 %v2242, 16
        %v2834 = vrot.slane %v2832, 1
        %v2835 = vsel %vm498, %v2830, %v2834
        %v2836 = vshrl.u32 %v2242, 16
        %v2838 = vor.u32 %v2836, %v2834
        %v2840 = vshll.u32 %v2243, 16
        %v2842 = vrot.slane %v2840, 1
        %v2843 = vsel %vm498, %v2838, %v2842
        %v2844 = vshrl.u32 %v2243, 16
        %v2846 = vor.u32 %v2844, %v2842
        %v2848 = vshll.u32 %v2244, 16
        %v2850 = vrot.slane %v2848, 1
        %v2851 = vsel %vm498, %v2846, %v2850
        %v2852 = vshrl.u32 %v2244, 16
        %v2854 = vor.u32 %v2852, %v2850
        %v2856 = vshll.u32 %v2245, 16
        %v2858 = vrot.slane %v2856, 1
        %v2859 = vsel %vm498, %v2854, %v2858
        %v2860 = vshrl.u32 %v2245, 16
        %v2862 = vor.u32 %v2860, %v2858
        %v2864 = vshll.u32 %v2246, 16
        %v2866 = vrot.slane %v2864, 1
        %v2867 = vsel %vm498, %v2862, %v2866
        %v2868 = vshrl.u32 %v2246, 16
        %v2870 = vor.u32 %v2868, %v2866
        %v2872 = vshll.u32 %v2247, 16
        %v2874 = vrot.slane %v2872, 1
        %v2875 = vsel %vm498, %v2870, %v2874
        %v2876 = vshrl.u32 %v2247, 16
        %v2878 = vor.u32 %v2876, %v2874
        %v2880 = vshll.u32 %v2248, 16
        %v2882 = vrot.slane %v2880, 1
        %v2883 = vsel %vm498, %v2878, %v2882
        %v2884 = vshrl.u32 %v2248, 16
        %v2886 = vor.u32 %v2884, %v2882
        %v2888 = vshll.u32 %v2249, 16
        %v2890 = vrot.slane %v2888, 1
        %v2891 = vsel %vm498, %v2886, %v2890
        %v2892 = vshrl.u32 %v2249, 16
        %v2894 = vor.u32 %v2892, %v2890
        %v2896 = vshll.u32 %v2250, 16
        %v2898 = vrot.slane %v2896, 1
        %v2899 = vsel %vm498, %v2894, %v2898
        %v2900 = vshrl.u32 %v2250, 16
        %v2902 = vor.u32 %v2900, %v2898
        %v2904 = vshll.u32 %v2251, 16
        %v2906 = vrot.slane %v2904, 1
        %v2907 = vsel %vm498, %v2902, %v2906
        %v2908 = vshrl.u32 %v2251, 16
        %v2910 = vor.u32 %v2908, %v2906
        %v2912 = vshll.u32 %v2252, 16
        %v2914 = vrot.slane %v2912, 1
        %v2915 = vsel %vm498, %v2910, %v2914
        %v2916 = vshrl.u32 %v2252, 16
        %v2918 = vor.u32 %v2916, %v2914
        %v2920 = vshll.u32 %v2253, 16
        %v2922 = vrot.slane %v2920, 1
        %v2923 = vsel %vm498, %v2918, %v2922
        %v2924 = vshrl.u32 %v2253, 16
        %v2926 = vor.u32 %v2924, %v2922
        %v2928 = vshll.u32 %v2254, 16
        %v2930 = vrot.slane %v2928, 1
        %v2931 = vsel %vm498, %v2926, %v2930
        %v2932 = vshrl.u32 %v2254, 16
        %v2934 = vor.u32 %v2932, %v2930
        %v2936 = vshll.u32 %v2255, 16
        %v2938 = vrot.slane %v2936, 1
        %v2939 = vsel %vm498, %v2934, %v2938
        %v2940 = vshrl.u32 %v2255, 16
        %v2942 = vor.u32 %v2940, %v2938
        %v2944 = vshll.u32 %v2256, 16
        %v2946 = vrot.slane %v2944, 1
        %v2947 = vsel %vm498, %v2942, %v2946
        %v2948 = vshrl.u32 %v2256, 16
        %v2950 = vor.u32 %v2948, %v2946
        %v2952 = vshll.u32 %v2257, 16
        %v2954 = vrot.slane %v2952, 1
        %v2955 = vsel %vm498, %v2950, %v2954
        %v2956 = vshrl.u32 %v2257, 16
        %v2958 = vor.u32 %v2956, %v2954
        %v2960 = vshll.u32 %v2258, 16
        %v2962 = vrot.slane %v2960, 1
        %v2963 = vsel %vm498, %v2958, %v2962
        %v2964 = vshrl.u32 %v2258, 16
        %v2966 = vor.u32 %v2964, %v2962
        %v2968 = vshll.u32 %v2711, 16
        %v2970 = vrot.slane %v2968, 1
        %v2971 = vsel %vm498, %v2966, %v2970
        %v3020 = vunpack.c.l.b16 %v2693
        %v3021 = vunpack.c.l.b16 %v2694
        %v3022 = vunpack.c.l.b16 %v2695
        %v3023 = vunpack.c.l.b16 %v2696
        %v3024 = vunpack.c.l.b16 %v2697
        %v3025 = vunpack.c.l.b16 %v2698
        %v3026 = vunpack.c.l.b16 %v2699
        %v3027 = vunpack.c.l.b16 %v2700
        %v3028 = vunpack.c.l.b16 %v2701
        %v3029 = vunpack.c.l.b16 %v2702
        %v3030 = vunpack.c.l.b16 %v2703
        %v3031 = vunpack.c.l.b16 %v2704
        %v3032 = vunpack.c.l.b16 %v2705
        %v3033 = vunpack.c.l.b16 %v2706
        %v3034 = vunpack.c.l.b16 %v2707
        %v3035 = vunpack.c.l.b16 %v2708
        %v3036 = vpack.c.b16 %v3021, %v3020
        %v3037 = vpack.c.b16 %v3023, %v3022
        %v3038 = vpack.c.b16 %v3025, %v3024
        %v3039 = vpack.c.b16 %v3027, %v3026
        %v3040 = vpack.c.b16 %v3029, %v3028
        %v3041 = vpack.c.b16 %v3031, %v3030
        %v3042 = vpack.c.b16 %v3033, %v3032
        %v3043 = vpack.c.b16 %v3035, %v3034
        %3052 = vmatprep.subr.bf16.mxu0 0
        %3053 = vmatpush1.bf16.msra.mxu0 %v3043
        %3054 = vmatprep.subr.bf16.mxu0 0
        %3055 = vmatpush1.bf16.msra.mxu0 %v3042
        %3056 = vmatprep.subr.bf16.mxu0 0
        %3057 = vmatpush1.bf16.msra.mxu0 %v3041
        %3058 = vmatprep.subr.bf16.mxu0 0
        %3059 = vmatpush1.bf16.msra.mxu0 %v3040
        %3060 = vmatprep.subr.bf16.mxu0 0
        %3061 = vmatpush1.bf16.msra.mxu0 %v3039
        %3062 = vmatprep.subr.bf16.mxu0 0
        %3063 = vmatpush1.bf16.msra.mxu0 %v3038
        %3064 = vmatprep.subr.bf16.mxu0 0
        %3065 = vmatpush1.bf16.msra.mxu0 %v3037
        %3066 = vmatprep.subr.bf16.mxu0 0
        %3067 = vmatpush1.bf16.msra.mxu0 %v3036
        %3068 = vmatprep.subr.bf16.mxu0 0
        %3069 = vmatpush2.bf16.msra.mxu0 0
        %3070 = vmatprep.subr.bf16.mxu0 0
        %3071 = vmatpush2.bf16.msra.mxu0 0
        %3072 = vmatprep.subr.bf16.mxu0 0
        %3073 = vmatpush2.bf16.msra.mxu0 0
        %3074 = vmatprep.subr.bf16.mxu0 0
        %3075 = vmatpush2.bf16.msra.mxu0 0
        %3076 = vmatprep.subr.bf16.mxu0 0
        %3077 = vmatpush2.bf16.msra.mxu0 0
        %3078 = vmatprep.subr.bf16.mxu0 0
        %3079 = vmatpush2.bf16.msra.mxu0 0
        %3080 = vmatprep.subr.bf16.mxu0 0
        %3081 = vmatpush2.bf16.msra.mxu0 0
        %3082 = vmatprep.subr.bf16.mxu0 0
        %3083 = vmatpush2.bf16.msra.mxu0 0
        %3084 = vmatprep.mubr.bf16.mxu0 0
        %3085 = vmatmul.mubr.bf16.gmra.mxu0 %v2723
        %v3086 = vpop.f32.mrf.mxu0
        %v3087 = vadd.f32 0.0, %v3086
        %v3088 = vpop.f32.mrf.mxu0
        %v3089 = vpop.f32.mrf.mxu0
        %v3090 = vadd.f32 0.0, %v3089
        %v3091 = vpop.f32.mrf.mxu0
        %3092 = vmatprep.mubr.bf16.mxu0 0
        %3093 = vmatmul.mubr.bf16.gmra.mxu0 %v2731
        %v3094 = vpop.f32.mrf.mxu0
        %v3095 = vadd.f32 0.0, %v3094
        %v3096 = vpop.f32.mrf.mxu0
        %v3097 = vpop.f32.mrf.mxu0
        %v3098 = vadd.f32 0.0, %v3097
        %v3099 = vpop.f32.mrf.mxu0
        %3100 = vmatprep.mubr.bf16.mxu0 0
        %3101 = vmatmul.mubr.bf16.gmra.mxu0 %v2739
        %v3102 = vpop.f32.mrf.mxu0
        %v3103 = vadd.f32 0.0, %v3102
        %v3104 = vpop.f32.mrf.mxu0
        %v3105 = vpop.f32.mrf.mxu0
        %v3106 = vadd.f32 0.0, %v3105
        %v3107 = vpop.f32.mrf.mxu0
        %3108 = vmatprep.mubr.bf16.mxu0 0
        %3109 = vmatmul.mubr.bf16.gmra.mxu0 %v2747
        %v3110 = vpop.f32.mrf.mxu0
        %v3111 = vadd.f32 0.0, %v3110
        %v3112 = vpop.f32.mrf.mxu0
        %v3113 = vpop.f32.mrf.mxu0
        %v3114 = vadd.f32 0.0, %v3113
        %v3115 = vpop.f32.mrf.mxu0
        %3116 = vmatprep.mubr.bf16.mxu0 0
        %3117 = vmatmul.mubr.bf16.gmra.mxu0 %v2755
        %v3118 = vpop.f32.mrf.mxu0
        %v3119 = vadd.f32 0.0, %v3118
        %v3120 = vpop.f32.mrf.mxu0
        %v3121 = vpop.f32.mrf.mxu0
        %v3122 = vadd.f32 0.0, %v3121
        %v3123 = vpop.f32.mrf.mxu0
        %3124 = vmatprep.mubr.bf16.mxu0 0
        %3125 = vmatmul.mubr.bf16.gmra.mxu0 %v2763
        %v3126 = vpop.f32.mrf.mxu0
        %v3127 = vadd.f32 0.0, %v3126
        %v3128 = vpop.f32.mrf.mxu0
        %v3129 = vpop.f32.mrf.mxu0
        %v3130 = vadd.f32 0.0, %v3129
        %v3131 = vpop.f32.mrf.mxu0
        %3132 = vmatprep.mubr.bf16.mxu0 0
        %3133 = vmatmul.mubr.bf16.gmra.mxu0 %v2771
        %v3134 = vpop.f32.mrf.mxu0
        %v3135 = vadd.f32 0.0, %v3134
        %v3136 = vpop.f32.mrf.mxu0
        %v3137 = vpop.f32.mrf.mxu0
        %v3138 = vadd.f32 0.0, %v3137
        %v3139 = vpop.f32.mrf.mxu0
        %3140 = vmatprep.mubr.bf16.mxu0 0
        %3141 = vmatmul.mubr.bf16.gmra.mxu0 %v2779
        %v3142 = vpop.f32.mrf.mxu0
        %v3143 = vadd.f32 0.0, %v3142
        %v3144 = vpop.f32.mrf.mxu0
        %v3145 = vpop.f32.mrf.mxu0
        %v3146 = vadd.f32 0.0, %v3145
        %v3147 = vpop.f32.mrf.mxu0
        %3148 = vmatprep.mubr.bf16.mxu0 0
        %3149 = vmatmul.mubr.bf16.gmra.mxu0 %v2787
        %v3150 = vpop.f32.mrf.mxu0
        %v3151 = vadd.f32 0.0, %v3150
        %v3152 = vpop.f32.mrf.mxu0
        %v3153 = vpop.f32.mrf.mxu0
        %v3154 = vadd.f32 0.0, %v3153
        %v3155 = vpop.f32.mrf.mxu0
        %3156 = vmatprep.mubr.bf16.mxu0 0
        %3157 = vmatmul.mubr.bf16.gmra.mxu0 %v2795
        %v3158 = vpop.f32.mrf.mxu0
        %v3159 = vadd.f32 0.0, %v3158
        %v3160 = vpop.f32.mrf.mxu0
        %v3161 = vpop.f32.mrf.mxu0
        %v3162 = vadd.f32 0.0, %v3161
        %v3163 = vpop.f32.mrf.mxu0
        %3164 = vmatprep.mubr.bf16.mxu0 0
        %3165 = vmatmul.mubr.bf16.gmra.mxu0 %v2803
        %v3166 = vpop.f32.mrf.mxu0
        %v3167 = vadd.f32 0.0, %v3166
        %v3168 = vpop.f32.mrf.mxu0
        %v3169 = vpop.f32.mrf.mxu0
        %v3170 = vadd.f32 0.0, %v3169
        %v3171 = vpop.f32.mrf.mxu0
        %3172 = vmatprep.mubr.bf16.mxu0 0
        %3173 = vmatmul.mubr.bf16.gmra.mxu0 %v2811
        %v3174 = vpop.f32.mrf.mxu0
        %v3175 = vadd.f32 0.0, %v3174
        %v3176 = vpop.f32.mrf.mxu0
        %v3177 = vpop.f32.mrf.mxu0
        %v3178 = vadd.f32 0.0, %v3177
        %v3179 = vpop.f32.mrf.mxu0
        %3180 = vmatprep.mubr.bf16.mxu0 0
        %3181 = vmatmul.mubr.bf16.gmra.mxu0 %v2819
        %v3182 = vpop.f32.mrf.mxu0
        %v3183 = vadd.f32 0.0, %v3182
        %v3184 = vpop.f32.mrf.mxu0
        %v3185 = vpop.f32.mrf.mxu0
        %v3186 = vadd.f32 0.0, %v3185
        %v3187 = vpop.f32.mrf.mxu0
        %3188 = vmatprep.mubr.bf16.mxu0 0
        %3189 = vmatmul.mubr.bf16.gmra.mxu0 %v2827
        %v3190 = vpop.f32.mrf.mxu0
        %v3191 = vadd.f32 0.0, %v3190
        %v3192 = vpop.f32.mrf.mxu0
        %v3193 = vpop.f32.mrf.mxu0
        %v3194 = vadd.f32 0.0, %v3193
        %v3195 = vpop.f32.mrf.mxu0
        %3196 = vmatprep.mubr.bf16.mxu0 0
        %3197 = vmatmul.mubr.bf16.gmra.mxu0 %v2835
        %v3198 = vpop.f32.mrf.mxu0
        %v3199 = vadd.f32 0.0, %v3198
        %v3200 = vpop.f32.mrf.mxu0
        %v3201 = vpop.f32.mrf.mxu0
        %v3202 = vadd.f32 0.0, %v3201
        %v3203 = vpop.f32.mrf.mxu0
        %3204 = vmatprep.mubr.bf16.mxu0 0
        %3205 = vmatmul.mubr.bf16.gmra.mxu0 %v2843
        %v3206 = vpop.f32.mrf.mxu0
        %v3207 = vadd.f32 0.0, %v3206
        %v3208 = vpop.f32.mrf.mxu0
        %v3209 = vpop.f32.mrf.mxu0
        %v3210 = vadd.f32 0.0, %v3209
        %v3211 = vpop.f32.mrf.mxu0
        %3212 = vmatprep.mubr.bf16.mxu0 0
        %3213 = vmatmul.mubr.bf16.gmra.mxu0 %v2851
        %v3214 = vpop.f32.mrf.mxu0
        %v3215 = vadd.f32 0.0, %v3214
        %v3216 = vpop.f32.mrf.mxu0
        %v3217 = vpop.f32.mrf.mxu0
        %v3218 = vadd.f32 0.0, %v3217
        %v3219 = vpop.f32.mrf.mxu0
        %3220 = vmatprep.mubr.bf16.mxu0 0
        %3221 = vmatmul.mubr.bf16.gmra.mxu0 %v2859
        %v3222 = vpop.f32.mrf.mxu0
        %v3223 = vadd.f32 0.0, %v3222
        %v3224 = vpop.f32.mrf.mxu0
        %v3225 = vpop.f32.mrf.mxu0
        %v3226 = vadd.f32 0.0, %v3225
        %v3227 = vpop.f32.mrf.mxu0
        %3228 = vmatprep.mubr.bf16.mxu0 0
        %3229 = vmatmul.mubr.bf16.gmra.mxu0 %v2867
        %v3230 = vpop.f32.mrf.mxu0
        %v3231 = vadd.f32 0.0, %v3230
        %v3232 = vpop.f32.mrf.mxu0
        %v3233 = vpop.f32.mrf.mxu0
        %v3234 = vadd.f32 0.0, %v3233
        %v3235 = vpop.f32.mrf.mxu0
        %3236 = vmatprep.mubr.bf16.mxu0 0
        %3237 = vmatmul.mubr.bf16.gmra.mxu0 %v2875
        %v3238 = vpop.f32.mrf.mxu0
        %v3239 = vadd.f32 0.0, %v3238
        %v3240 = vpop.f32.mrf.mxu0
        %v3241 = vpop.f32.mrf.mxu0
        %v3242 = vadd.f32 0.0, %v3241
        %v3243 = vpop.f32.mrf.mxu0
        %3244 = vmatprep.mubr.bf16.mxu0 0
        %3245 = vmatmul.mubr.bf16.gmra.mxu0 %v2883
        %v3246 = vpop.f32.mrf.mxu0
        %v3247 = vadd.f32 0.0, %v3246
        %v3248 = vpop.f32.mrf.mxu0
        %v3249 = vpop.f32.mrf.mxu0
        %v3250 = vadd.f32 0.0, %v3249
        %v3251 = vpop.f32.mrf.mxu0
        %3252 = vmatprep.mubr.bf16.mxu0 0
        %3253 = vmatmul.mubr.bf16.gmra.mxu0 %v2891
        %v3254 = vpop.f32.mrf.mxu0
        %v3255 = vadd.f32 0.0, %v3254
        %v3256 = vpop.f32.mrf.mxu0
        %v3257 = vpop.f32.mrf.mxu0
        %v3258 = vadd.f32 0.0, %v3257
        %v3259 = vpop.f32.mrf.mxu0
        %3260 = vmatprep.mubr.bf16.mxu0 0
        %3261 = vmatmul.mubr.bf16.gmra.mxu0 %v2899
        %v3262 = vpop.f32.mrf.mxu0
        %v3263 = vadd.f32 0.0, %v3262
        %v3264 = vpop.f32.mrf.mxu0
        %v3265 = vpop.f32.mrf.mxu0
        %v3266 = vadd.f32 0.0, %v3265
        %v3267 = vpop.f32.mrf.mxu0
        %3268 = vmatprep.mubr.bf16.mxu0 0
        %3269 = vmatmul.mubr.bf16.gmra.mxu0 %v2907
        %v3270 = vpop.f32.mrf.mxu0
        %v3271 = vadd.f32 0.0, %v3270
        %v3272 = vpop.f32.mrf.mxu0
        %v3273 = vpop.f32.mrf.mxu0
        %v3274 = vadd.f32 0.0, %v3273
        %v3275 = vpop.f32.mrf.mxu0
        %3276 = vmatprep.mubr.bf16.mxu0 0
        %3277 = vmatmul.mubr.bf16.gmra.mxu0 %v2915
        %v3278 = vpop.f32.mrf.mxu0
        %v3279 = vadd.f32 0.0, %v3278
        %v3280 = vpop.f32.mrf.mxu0
        %v3281 = vpop.f32.mrf.mxu0
        %v3282 = vadd.f32 0.0, %v3281
        %v3283 = vpop.f32.mrf.mxu0
        %3284 = vmatprep.mubr.bf16.mxu0 0
        %3285 = vmatmul.mubr.bf16.gmra.mxu0 %v2923
        %v3286 = vpop.f32.mrf.mxu0
        %v3287 = vadd.f32 0.0, %v3286
        %v3288 = vpop.f32.mrf.mxu0
        %v3289 = vpop.f32.mrf.mxu0
        %v3290 = vadd.f32 0.0, %v3289
        %v3291 = vpop.f32.mrf.mxu0
        %3292 = vmatprep.mubr.bf16.mxu0 0
        %3293 = vmatmul.mubr.bf16.gmra.mxu0 %v2931
        %v3294 = vpop.f32.mrf.mxu0
        %v3295 = vadd.f32 0.0, %v3294
        %v3296 = vpop.f32.mrf.mxu0
        %v3297 = vpop.f32.mrf.mxu0
        %v3298 = vadd.f32 0.0, %v3297
        %v3299 = vpop.f32.mrf.mxu0
        %3300 = vmatprep.mubr.bf16.mxu0 0
        %3301 = vmatmul.mubr.bf16.gmra.mxu0 %v2939
        %v3302 = vpop.f32.mrf.mxu0
        %v3303 = vadd.f32 0.0, %v3302
        %v3304 = vpop.f32.mrf.mxu0
        %v3305 = vpop.f32.mrf.mxu0
        %v3306 = vadd.f32 0.0, %v3305
        %v3307 = vpop.f32.mrf.mxu0
        %3308 = vmatprep.mubr.bf16.mxu0 0
        %3309 = vmatmul.mubr.bf16.gmra.mxu0 %v2947
        %v3310 = vpop.f32.mrf.mxu0
        %v3311 = vadd.f32 0.0, %v3310
        %v3312 = vpop.f32.mrf.mxu0
        %v3313 = vpop.f32.mrf.mxu0
        %v3314 = vadd.f32 0.0, %v3313
        %v3315 = vpop.f32.mrf.mxu0
        %3316 = vmatprep.mubr.bf16.mxu0 0
        %3317 = vmatmul.mubr.bf16.gmra.mxu0 %v2955
        %v3318 = vpop.f32.mrf.mxu0
        %v3319 = vadd.f32 0.0, %v3318
        %v3320 = vpop.f32.mrf.mxu0
        %v3321 = vpop.f32.mrf.mxu0
        %v3322 = vadd.f32 0.0, %v3321
        %v3323 = vpop.f32.mrf.mxu0
        %3324 = vmatprep.mubr.bf16.mxu0 0
        %3325 = vmatmul.mubr.bf16.gmra.mxu0 %v2963
        %v3326 = vpop.f32.mrf.mxu0
        %v3327 = vadd.f32 0.0, %v3326
        %v3328 = vpop.f32.mrf.mxu0
        %v3329 = vpop.f32.mrf.mxu0
        %v3330 = vadd.f32 0.0, %v3329
        %v3331 = vpop.f32.mrf.mxu0
        %3332 = vmatprep.mubr.bf16.mxu0 0
        %3333 = vmatmul.mubr.bf16.gmra.mxu0 %v2971
        %v3334 = vpop.f32.mrf.mxu0
        %v3335 = vadd.f32 0.0, %v3334
        %v3336 = vpop.f32.mrf.mxu0
        %v3337 = vpop.f32.mrf.mxu0
        %v3338 = vadd.f32 0.0, %v3337
        %v3339 = vpop.f32.mrf.mxu0
        %3340 = vdwg.mxu0
        %v3341 = vadd.f32 %v2628, %v3087
        %v3342 = vadd.f32 %v2629, %v3090
        %v3343 = vadd.f32 %v2630, %v3095
        %v3344 = vadd.f32 %v2631, %v3098
        %v3345 = vadd.f32 %v2632, %v3103
        %v3346 = vadd.f32 %v2633, %v3106
        %v3347 = vadd.f32 %v2634, %v3111
        %v3348 = vadd.f32 %v2635, %v3114
        %v3349 = vadd.f32 %v2636, %v3119
        %v3350 = vadd.f32 %v2637, %v3122
        %v3351 = vadd.f32 %v2638, %v3127
        %v3352 = vadd.f32 %v2639, %v3130
        %v3353 = vadd.f32 %v2640, %v3135
        %v3354 = vadd.f32 %v2641, %v3138
        %v3355 = vadd.f32 %v2642, %v3143
        %v3356 = vadd.f32 %v2643, %v3146
        %v3357 = vadd.f32 %v2644, %v3151
        %v3358 = vadd.f32 %v2645, %v3154
        %v3359 = vadd.f32 %v2646, %v3159
        %v3360 = vadd.f32 %v2647, %v3162
        %v3361 = vadd.f32 %v2648, %v3167
        %v3362 = vadd.f32 %v2649, %v3170
        %v3363 = vadd.f32 %v2650, %v3175
        %v3364 = vadd.f32 %v2651, %v3178
        %v3365 = vadd.f32 %v2652, %v3183
        %v3366 = vadd.f32 %v2653, %v3186
        %v3367 = vadd.f32 %v2654, %v3191
        %v3368 = vadd.f32 %v2655, %v3194
        %v3369 = vadd.f32 %v2656, %v3199
        %v3370 = vadd.f32 %v2657, %v3202
        %v3371 = vadd.f32 %v2658, %v3207
        %v3372 = vadd.f32 %v2659, %v3210
        %v3373 = vadd.f32 %v2660, %v3215
        %v3374 = vadd.f32 %v2661, %v3218
        %v3375 = vadd.f32 %v2662, %v3223
        %v3376 = vadd.f32 %v2663, %v3226
        %v3377 = vadd.f32 %v2664, %v3231
        %v3378 = vadd.f32 %v2665, %v3234
        %v3379 = vadd.f32 %v2666, %v3239
        %v3380 = vadd.f32 %v2667, %v3242
        %v3381 = vadd.f32 %v2668, %v3247
        %v3382 = vadd.f32 %v2669, %v3250
        %v3383 = vadd.f32 %v2670, %v3255
        %v3384 = vadd.f32 %v2671, %v3258
        %v3385 = vadd.f32 %v2672, %v3263
        %v3386 = vadd.f32 %v2673, %v3266
        %v3387 = vadd.f32 %v2674, %v3271
        %v3388 = vadd.f32 %v2675, %v3274
        %v3389 = vadd.f32 %v2676, %v3279
        %v3390 = vadd.f32 %v2677, %v3282
        %v3391 = vadd.f32 %v2678, %v3287
        %v3392 = vadd.f32 %v2679, %v3290
        %v3393 = vadd.f32 %v2680, %v3295
        %v3394 = vadd.f32 %v2681, %v3298
        %v3395 = vadd.f32 %v2682, %v3303
        %v3396 = vadd.f32 %v2683, %v3306
        %v3397 = vadd.f32 %v2684, %v3311
        %v3398 = vadd.f32 %v2685, %v3314
        %v3399 = vadd.f32 %v2686, %v3319
        %v3400 = vadd.f32 %v2687, %v3322
        %v3401 = vadd.f32 %v2688, %v3327
        %v3402 = vadd.f32 %v2689, %v3330
        %v3403 = vadd.f32 %v2690, %v3335
        %v3404 = vadd.f32 %v2691, %v3338
        %s3405 = scalar_lea.vmem [#allocation5], 320
        %v3406 = vld [vmem:[%s3405] sm:$0xf]
        %v3407 = vld [vmem:[%s3405 + $0x4] sm:$0xf]
        %v3408 = vld [vmem:[%s3405 + $0x8] sm:$0xf]
        %v3409 = vld [vmem:[%s3405 + $0xc] sm:$0xf]
        %v3410 = vld [vmem:[%s3405 + $0x10] sm:$0xf]
        %v3411 = vld [vmem:[%s3405 + $0x14] sm:$0xf]
        %v3412 = vld [vmem:[%s3405 + $0x18] sm:$0xf]
        %v3413 = vld [vmem:[%s3405 + $0x1c] sm:$0xf]
        %v3414 = vld [vmem:[%s3405 + $0x20] sm:$0xf]
        %v3415 = vld [vmem:[%s3405 + $0x24] sm:$0xf]
        %v3416 = vld [vmem:[%s3405 + $0x28] sm:$0xf]
        %v3417 = vld [vmem:[%s3405 + $0x2c] sm:$0xf]
        %v3418 = vld [vmem:[%s3405 + $0x30] sm:$0xf]
        %v3419 = vld [vmem:[%s3405 + $0x34] sm:$0xf]
        %v3420 = vld [vmem:[%s3405 + $0x38] sm:$0xf]
        %v3421 = vld [vmem:[%s3405 + $0x3c] sm:$0xf]
        %v3422 = vrot.slane %v2227, 1
        %v3423 = vrot.slane %v2228, 1
        %v3424 = vsel %vm1514, %v3422, %v3423
        %v3425 = vrot.slane %v2229, 1
        %v3426 = vsel %vm1514, %v3423, %v3425
        %v3427 = vrot.slane %v2230, 1
        %v3428 = vsel %vm1514, %v3425, %v3427
        %v3429 = vrot.slane %v2231, 1
        %v3430 = vsel %vm1514, %v3427, %v3429
        %v3431 = vrot.slane %v2232, 1
        %v3432 = vsel %vm1514, %v3429, %v3431
        %v3433 = vrot.slane %v2233, 1
        %v3434 = vsel %vm1514, %v3431, %v3433
        %v3435 = vrot.slane %v2234, 1
        %v3436 = vsel %vm1514, %v3433, %v3435
        %v3437 = vrot.slane %v2235, 1
        %v3438 = vsel %vm1514, %v3435, %v3437
        %v3439 = vrot.slane %v2236, 1
        %v3440 = vsel %vm1514, %v3437, %v3439
        %v3441 = vrot.slane %v2237, 1
        %v3442 = vsel %vm1514, %v3439, %v3441
        %v3443 = vrot.slane %v2238, 1
        %v3444 = vsel %vm1514, %v3441, %v3443
        %v3445 = vrot.slane %v2239, 1
        %v3446 = vsel %vm1514, %v3443, %v3445
        %v3447 = vrot.slane %v2240, 1
        %v3448 = vsel %vm1514, %v3445, %v3447
        %v3449 = vrot.slane %v2241, 1
        %v3450 = vsel %vm1514, %v3447, %v3449
        %v3451 = vrot.slane %v2242, 1
        %v3452 = vsel %vm1514, %v3449, %v3451
        %v3453 = vrot.slane %v2243, 1
        %v3454 = vsel %vm1514, %v3451, %v3453
        %v3455 = vrot.slane %v2244, 1
        %v3456 = vsel %vm1514, %v3453, %v3455
        %v3457 = vrot.slane %v2245, 1
        %v3458 = vsel %vm1514, %v3455, %v3457
        %v3459 = vrot.slane %v2246, 1
        %v3460 = vsel %vm1514, %v3457, %v3459
        %v3461 = vrot.slane %v2247, 1
        %v3462 = vsel %vm1514, %v3459, %v3461
        %v3463 = vrot.slane %v2248, 1
        %v3464 = vsel %vm1514, %v3461, %v3463
        %v3465 = vrot.slane %v2249, 1
        %v3466 = vsel %vm1514, %v3463, %v3465
        %v3467 = vrot.slane %v2250, 1
        %v3468 = vsel %vm1514, %v3465, %v3467
        %v3469 = vrot.slane %v2251, 1
        %v3470 = vsel %vm1514, %v3467, %v3469
        %v3471 = vrot.slane %v2252, 1
        %v3472 = vsel %vm1514, %v3469, %v3471
        %v3473 = vrot.slane %v2253, 1
        %v3474 = vsel %vm1514, %v3471, %v3473
        %v3475 = vrot.slane %v2254, 1
        %v3476 = vsel %vm1514, %v3473, %v3475
        %v3477 = vrot.slane %v2255, 1
        %v3478 = vsel %vm1514, %v3475, %v3477
        %v3479 = vrot.slane %v2256, 1
        %v3480 = vsel %vm1514, %v3477, %v3479
        %v3481 = vrot.slane %v2257, 1
        %v3482 = vsel %vm1514, %v3479, %v3481
        %v3483 = vrot.slane %v2258, 1
        %v3484 = vsel %vm1514, %v3481, %v3483
        %v3485 = vrot.slane %v2711, 1
        %v3486 = vsel %vm1514, %v3483, %v3485
        %v3535 = vunpack.c.l.b16 %v3406
        %v3536 = vunpack.c.l.b16 %v3407
        %v3537 = vunpack.c.l.b16 %v3408
        %v3538 = vunpack.c.l.b16 %v3409
        %v3539 = vunpack.c.l.b16 %v3410
        %v3540 = vunpack.c.l.b16 %v3411
        %v3541 = vunpack.c.l.b16 %v3412
        %v3542 = vunpack.c.l.b16 %v3413
        %v3543 = vunpack.c.l.b16 %v3414
        %v3544 = vunpack.c.l.b16 %v3415
        %v3545 = vunpack.c.l.b16 %v3416
        %v3546 = vunpack.c.l.b16 %v3417
        %v3547 = vunpack.c.l.b16 %v3418
        %v3548 = vunpack.c.l.b16 %v3419
        %v3549 = vunpack.c.l.b16 %v3420
        %v3550 = vunpack.c.l.b16 %v3421
        %v3551 = vpack.c.b16 %v3536, %v3535
        %v3552 = vpack.c.b16 %v3538, %v3537
        %v3553 = vpack.c.b16 %v3540, %v3539
        %v3554 = vpack.c.b16 %v3542, %v3541
        %v3555 = vpack.c.b16 %v3544, %v3543
        %v3556 = vpack.c.b16 %v3546, %v3545
        %v3557 = vpack.c.b16 %v3548, %v3547
        %v3558 = vpack.c.b16 %v3550, %v3549
        %3567 = vmatprep.subr.bf16.mxu0 0
        %3568 = vmatpush1.bf16.msra.mxu0 %v3558
        %3569 = vmatprep.subr.bf16.mxu0 0
        %3570 = vmatpush1.bf16.msra.mxu0 %v3557
        %3571 = vmatprep.subr.bf16.mxu0 0
        %3572 = vmatpush1.bf16.msra.mxu0 %v3556
        %3573 = vmatprep.subr.bf16.mxu0 0
        %3574 = vmatpush1.bf16.msra.mxu0 %v3555
        %3575 = vmatprep.subr.bf16.mxu0 0
        %3576 = vmatpush1.bf16.msra.mxu0 %v3554
        %3577 = vmatprep.subr.bf16.mxu0 0
        %3578 = vmatpush1.bf16.msra.mxu0 %v3553
        %3579 = vmatprep.subr.bf16.mxu0 0
        %3580 = vmatpush1.bf16.msra.mxu0 %v3552
        %3581 = vmatprep.subr.bf16.mxu0 0
        %3582 = vmatpush1.bf16.msra.mxu0 %v3551
        %3583 = vmatprep.subr.bf16.mxu0 0
        %3584 = vmatpush2.bf16.msra.mxu0 0
        %3585 = vmatprep.subr.bf16.mxu0 0
        %3586 = vmatpush2.bf16.msra.mxu0 0
        %3587 = vmatprep.subr.bf16.mxu0 0
        %3588 = vmatpush2.bf16.msra.mxu0 0
        %3589 = vmatprep.subr.bf16.mxu0 0
        %3590 = vmatpush2.bf16.msra.mxu0 0
        %3591 = vmatprep.subr.bf16.mxu0 0
        %3592 = vmatpush2.bf16.msra.mxu0 0
        %3593 = vmatprep.subr.bf16.mxu0 0
        %3594 = vmatpush2.bf16.msra.mxu0 0
        %3595 = vmatprep.subr.bf16.mxu0 0
        %3596 = vmatpush2.bf16.msra.mxu0 0
        %3597 = vmatprep.subr.bf16.mxu0 0
        %3598 = vmatpush2.bf16.msra.mxu0 0
        %3599 = vmatprep.mubr.bf16.mxu0 0
        %3600 = vmatmul.mubr.bf16.gmra.mxu0 %v3424
        %v3601 = vpop.f32.mrf.mxu0
        %v3602 = vadd.f32 0.0, %v3601
        %v3603 = vpop.f32.mrf.mxu0
        %v3604 = vpop.f32.mrf.mxu0
        %v3605 = vadd.f32 0.0, %v3604
        %v3606 = vpop.f32.mrf.mxu0
        %3607 = vmatprep.mubr.bf16.mxu0 0
        %3608 = vmatmul.mubr.bf16.gmra.mxu0 %v3426
        %v3609 = vpop.f32.mrf.mxu0
        %v3610 = vadd.f32 0.0, %v3609
        %v3611 = vpop.f32.mrf.mxu0
        %v3612 = vpop.f32.mrf.mxu0
        %v3613 = vadd.f32 0.0, %v3612
        %v3614 = vpop.f32.mrf.mxu0
        %3615 = vmatprep.mubr.bf16.mxu0 0
        %3616 = vmatmul.mubr.bf16.gmra.mxu0 %v3428
        %v3617 = vpop.f32.mrf.mxu0
        %v3618 = vadd.f32 0.0, %v3617
        %v3619 = vpop.f32.mrf.mxu0
        %v3620 = vpop.f32.mrf.mxu0
        %v3621 = vadd.f32 0.0, %v3620
        %v3622 = vpop.f32.mrf.mxu0
        %3623 = vmatprep.mubr.bf16.mxu0 0
        %3624 = vmatmul.mubr.bf16.gmra.mxu0 %v3430
        %v3625 = vpop.f32.mrf.mxu0
        %v3626 = vadd.f32 0.0, %v3625
        %v3627 = vpop.f32.mrf.mxu0
        %v3628 = vpop.f32.mrf.mxu0
        %v3629 = vadd.f32 0.0, %v3628
        %v3630 = vpop.f32.mrf.mxu0
        %3631 = vmatprep.mubr.bf16.mxu0 0
        %3632 = vmatmul.mubr.bf16.gmra.mxu0 %v3432
        %v3633 = vpop.f32.mrf.mxu0
        %v3634 = vadd.f32 0.0, %v3633
        %v3635 = vpop.f32.mrf.mxu0
        %v3636 = vpop.f32.mrf.mxu0
        %v3637 = vadd.f32 0.0, %v3636
        %v3638 = vpop.f32.mrf.mxu0
        %3639 = vmatprep.mubr.bf16.mxu0 0
        %3640 = vmatmul.mubr.bf16.gmra.mxu0 %v3434
        %v3641 = vpop.f32.mrf.mxu0
        %v3642 = vadd.f32 0.0, %v3641
        %v3643 = vpop.f32.mrf.mxu0
        %v3644 = vpop.f32.mrf.mxu0
        %v3645 = vadd.f32 0.0, %v3644
        %v3646 = vpop.f32.mrf.mxu0
        %3647 = vmatprep.mubr.bf16.mxu0 0
        %3648 = vmatmul.mubr.bf16.gmra.mxu0 %v3436
        %v3649 = vpop.f32.mrf.mxu0
        %v3650 = vadd.f32 0.0, %v3649
        %v3651 = vpop.f32.mrf.mxu0
        %v3652 = vpop.f32.mrf.mxu0
        %v3653 = vadd.f32 0.0, %v3652
        %v3654 = vpop.f32.mrf.mxu0
        %3655 = vmatprep.mubr.bf16.mxu0 0
        %3656 = vmatmul.mubr.bf16.gmra.mxu0 %v3438
        %v3657 = vpop.f32.mrf.mxu0
        %v3658 = vadd.f32 0.0, %v3657
        %v3659 = vpop.f32.mrf.mxu0
        %v3660 = vpop.f32.mrf.mxu0
        %v3661 = vadd.f32 0.0, %v3660
        %v3662 = vpop.f32.mrf.mxu0
        %3663 = vmatprep.mubr.bf16.mxu0 0
        %3664 = vmatmul.mubr.bf16.gmra.mxu0 %v3440
        %v3665 = vpop.f32.mrf.mxu0
        %v3666 = vadd.f32 0.0, %v3665
        %v3667 = vpop.f32.mrf.mxu0
        %v3668 = vpop.f32.mrf.mxu0
        %v3669 = vadd.f32 0.0, %v3668
        %v3670 = vpop.f32.mrf.mxu0
        %3671 = vmatprep.mubr.bf16.mxu0 0
        %3672 = vmatmul.mubr.bf16.gmra.mxu0 %v3442
        %v3673 = vpop.f32.mrf.mxu0
        %v3674 = vadd.f32 0.0, %v3673
        %v3675 = vpop.f32.mrf.mxu0
        %v3676 = vpop.f32.mrf.mxu0
        %v3677 = vadd.f32 0.0, %v3676
        %v3678 = vpop.f32.mrf.mxu0
        %3679 = vmatprep.mubr.bf16.mxu0 0
        %3680 = vmatmul.mubr.bf16.gmra.mxu0 %v3444
        %v3681 = vpop.f32.mrf.mxu0
        %v3682 = vadd.f32 0.0, %v3681
        %v3683 = vpop.f32.mrf.mxu0
        %v3684 = vpop.f32.mrf.mxu0
        %v3685 = vadd.f32 0.0, %v3684
        %v3686 = vpop.f32.mrf.mxu0
        %3687 = vmatprep.mubr.bf16.mxu0 0
        %3688 = vmatmul.mubr.bf16.gmra.mxu0 %v3446
        %v3689 = vpop.f32.mrf.mxu0
        %v3690 = vadd.f32 0.0, %v3689
        %v3691 = vpop.f32.mrf.mxu0
        %v3692 = vpop.f32.mrf.mxu0
        %v3693 = vadd.f32 0.0, %v3692
        %v3694 = vpop.f32.mrf.mxu0
        %3695 = vmatprep.mubr.bf16.mxu0 0
        %3696 = vmatmul.mubr.bf16.gmra.mxu0 %v3448
        %v3697 = vpop.f32.mrf.mxu0
        %v3698 = vadd.f32 0.0, %v3697
        %v3699 = vpop.f32.mrf.mxu0
        %v3700 = vpop.f32.mrf.mxu0
        %v3701 = vadd.f32 0.0, %v3700
        %v3702 = vpop.f32.mrf.mxu0
        %3703 = vmatprep.mubr.bf16.mxu0 0
        %3704 = vmatmul.mubr.bf16.gmra.mxu0 %v3450
        %v3705 = vpop.f32.mrf.mxu0
        %v3706 = vadd.f32 0.0, %v3705
        %v3707 = vpop.f32.mrf.mxu0
        %v3708 = vpop.f32.mrf.mxu0
        %v3709 = vadd.f32 0.0, %v3708
        %v3710 = vpop.f32.mrf.mxu0
        %3711 = vmatprep.mubr.bf16.mxu0 0
        %3712 = vmatmul.mubr.bf16.gmra.mxu0 %v3452
        %v3713 = vpop.f32.mrf.mxu0
        %v3714 = vadd.f32 0.0, %v3713
        %v3715 = vpop.f32.mrf.mxu0
        %v3716 = vpop.f32.mrf.mxu0
        %v3717 = vadd.f32 0.0, %v3716
        %v3718 = vpop.f32.mrf.mxu0
        %3719 = vmatprep.mubr.bf16.mxu0 0
        %3720 = vmatmul.mubr.bf16.gmra.mxu0 %v3454
        %v3721 = vpop.f32.mrf.mxu0
        %v3722 = vadd.f32 0.0, %v3721
        %v3723 = vpop.f32.mrf.mxu0
        %v3724 = vpop.f32.mrf.mxu0
        %v3725 = vadd.f32 0.0, %v3724
        %v3726 = vpop.f32.mrf.mxu0
        %3727 = vmatprep.mubr.bf16.mxu0 0
        %3728 = vmatmul.mubr.bf16.gmra.mxu0 %v3456
        %v3729 = vpop.f32.mrf.mxu0
        %v3730 = vadd.f32 0.0, %v3729
        %v3731 = vpop.f32.mrf.mxu0
        %v3732 = vpop.f32.mrf.mxu0
        %v3733 = vadd.f32 0.0, %v3732
        %v3734 = vpop.f32.mrf.mxu0
        %3735 = vmatprep.mubr.bf16.mxu0 0
        %3736 = vmatmul.mubr.bf16.gmra.mxu0 %v3458
        %v3737 = vpop.f32.mrf.mxu0
        %v3738 = vadd.f32 0.0, %v3737
        %v3739 = vpop.f32.mrf.mxu0
        %v3740 = vpop.f32.mrf.mxu0
        %v3741 = vadd.f32 0.0, %v3740
        %v3742 = vpop.f32.mrf.mxu0
        %3743 = vmatprep.mubr.bf16.mxu0 0
        %3744 = vmatmul.mubr.bf16.gmra.mxu0 %v3460
        %v3745 = vpop.f32.mrf.mxu0
        %v3746 = vadd.f32 0.0, %v3745
        %v3747 = vpop.f32.mrf.mxu0
        %v3748 = vpop.f32.mrf.mxu0
        %v3749 = vadd.f32 0.0, %v3748
        %v3750 = vpop.f32.mrf.mxu0
        %3751 = vmatprep.mubr.bf16.mxu0 0
        %3752 = vmatmul.mubr.bf16.gmra.mxu0 %v3462
        %v3753 = vpop.f32.mrf.mxu0
        %v3754 = vadd.f32 0.0, %v3753
        %v3755 = vpop.f32.mrf.mxu0
        %v3756 = vpop.f32.mrf.mxu0
        %v3757 = vadd.f32 0.0, %v3756
        %v3758 = vpop.f32.mrf.mxu0
        %3759 = vmatprep.mubr.bf16.mxu0 0
        %3760 = vmatmul.mubr.bf16.gmra.mxu0 %v3464
        %v3761 = vpop.f32.mrf.mxu0
        %v3762 = vadd.f32 0.0, %v3761
        %v3763 = vpop.f32.mrf.mxu0
        %v3764 = vpop.f32.mrf.mxu0
        %v3765 = vadd.f32 0.0, %v3764
        %v3766 = vpop.f32.mrf.mxu0
        %3767 = vmatprep.mubr.bf16.mxu0 0
        %3768 = vmatmul.mubr.bf16.gmra.mxu0 %v3466
        %v3769 = vpop.f32.mrf.mxu0
        %v3770 = vadd.f32 0.0, %v3769
        %v3771 = vpop.f32.mrf.mxu0
        %v3772 = vpop.f32.mrf.mxu0
        %v3773 = vadd.f32 0.0, %v3772
        %v3774 = vpop.f32.mrf.mxu0
        %3775 = vmatprep.mubr.bf16.mxu0 0
        %3776 = vmatmul.mubr.bf16.gmra.mxu0 %v3468
        %v3777 = vpop.f32.mrf.mxu0
        %v3778 = vadd.f32 0.0, %v3777
        %v3779 = vpop.f32.mrf.mxu0
        %v3780 = vpop.f32.mrf.mxu0
        %v3781 = vadd.f32 0.0, %v3780
        %v3782 = vpop.f32.mrf.mxu0
        %3783 = vmatprep.mubr.bf16.mxu0 0
        %3784 = vmatmul.mubr.bf16.gmra.mxu0 %v3470
        %v3785 = vpop.f32.mrf.mxu0
        %v3786 = vadd.f32 0.0, %v3785
        %v3787 = vpop.f32.mrf.mxu0
        %v3788 = vpop.f32.mrf.mxu0
        %v3789 = vadd.f32 0.0, %v3788
        %v3790 = vpop.f32.mrf.mxu0
        %3791 = vmatprep.mubr.bf16.mxu0 0
        %3792 = vmatmul.mubr.bf16.gmra.mxu0 %v3472
        %v3793 = vpop.f32.mrf.mxu0
        %v3794 = vadd.f32 0.0, %v3793
        %v3795 = vpop.f32.mrf.mxu0
        %v3796 = vpop.f32.mrf.mxu0
        %v3797 = vadd.f32 0.0, %v3796
        %v3798 = vpop.f32.mrf.mxu0
        %3799 = vmatprep.mubr.bf16.mxu0 0
        %3800 = vmatmul.mubr.bf16.gmra.mxu0 %v3474
        %v3801 = vpop.f32.mrf.mxu0
        %v3802 = vadd.f32 0.0, %v3801
        %v3803 = vpop.f32.mrf.mxu0
        %v3804 = vpop.f32.mrf.mxu0
        %v3805 = vadd.f32 0.0, %v3804
        %v3806 = vpop.f32.mrf.mxu0
        %3807 = vmatprep.mubr.bf16.mxu0 0
        %3808 = vmatmul.mubr.bf16.gmra.mxu0 %v3476
        %v3809 = vpop.f32.mrf.mxu0
        %v3810 = vadd.f32 0.0, %v3809
        %v3811 = vpop.f32.mrf.mxu0
        %v3812 = vpop.f32.mrf.mxu0
        %v3813 = vadd.f32 0.0, %v3812
        %v3814 = vpop.f32.mrf.mxu0
        %3815 = vmatprep.mubr.bf16.mxu0 0
        %3816 = vmatmul.mubr.bf16.gmra.mxu0 %v3478
        %v3817 = vpop.f32.mrf.mxu0
        %v3818 = vadd.f32 0.0, %v3817
        %v3819 = vpop.f32.mrf.mxu0
        %v3820 = vpop.f32.mrf.mxu0
        %v3821 = vadd.f32 0.0, %v3820
        %v3822 = vpop.f32.mrf.mxu0
        %3823 = vmatprep.mubr.bf16.mxu0 0
        %3824 = vmatmul.mubr.bf16.gmra.mxu0 %v3480
        %v3825 = vpop.f32.mrf.mxu0
        %v3826 = vadd.f32 0.0, %v3825
        %v3827 = vpop.f32.mrf.mxu0
        %v3828 = vpop.f32.mrf.mxu0
        %v3829 = vadd.f32 0.0, %v3828
        %v3830 = vpop.f32.mrf.mxu0
        %3831 = vmatprep.mubr.bf16.mxu0 0
        %3832 = vmatmul.mubr.bf16.gmra.mxu0 %v3482
        %v3833 = vpop.f32.mrf.mxu0
        %v3834 = vadd.f32 0.0, %v3833
        %v3835 = vpop.f32.mrf.mxu0
        %v3836 = vpop.f32.mrf.mxu0
        %v3837 = vadd.f32 0.0, %v3836
        %v3838 = vpop.f32.mrf.mxu0
        %3839 = vmatprep.mubr.bf16.mxu0 0
        %3840 = vmatmul.mubr.bf16.gmra.mxu0 %v3484
        %v3841 = vpop.f32.mrf.mxu0
        %v3842 = vadd.f32 0.0, %v3841
        %v3843 = vpop.f32.mrf.mxu0
        %v3844 = vpop.f32.mrf.mxu0
        %v3845 = vadd.f32 0.0, %v3844
        %v3846 = vpop.f32.mrf.mxu0
        %3847 = vmatprep.mubr.bf16.mxu0 0
        %3848 = vmatmul.mubr.bf16.gmra.mxu0 %v3486
        %v3849 = vpop.f32.mrf.mxu0
        %v3850 = vadd.f32 0.0, %v3849
        %v3851 = vpop.f32.mrf.mxu0
        %v3852 = vpop.f32.mrf.mxu0
        %v3853 = vadd.f32 0.0, %v3852
        %v3854 = vpop.f32.mrf.mxu0
        %3855 = vdwg.mxu0
        %v3856 = vadd.f32 %v3341, %v3602
        %v3857 = vadd.f32 %v3342, %v3605
        %v3858 = vadd.f32 %v3343, %v3610
        %v3859 = vadd.f32 %v3344, %v3613
        %v3860 = vadd.f32 %v3345, %v3618
        %v3861 = vadd.f32 %v3346, %v3621
        %v3862 = vadd.f32 %v3347, %v3626
        %v3863 = vadd.f32 %v3348, %v3629
        %v3864 = vadd.f32 %v3349, %v3634
        %v3865 = vadd.f32 %v3350, %v3637
        %v3866 = vadd.f32 %v3351, %v3642
        %v3867 = vadd.f32 %v3352, %v3645
        %v3868 = vadd.f32 %v3353, %v3650
        %v3869 = vadd.f32 %v3354, %v3653
        %v3870 = vadd.f32 %v3355, %v3658
        %v3871 = vadd.f32 %v3356, %v3661
        %v3872 = vadd.f32 %v3357, %v3666
        %v3873 = vadd.f32 %v3358, %v3669
        %v3874 = vadd.f32 %v3359, %v3674
        %v3875 = vadd.f32 %v3360, %v3677
        %v3876 = vadd.f32 %v3361, %v3682
        %v3877 = vadd.f32 %v3362, %v3685
        %v3878 = vadd.f32 %v3363, %v3690
        %v3879 = vadd.f32 %v3364, %v3693
        %v3880 = vadd.f32 %v3365, %v3698
        %v3881 = vadd.f32 %v3366, %v3701
        %v3882 = vadd.f32 %v3367, %v3706
        %v3883 = vadd.f32 %v3368, %v3709
        %v3884 = vadd.f32 %v3369, %v3714
        %v3885 = vadd.f32 %v3370, %v3717
        %v3886 = vadd.f32 %v3371, %v3722
        %v3887 = vadd.f32 %v3372, %v3725
        %v3888 = vadd.f32 %v3373, %v3730
        %v3889 = vadd.f32 %v3374, %v3733
        %v3890 = vadd.f32 %v3375, %v3738
        %v3891 = vadd.f32 %v3376, %v3741
        %v3892 = vadd.f32 %v3377, %v3746
        %v3893 = vadd.f32 %v3378, %v3749
        %v3894 = vadd.f32 %v3379, %v3754
        %v3895 = vadd.f32 %v3380, %v3757
        %v3896 = vadd.f32 %v3381, %v3762
        %v3897 = vadd.f32 %v3382, %v3765
        %v3898 = vadd.f32 %v3383, %v3770
        %v3899 = vadd.f32 %v3384, %v3773
        %v3900 = vadd.f32 %v3385, %v3778
        %v3901 = vadd.f32 %v3386, %v3781
        %v3902 = vadd.f32 %v3387, %v3786
        %v3903 = vadd.f32 %v3388, %v3789
        %v3904 = vadd.f32 %v3389, %v3794
        %v3905 = vadd.f32 %v3390, %v3797
        %v3906 = vadd.f32 %v3391, %v3802
        %v3907 = vadd.f32 %v3392, %v3805
        %v3908 = vadd.f32 %v3393, %v3810
        %v3909 = vadd.f32 %v3394, %v3813
        %v3910 = vadd.f32 %v3395, %v3818
        %v3911 = vadd.f32 %v3396, %v3821
        %v3912 = vadd.f32 %v3397, %v3826
        %v3913 = vadd.f32 %v3398, %v3829
        %v3914 = vadd.f32 %v3399, %v3834
        %v3915 = vadd.f32 %v3400, %v3837
        %v3916 = vadd.f32 %v3401, %v3842
        %v3917 = vadd.f32 %v3402, %v3845
        %v3918 = vadd.f32 %v3403, %v3850
        %v3919 = vadd.f32 %v3404, %v3853
        %s3920 = sadd.s32 %s233, 2
        %s3921 = smul.u32 %s3920, 4
        %s3922 = smul.addr %s3921, 4
        %s3923 = scalar_lea.vmem %s199, %s3922 [#allocation2]
        %v3924 = vld [vmem:[%s3923] sm:$0xf]
        %v3925 = vld [vmem:[%s3923 + $0x4] sm:$0xf]
        %v3926 = vld [vmem:[%s3923 + $0x8] sm:$0xf]
        %v3927 = vld [vmem:[%s3923 + $0xc] sm:$0xf]
        %v3928 = vld [vmem:[%s3923 + $0x10] sm:$0xf]
        %v3929 = vld [vmem:[%s3923 + $0x14] sm:$0xf]
        %v3930 = vld [vmem:[%s3923 + $0x18] sm:$0xf]
        %v3931 = vld [vmem:[%s3923 + $0x1c] sm:$0xf]
        %v3932 = vld [vmem:[%s3923 + $0x20] sm:$0xf]
        %v3933 = vld [vmem:[%s3923 + $0x24] sm:$0xf]
        %v3934 = vld [vmem:[%s3923 + $0x28] sm:$0xf]
        %v3935 = vld [vmem:[%s3923 + $0x2c] sm:$0xf]
        %v3936 = vld [vmem:[%s3923 + $0x30] sm:$0xf]
        %v3937 = vld [vmem:[%s3923 + $0x34] sm:$0xf]
        %v3938 = vld [vmem:[%s3923 + $0x38] sm:$0xf]
        %v3939 = vld [vmem:[%s3923 + $0x3c] sm:$0xf]
        %v3940 = vld [vmem:[%s3923 + $0x40] sm:$0xf]
        %v3941 = vld [vmem:[%s3923 + $0x44] sm:$0xf]
        %v3942 = vld [vmem:[%s3923 + $0x48] sm:$0xf]
        %v3943 = vld [vmem:[%s3923 + $0x4c] sm:$0xf]
        %v3944 = vld [vmem:[%s3923 + $0x50] sm:$0xf]
        %v3945 = vld [vmem:[%s3923 + $0x54] sm:$0xf]
        %v3946 = vld [vmem:[%s3923 + $0x58] sm:$0xf]
        %v3947 = vld [vmem:[%s3923 + $0x5c] sm:$0xf]
        %v3948 = vld [vmem:[%s3923 + $0x60] sm:$0xf]
        %v3949 = vld [vmem:[%s3923 + $0x64] sm:$0xf]
        %v3950 = vld [vmem:[%s3923 + $0x68] sm:$0xf]
        %v3951 = vld [vmem:[%s3923 + $0x6c] sm:$0xf]
        %v3952 = vld [vmem:[%s3923 + $0x70] sm:$0xf]
        %v3953 = vld [vmem:[%s3923 + $0x74] sm:$0xf]
        %v3954 = vld [vmem:[%s3923 + $0x78] sm:$0xf]
        %v3955 = vld [vmem:[%s3923 + $0x7c] sm:$0xf]
        %v3956 = vld [vmem:[%s3923 + $0x80] sm:$0xf]
        %v3957 = vld [vmem:[%s3923 + $0x84] sm:$0xf]
        %v3958 = vld [vmem:[%s3923 + $0x88] sm:$0xf]
        %v3959 = vld [vmem:[%s3923 + $0x8c] sm:$0xf]
        %v3960 = vld [vmem:[%s3923 + $0x90] sm:$0xf]
        %v3961 = vld [vmem:[%s3923 + $0x94] sm:$0xf]
        %v3962 = vld [vmem:[%s3923 + $0x98] sm:$0xf]
        %v3963 = vld [vmem:[%s3923 + $0x9c] sm:$0xf]
        %v3964 = vld [vmem:[%s3923 + $0xa0] sm:$0xf]
        %v3965 = vld [vmem:[%s3923 + $0xa4] sm:$0xf]
        %v3966 = vld [vmem:[%s3923 + $0xa8] sm:$0xf]
        %v3967 = vld [vmem:[%s3923 + $0xac] sm:$0xf]
        %v3968 = vld [vmem:[%s3923 + $0xb0] sm:$0xf]
        %v3969 = vld [vmem:[%s3923 + $0xb4] sm:$0xf]
        %v3970 = vld [vmem:[%s3923 + $0xb8] sm:$0xf]
        %v3971 = vld [vmem:[%s3923 + $0xbc] sm:$0xf]
        %v3972 = vld [vmem:[%s3923 + $0xc0] sm:$0xf]
        %v3973 = vld [vmem:[%s3923 + $0xc4] sm:$0xf]
        %v3974 = vld [vmem:[%s3923 + $0xc8] sm:$0xf]
        %v3975 = vld [vmem:[%s3923 + $0xcc] sm:$0xf]
        %v3976 = vld [vmem:[%s3923 + $0xd0] sm:$0xf]
        %v3977 = vld [vmem:[%s3923 + $0xd4] sm:$0xf]
        %v3978 = vld [vmem:[%s3923 + $0xd8] sm:$0xf]
        %v3979 = vld [vmem:[%s3923 + $0xdc] sm:$0xf]
        %v3980 = vld [vmem:[%s3923 + $0xe0] sm:$0xf]
        %v3981 = vld [vmem:[%s3923 + $0xe4] sm:$0xf]
        %v3982 = vld [vmem:[%s3923 + $0xe8] sm:$0xf]
        %v3983 = vld [vmem:[%s3923 + $0xec] sm:$0xf]
        %v3984 = vld [vmem:[%s3923 + $0xf0] sm:$0xf]
        %v3985 = vld [vmem:[%s3923 + $0xf4] sm:$0xf]
        %v3986 = vld [vmem:[%s3923 + $0xf8] sm:$0xf]
        %v3987 = vld [vmem:[%s3923 + $0xfc] sm:$0xf]
        %v3988 = vld [vmem:[%s3923 + $0x100] sm:$0xf]
        %s3989 = scalar_lea.vmem [#allocation5], 384
        %v3990 = vld [vmem:[%s3989] sm:$0xf]
        %v3991 = vld [vmem:[%s3989 + $0x4] sm:$0xf]
        %v3992 = vld [vmem:[%s3989 + $0x8] sm:$0xf]
        %v3993 = vld [vmem:[%s3989 + $0xc] sm:$0xf]
        %v3994 = vld [vmem:[%s3989 + $0x10] sm:$0xf]
        %v3995 = vld [vmem:[%s3989 + $0x14] sm:$0xf]
        %v3996 = vld [vmem:[%s3989 + $0x18] sm:$0xf]
        %v3997 = vld [vmem:[%s3989 + $0x1c] sm:$0xf]
        %v3998 = vld [vmem:[%s3989 + $0x20] sm:$0xf]
        %v3999 = vld [vmem:[%s3989 + $0x24] sm:$0xf]
        %v4000 = vld [vmem:[%s3989 + $0x28] sm:$0xf]
        %v4001 = vld [vmem:[%s3989 + $0x2c] sm:$0xf]
        %v4002 = vld [vmem:[%s3989 + $0x30] sm:$0xf]
        %v4003 = vld [vmem:[%s3989 + $0x34] sm:$0xf]
        %v4004 = vld [vmem:[%s3989 + $0x38] sm:$0xf]
        %v4005 = vld [vmem:[%s3989 + $0x3c] sm:$0xf]
        %v4070 = vunpack.c.l.b16 %v3924
        %v4071 = vunpack.c.l.b16 %v3925
        %v4072 = vunpack.c.l.b16 %v3926
        %v4073 = vunpack.c.l.b16 %v3927
        %v4074 = vunpack.c.l.b16 %v3928
        %v4075 = vunpack.c.l.b16 %v3929
        %v4076 = vunpack.c.l.b16 %v3930
        %v4077 = vunpack.c.l.b16 %v3931
        %v4078 = vunpack.c.l.b16 %v3932
        %v4079 = vunpack.c.l.b16 %v3933
        %v4080 = vunpack.c.l.b16 %v3934
        %v4081 = vunpack.c.l.b16 %v3935
        %v4082 = vunpack.c.l.b16 %v3936
        %v4083 = vunpack.c.l.b16 %v3937
        %v4084 = vunpack.c.l.b16 %v3938
        %v4085 = vunpack.c.l.b16 %v3939
        %v4086 = vunpack.c.l.b16 %v3940
        %v4087 = vunpack.c.l.b16 %v3941
        %v4088 = vunpack.c.l.b16 %v3942
        %v4089 = vunpack.c.l.b16 %v3943
        %v4090 = vunpack.c.l.b16 %v3944
        %v4091 = vunpack.c.l.b16 %v3945
        %v4092 = vunpack.c.l.b16 %v3946
        %v4093 = vunpack.c.l.b16 %v3947
        %v4094 = vunpack.c.l.b16 %v3948
        %v4095 = vunpack.c.l.b16 %v3949
        %v4096 = vunpack.c.l.b16 %v3950
        %v4097 = vunpack.c.l.b16 %v3951
        %v4098 = vunpack.c.l.b16 %v3952
        %v4099 = vunpack.c.l.b16 %v3953
        %v4100 = vunpack.c.l.b16 %v3954
        %v4101 = vunpack.c.l.b16 %v3955
        %v4102 = vunpack.c.l.b16 %v3956
        %v4103 = vunpack.c.l.b16 %v3957
        %v4104 = vunpack.c.l.b16 %v3958
        %v4105 = vunpack.c.l.b16 %v3959
        %v4106 = vunpack.c.l.b16 %v3960
        %v4107 = vunpack.c.l.b16 %v3961
        %v4108 = vunpack.c.l.b16 %v3962
        %v4109 = vunpack.c.l.b16 %v3963
        %v4110 = vunpack.c.l.b16 %v3964
        %v4111 = vunpack.c.l.b16 %v3965
        %v4112 = vunpack.c.l.b16 %v3966
        %v4113 = vunpack.c.l.b16 %v3967
        %v4114 = vunpack.c.l.b16 %v3968
        %v4115 = vunpack.c.l.b16 %v3969
        %v4116 = vunpack.c.l.b16 %v3970
        %v4117 = vunpack.c.l.b16 %v3971
        %v4118 = vunpack.c.l.b16 %v3972
        %v4119 = vunpack.c.l.b16 %v3973
        %v4120 = vunpack.c.l.b16 %v3974
        %v4121 = vunpack.c.l.b16 %v3975
        %v4122 = vunpack.c.l.b16 %v3976
        %v4123 = vunpack.c.l.b16 %v3977
        %v4124 = vunpack.c.l.b16 %v3978
        %v4125 = vunpack.c.l.b16 %v3979
        %v4126 = vunpack.c.l.b16 %v3980
        %v4127 = vunpack.c.l.b16 %v3981
        %v4128 = vunpack.c.l.b16 %v3982
        %v4129 = vunpack.c.l.b16 %v3983
        %v4130 = vunpack.c.l.b16 %v3984
        %v4131 = vunpack.c.l.b16 %v3985
        %v4132 = vunpack.c.l.b16 %v3986
        %v4133 = vunpack.c.l.b16 %v3987
        %v4134 = vpack.c.b16 %v4071, %v4070
        %v4135 = vpack.c.b16 %v4073, %v4072
        %v4136 = vpack.c.b16 %v4075, %v4074
        %v4137 = vpack.c.b16 %v4077, %v4076
        %v4138 = vpack.c.b16 %v4079, %v4078
        %v4139 = vpack.c.b16 %v4081, %v4080
        %v4140 = vpack.c.b16 %v4083, %v4082
        %v4141 = vpack.c.b16 %v4085, %v4084
        %v4142 = vpack.c.b16 %v4087, %v4086
        %v4143 = vpack.c.b16 %v4089, %v4088
        %v4144 = vpack.c.b16 %v4091, %v4090
        %v4145 = vpack.c.b16 %v4093, %v4092
        %v4146 = vpack.c.b16 %v4095, %v4094
        %v4147 = vpack.c.b16 %v4097, %v4096
        %v4148 = vpack.c.b16 %v4099, %v4098
        %v4149 = vpack.c.b16 %v4101, %v4100
        %v4150 = vpack.c.b16 %v4103, %v4102
        %v4151 = vpack.c.b16 %v4105, %v4104
        %v4152 = vpack.c.b16 %v4107, %v4106
        %v4153 = vpack.c.b16 %v4109, %v4108
        %v4154 = vpack.c.b16 %v4111, %v4110
        %v4155 = vpack.c.b16 %v4113, %v4112
        %v4156 = vpack.c.b16 %v4115, %v4114
        %v4157 = vpack.c.b16 %v4117, %v4116
        %v4158 = vpack.c.b16 %v4119, %v4118
        %v4159 = vpack.c.b16 %v4121, %v4120
        %v4160 = vpack.c.b16 %v4123, %v4122
        %v4161 = vpack.c.b16 %v4125, %v4124
        %v4162 = vpack.c.b16 %v4127, %v4126
        %v4163 = vpack.c.b16 %v4129, %v4128
        %v4164 = vpack.c.b16 %v4131, %v4130
        %v4165 = vpack.c.b16 %v4133, %v4132
        %v4214 = vunpack.c.l.b16 %v3990
        %v4215 = vunpack.c.l.b16 %v3991
        %v4216 = vunpack.c.l.b16 %v3992
        %v4217 = vunpack.c.l.b16 %v3993
        %v4218 = vunpack.c.l.b16 %v3994
        %v4219 = vunpack.c.l.b16 %v3995
        %v4220 = vunpack.c.l.b16 %v3996
        %v4221 = vunpack.c.l.b16 %v3997
        %v4222 = vunpack.c.l.b16 %v3998
        %v4223 = vunpack.c.l.b16 %v3999
        %v4224 = vunpack.c.l.b16 %v4000
        %v4225 = vunpack.c.l.b16 %v4001
        %v4226 = vunpack.c.l.b16 %v4002
        %v4227 = vunpack.c.l.b16 %v4003
        %v4228 = vunpack.c.l.b16 %v4004
        %v4229 = vunpack.c.l.b16 %v4005
        %v4230 = vpack.c.b16 %v4215, %v4214
        %v4231 = vpack.c.b16 %v4217, %v4216
        %v4232 = vpack.c.b16 %v4219, %v4218
        %v4233 = vpack.c.b16 %v4221, %v4220
        %v4234 = vpack.c.b16 %v4223, %v4222
        %v4235 = vpack.c.b16 %v4225, %v4224
        %v4236 = vpack.c.b16 %v4227, %v4226
        %v4237 = vpack.c.b16 %v4229, %v4228
        %4246 = vmatprep.subr.bf16.mxu0 0
        %4247 = vmatpush1.bf16.msra.mxu0 %v4237
        %4248 = vmatprep.subr.bf16.mxu0 0
        %4249 = vmatpush1.bf16.msra.mxu0 %v4236
        %4250 = vmatprep.subr.bf16.mxu0 0
        %4251 = vmatpush1.bf16.msra.mxu0 %v4235
        %4252 = vmatprep.subr.bf16.mxu0 0
        %4253 = vmatpush1.bf16.msra.mxu0 %v4234
        %4254 = vmatprep.subr.bf16.mxu0 0
        %4255 = vmatpush1.bf16.msra.mxu0 %v4233
        %4256 = vmatprep.subr.bf16.mxu0 0
        %4257 = vmatpush1.bf16.msra.mxu0 %v4232
        %4258 = vmatprep.subr.bf16.mxu0 0
        %4259 = vmatpush1.bf16.msra.mxu0 %v4231
        %4260 = vmatprep.subr.bf16.mxu0 0
        %4261 = vmatpush1.bf16.msra.mxu0 %v4230
        %4262 = vmatprep.subr.bf16.mxu0 0
        %4263 = vmatpush2.bf16.msra.mxu0 0
        %4264 = vmatprep.subr.bf16.mxu0 0
        %4265 = vmatpush2.bf16.msra.mxu0 0
        %4266 = vmatprep.subr.bf16.mxu0 0
        %4267 = vmatpush2.bf16.msra.mxu0 0
        %4268 = vmatprep.subr.bf16.mxu0 0
        %4269 = vmatpush2.bf16.msra.mxu0 0
        %4270 = vmatprep.subr.bf16.mxu0 0
        %4271 = vmatpush2.bf16.msra.mxu0 0
        %4272 = vmatprep.subr.bf16.mxu0 0
        %4273 = vmatpush2.bf16.msra.mxu0 0
        %4274 = vmatprep.subr.bf16.mxu0 0
        %4275 = vmatpush2.bf16.msra.mxu0 0
        %4276 = vmatprep.subr.bf16.mxu0 0
        %4277 = vmatpush2.bf16.msra.mxu0 0
        %4278 = vmatprep.mubr.bf16.mxu0 0
        %4279 = vmatmul.mubr.bf16.gmra.mxu0 %v4134
        %v4280 = vpop.f32.mrf.mxu0
        %v4281 = vadd.f32 0.0, %v4280
        %v4282 = vpop.f32.mrf.mxu0
        %v4283 = vpop.f32.mrf.mxu0
        %v4284 = vadd.f32 0.0, %v4283
        %v4285 = vpop.f32.mrf.mxu0
        %4286 = vmatprep.mubr.bf16.mxu0 0
        %4287 = vmatmul.mubr.bf16.gmra.mxu0 %v4135
        %v4288 = vpop.f32.mrf.mxu0
        %v4289 = vadd.f32 0.0, %v4288
        %v4290 = vpop.f32.mrf.mxu0
        %v4291 = vpop.f32.mrf.mxu0
        %v4292 = vadd.f32 0.0, %v4291
        %v4293 = vpop.f32.mrf.mxu0
        %4294 = vmatprep.mubr.bf16.mxu0 0
        %4295 = vmatmul.mubr.bf16.gmra.mxu0 %v4136
        %v4296 = vpop.f32.mrf.mxu0
        %v4297 = vadd.f32 0.0, %v4296
        %v4298 = vpop.f32.mrf.mxu0
        %v4299 = vpop.f32.mrf.mxu0
        %v4300 = vadd.f32 0.0, %v4299
        %v4301 = vpop.f32.mrf.mxu0
        %4302 = vmatprep.mubr.bf16.mxu0 0
        %4303 = vmatmul.mubr.bf16.gmra.mxu0 %v4137
        %v4304 = vpop.f32.mrf.mxu0
        %v4305 = vadd.f32 0.0, %v4304
        %v4306 = vpop.f32.mrf.mxu0
        %v4307 = vpop.f32.mrf.mxu0
        %v4308 = vadd.f32 0.0, %v4307
        %v4309 = vpop.f32.mrf.mxu0
        %4310 = vmatprep.mubr.bf16.mxu0 0
        %4311 = vmatmul.mubr.bf16.gmra.mxu0 %v4138
        %v4312 = vpop.f32.mrf.mxu0
        %v4313 = vadd.f32 0.0, %v4312
        %v4314 = vpop.f32.mrf.mxu0
        %v4315 = vpop.f32.mrf.mxu0
        %v4316 = vadd.f32 0.0, %v4315
        %v4317 = vpop.f32.mrf.mxu0
        %4318 = vmatprep.mubr.bf16.mxu0 0
        %4319 = vmatmul.mubr.bf16.gmra.mxu0 %v4139
        %v4320 = vpop.f32.mrf.mxu0
        %v4321 = vadd.f32 0.0, %v4320
        %v4322 = vpop.f32.mrf.mxu0
        %v4323 = vpop.f32.mrf.mxu0
        %v4324 = vadd.f32 0.0, %v4323
        %v4325 = vpop.f32.mrf.mxu0
        %4326 = vmatprep.mubr.bf16.mxu0 0
        %4327 = vmatmul.mubr.bf16.gmra.mxu0 %v4140
        %v4328 = vpop.f32.mrf.mxu0
        %v4329 = vadd.f32 0.0, %v4328
        %v4330 = vpop.f32.mrf.mxu0
        %v4331 = vpop.f32.mrf.mxu0
        %v4332 = vadd.f32 0.0, %v4331
        %v4333 = vpop.f32.mrf.mxu0
        %4334 = vmatprep.mubr.bf16.mxu0 0
        %4335 = vmatmul.mubr.bf16.gmra.mxu0 %v4141
        %v4336 = vpop.f32.mrf.mxu0
        %v4337 = vadd.f32 0.0, %v4336
        %v4338 = vpop.f32.mrf.mxu0
        %v4339 = vpop.f32.mrf.mxu0
        %v4340 = vadd.f32 0.0, %v4339
        %v4341 = vpop.f32.mrf.mxu0
        %4342 = vmatprep.mubr.bf16.mxu0 0
        %4343 = vmatmul.mubr.bf16.gmra.mxu0 %v4142
        %v4344 = vpop.f32.mrf.mxu0
        %v4345 = vadd.f32 0.0, %v4344
        %v4346 = vpop.f32.mrf.mxu0
        %v4347 = vpop.f32.mrf.mxu0
        %v4348 = vadd.f32 0.0, %v4347
        %v4349 = vpop.f32.mrf.mxu0
        %4350 = vmatprep.mubr.bf16.mxu0 0
        %4351 = vmatmul.mubr.bf16.gmra.mxu0 %v4143
        %v4352 = vpop.f32.mrf.mxu0
        %v4353 = vadd.f32 0.0, %v4352
        %v4354 = vpop.f32.mrf.mxu0
        %v4355 = vpop.f32.mrf.mxu0
        %v4356 = vadd.f32 0.0, %v4355
        %v4357 = vpop.f32.mrf.mxu0
        %4358 = vmatprep.mubr.bf16.mxu0 0
        %4359 = vmatmul.mubr.bf16.gmra.mxu0 %v4144
        %v4360 = vpop.f32.mrf.mxu0
        %v4361 = vadd.f32 0.0, %v4360
        %v4362 = vpop.f32.mrf.mxu0
        %v4363 = vpop.f32.mrf.mxu0
        %v4364 = vadd.f32 0.0, %v4363
        %v4365 = vpop.f32.mrf.mxu0
        %4366 = vmatprep.mubr.bf16.mxu0 0
        %4367 = vmatmul.mubr.bf16.gmra.mxu0 %v4145
        %v4368 = vpop.f32.mrf.mxu0
        %v4369 = vadd.f32 0.0, %v4368
        %v4370 = vpop.f32.mrf.mxu0
        %v4371 = vpop.f32.mrf.mxu0
        %v4372 = vadd.f32 0.0, %v4371
        %v4373 = vpop.f32.mrf.mxu0
        %4374 = vmatprep.mubr.bf16.mxu0 0
        %4375 = vmatmul.mubr.bf16.gmra.mxu0 %v4146
        %v4376 = vpop.f32.mrf.mxu0
        %v4377 = vadd.f32 0.0, %v4376
        %v4378 = vpop.f32.mrf.mxu0
        %v4379 = vpop.f32.mrf.mxu0
        %v4380 = vadd.f32 0.0, %v4379
        %v4381 = vpop.f32.mrf.mxu0
        %4382 = vmatprep.mubr.bf16.mxu0 0
        %4383 = vmatmul.mubr.bf16.gmra.mxu0 %v4147
        %v4384 = vpop.f32.mrf.mxu0
        %v4385 = vadd.f32 0.0, %v4384
        %v4386 = vpop.f32.mrf.mxu0
        %v4387 = vpop.f32.mrf.mxu0
        %v4388 = vadd.f32 0.0, %v4387
        %v4389 = vpop.f32.mrf.mxu0
        %4390 = vmatprep.mubr.bf16.mxu0 0
        %4391 = vmatmul.mubr.bf16.gmra.mxu0 %v4148
        %v4392 = vpop.f32.mrf.mxu0
        %v4393 = vadd.f32 0.0, %v4392
        %v4394 = vpop.f32.mrf.mxu0
        %v4395 = vpop.f32.mrf.mxu0
        %v4396 = vadd.f32 0.0, %v4395
        %v4397 = vpop.f32.mrf.mxu0
        %4398 = vmatprep.mubr.bf16.mxu0 0
        %4399 = vmatmul.mubr.bf16.gmra.mxu0 %v4149
        %v4400 = vpop.f32.mrf.mxu0
        %v4401 = vadd.f32 0.0, %v4400
        %v4402 = vpop.f32.mrf.mxu0
        %v4403 = vpop.f32.mrf.mxu0
        %v4404 = vadd.f32 0.0, %v4403
        %v4405 = vpop.f32.mrf.mxu0
        %4406 = vmatprep.mubr.bf16.mxu0 0
        %4407 = vmatmul.mubr.bf16.gmra.mxu0 %v4150
        %v4408 = vpop.f32.mrf.mxu0
        %v4409 = vadd.f32 0.0, %v4408
        %v4410 = vpop.f32.mrf.mxu0
        %v4411 = vpop.f32.mrf.mxu0
        %v4412 = vadd.f32 0.0, %v4411
        %v4413 = vpop.f32.mrf.mxu0
        %4414 = vmatprep.mubr.bf16.mxu0 0
        %4415 = vmatmul.mubr.bf16.gmra.mxu0 %v4151
        %v4416 = vpop.f32.mrf.mxu0
        %v4417 = vadd.f32 0.0, %v4416
        %v4418 = vpop.f32.mrf.mxu0
        %v4419 = vpop.f32.mrf.mxu0
        %v4420 = vadd.f32 0.0, %v4419
        %v4421 = vpop.f32.mrf.mxu0
        %4422 = vmatprep.mubr.bf16.mxu0 0
        %4423 = vmatmul.mubr.bf16.gmra.mxu0 %v4152
        %v4424 = vpop.f32.mrf.mxu0
        %v4425 = vadd.f32 0.0, %v4424
        %v4426 = vpop.f32.mrf.mxu0
        %v4427 = vpop.f32.mrf.mxu0
        %v4428 = vadd.f32 0.0, %v4427
        %v4429 = vpop.f32.mrf.mxu0
        %4430 = vmatprep.mubr.bf16.mxu0 0
        %4431 = vmatmul.mubr.bf16.gmra.mxu0 %v4153
        %v4432 = vpop.f32.mrf.mxu0
        %v4433 = vadd.f32 0.0, %v4432
        %v4434 = vpop.f32.mrf.mxu0
        %v4435 = vpop.f32.mrf.mxu0
        %v4436 = vadd.f32 0.0, %v4435
        %v4437 = vpop.f32.mrf.mxu0
        %4438 = vmatprep.mubr.bf16.mxu0 0
        %4439 = vmatmul.mubr.bf16.gmra.mxu0 %v4154
        %v4440 = vpop.f32.mrf.mxu0
        %v4441 = vadd.f32 0.0, %v4440
        %v4442 = vpop.f32.mrf.mxu0
        %v4443 = vpop.f32.mrf.mxu0
        %v4444 = vadd.f32 0.0, %v4443
        %v4445 = vpop.f32.mrf.mxu0
        %4446 = vmatprep.mubr.bf16.mxu0 0
        %4447 = vmatmul.mubr.bf16.gmra.mxu0 %v4155
        %v4448 = vpop.f32.mrf.mxu0
        %v4449 = vadd.f32 0.0, %v4448
        %v4450 = vpop.f32.mrf.mxu0
        %v4451 = vpop.f32.mrf.mxu0
        %v4452 = vadd.f32 0.0, %v4451
        %v4453 = vpop.f32.mrf.mxu0
        %4454 = vmatprep.mubr.bf16.mxu0 0
        %4455 = vmatmul.mubr.bf16.gmra.mxu0 %v4156
        %v4456 = vpop.f32.mrf.mxu0
        %v4457 = vadd.f32 0.0, %v4456
        %v4458 = vpop.f32.mrf.mxu0
        %v4459 = vpop.f32.mrf.mxu0
        %v4460 = vadd.f32 0.0, %v4459
        %v4461 = vpop.f32.mrf.mxu0
        %4462 = vmatprep.mubr.bf16.mxu0 0
        %4463 = vmatmul.mubr.bf16.gmra.mxu0 %v4157
        %v4464 = vpop.f32.mrf.mxu0
        %v4465 = vadd.f32 0.0, %v4464
        %v4466 = vpop.f32.mrf.mxu0
        %v4467 = vpop.f32.mrf.mxu0
        %v4468 = vadd.f32 0.0, %v4467
        %v4469 = vpop.f32.mrf.mxu0
        %4470 = vmatprep.mubr.bf16.mxu0 0
        %4471 = vmatmul.mubr.bf16.gmra.mxu0 %v4158
        %v4472 = vpop.f32.mrf.mxu0
        %v4473 = vadd.f32 0.0, %v4472
        %v4474 = vpop.f32.mrf.mxu0
        %v4475 = vpop.f32.mrf.mxu0
        %v4476 = vadd.f32 0.0, %v4475
        %v4477 = vpop.f32.mrf.mxu0
        %4478 = vmatprep.mubr.bf16.mxu0 0
        %4479 = vmatmul.mubr.bf16.gmra.mxu0 %v4159
        %v4480 = vpop.f32.mrf.mxu0
        %v4481 = vadd.f32 0.0, %v4480
        %v4482 = vpop.f32.mrf.mxu0
        %v4483 = vpop.f32.mrf.mxu0
        %v4484 = vadd.f32 0.0, %v4483
        %v4485 = vpop.f32.mrf.mxu0
        %4486 = vmatprep.mubr.bf16.mxu0 0
        %4487 = vmatmul.mubr.bf16.gmra.mxu0 %v4160
        %v4488 = vpop.f32.mrf.mxu0
        %v4489 = vadd.f32 0.0, %v4488
        %v4490 = vpop.f32.mrf.mxu0
        %v4491 = vpop.f32.mrf.mxu0
        %v4492 = vadd.f32 0.0, %v4491
        %v4493 = vpop.f32.mrf.mxu0
        %4494 = vmatprep.mubr.bf16.mxu0 0
        %4495 = vmatmul.mubr.bf16.gmra.mxu0 %v4161
        %v4496 = vpop.f32.mrf.mxu0
        %v4497 = vadd.f32 0.0, %v4496
        %v4498 = vpop.f32.mrf.mxu0
        %v4499 = vpop.f32.mrf.mxu0
        %v4500 = vadd.f32 0.0, %v4499
        %v4501 = vpop.f32.mrf.mxu0
        %4502 = vmatprep.mubr.bf16.mxu0 0
        %4503 = vmatmul.mubr.bf16.gmra.mxu0 %v4162
        %v4504 = vpop.f32.mrf.mxu0
        %v4505 = vadd.f32 0.0, %v4504
        %v4506 = vpop.f32.mrf.mxu0
        %v4507 = vpop.f32.mrf.mxu0
        %v4508 = vadd.f32 0.0, %v4507
        %v4509 = vpop.f32.mrf.mxu0
        %4510 = vmatprep.mubr.bf16.mxu0 0
        %4511 = vmatmul.mubr.bf16.gmra.mxu0 %v4163
        %v4512 = vpop.f32.mrf.mxu0
        %v4513 = vadd.f32 0.0, %v4512
        %v4514 = vpop.f32.mrf.mxu0
        %v4515 = vpop.f32.mrf.mxu0
        %v4516 = vadd.f32 0.0, %v4515
        %v4517 = vpop.f32.mrf.mxu0
        %4518 = vmatprep.mubr.bf16.mxu0 0
        %4519 = vmatmul.mubr.bf16.gmra.mxu0 %v4164
        %v4520 = vpop.f32.mrf.mxu0
        %v4521 = vadd.f32 0.0, %v4520
        %v4522 = vpop.f32.mrf.mxu0
        %v4523 = vpop.f32.mrf.mxu0
        %v4524 = vadd.f32 0.0, %v4523
        %v4525 = vpop.f32.mrf.mxu0
        %4526 = vmatprep.mubr.bf16.mxu0 0
        %4527 = vmatmul.mubr.bf16.gmra.mxu0 %v4165
        %v4528 = vpop.f32.mrf.mxu0
        %v4529 = vadd.f32 0.0, %v4528
        %v4530 = vpop.f32.mrf.mxu0
        %v4531 = vpop.f32.mrf.mxu0
        %v4532 = vadd.f32 0.0, %v4531
        %v4533 = vpop.f32.mrf.mxu0
        %4534 = vdwg.mxu0
        %v4535 = vadd.f32 %v3856, %v4281
        %v4536 = vadd.f32 %v3857, %v4284
        %v4537 = vadd.f32 %v3858, %v4289
        %v4538 = vadd.f32 %v3859, %v4292
        %v4539 = vadd.f32 %v3860, %v4297
        %v4540 = vadd.f32 %v3861, %v4300
        %v4541 = vadd.f32 %v3862, %v4305
        %v4542 = vadd.f32 %v3863, %v4308
        %v4543 = vadd.f32 %v3864, %v4313
        %v4544 = vadd.f32 %v3865, %v4316
        %v4545 = vadd.f32 %v3866, %v4321
        %v4546 = vadd.f32 %v3867, %v4324
        %v4547 = vadd.f32 %v3868, %v4329
        %v4548 = vadd.f32 %v3869, %v4332
        %v4549 = vadd.f32 %v3870, %v4337
        %v4550 = vadd.f32 %v3871, %v4340
        %v4551 = vadd.f32 %v3872, %v4345
        %v4552 = vadd.f32 %v3873, %v4348
        %v4553 = vadd.f32 %v3874, %v4353
        %v4554 = vadd.f32 %v3875, %v4356
        %v4555 = vadd.f32 %v3876, %v4361
        %v4556 = vadd.f32 %v3877, %v4364
        %v4557 = vadd.f32 %v3878, %v4369
        %v4558 = vadd.f32 %v3879, %v4372
        %v4559 = vadd.f32 %v3880, %v4377
        %v4560 = vadd.f32 %v3881, %v4380
        %v4561 = vadd.f32 %v3882, %v4385
        %v4562 = vadd.f32 %v3883, %v4388
        %v4563 = vadd.f32 %v3884, %v4393
        %v4564 = vadd.f32 %v3885, %v4396
        %v4565 = vadd.f32 %v3886, %v4401
        %v4566 = vadd.f32 %v3887, %v4404
        %v4567 = vadd.f32 %v3888, %v4409
        %v4568 = vadd.f32 %v3889, %v4412
        %v4569 = vadd.f32 %v3890, %v4417
        %v4570 = vadd.f32 %v3891, %v4420
        %v4571 = vadd.f32 %v3892, %v4425
        %v4572 = vadd.f32 %v3893, %v4428
        %v4573 = vadd.f32 %v3894, %v4433
        %v4574 = vadd.f32 %v3895, %v4436
        %v4575 = vadd.f32 %v3896, %v4441
        %v4576 = vadd.f32 %v3897, %v4444
        %v4577 = vadd.f32 %v3898, %v4449
        %v4578 = vadd.f32 %v3899, %v4452
        %v4579 = vadd.f32 %v3900, %v4457
        %v4580 = vadd.f32 %v3901, %v4460
        %v4581 = vadd.f32 %v3902, %v4465
        %v4582 = vadd.f32 %v3903, %v4468
        %v4583 = vadd.f32 %v3904, %v4473
        %v4584 = vadd.f32 %v3905, %v4476
        %v4585 = vadd.f32 %v3906, %v4481
        %v4586 = vadd.f32 %v3907, %v4484
        %v4587 = vadd.f32 %v3908, %v4489
        %v4588 = vadd.f32 %v3909, %v4492
        %v4589 = vadd.f32 %v3910, %v4497
        %v4590 = vadd.f32 %v3911, %v4500
        %v4591 = vadd.f32 %v3912, %v4505
        %v4592 = vadd.f32 %v3913, %v4508
        %v4593 = vadd.f32 %v3914, %v4513
        %v4594 = vadd.f32 %v3915, %v4516
        %v4595 = vadd.f32 %v3916, %v4521
        %v4596 = vadd.f32 %v3917, %v4524
        %v4597 = vadd.f32 %v3918, %v4529
        %v4598 = vadd.f32 %v3919, %v4532
        %s4599 = scalar_lea.vmem [#allocation5], 448
        %v4600 = vld [vmem:[%s4599] sm:$0xf]
        %v4601 = vld [vmem:[%s4599 + $0x4] sm:$0xf]
        %v4602 = vld [vmem:[%s4599 + $0x8] sm:$0xf]
        %v4603 = vld [vmem:[%s4599 + $0xc] sm:$0xf]
        %v4604 = vld [vmem:[%s4599 + $0x10] sm:$0xf]
        %v4605 = vld [vmem:[%s4599 + $0x14] sm:$0xf]
        %v4606 = vld [vmem:[%s4599 + $0x18] sm:$0xf]
        %v4607 = vld [vmem:[%s4599 + $0x1c] sm:$0xf]
        %v4608 = vld [vmem:[%s4599 + $0x20] sm:$0xf]
        %v4609 = vld [vmem:[%s4599 + $0x24] sm:$0xf]
        %v4610 = vld [vmem:[%s4599 + $0x28] sm:$0xf]
        %v4611 = vld [vmem:[%s4599 + $0x2c] sm:$0xf]
        %v4612 = vld [vmem:[%s4599 + $0x30] sm:$0xf]
        %v4613 = vld [vmem:[%s4599 + $0x34] sm:$0xf]
        %v4614 = vld [vmem:[%s4599 + $0x38] sm:$0xf]
        %v4615 = vld [vmem:[%s4599 + $0x3c] sm:$0xf]
        %v4617 = vunpack.c.l.b16 %v3988
        %v4618 = vpack.c.b16 %v4617, %v4617
        %v4620 = vshrl.u32 %v4134, 16
        %v4622 = vshll.u32 %v4134, 16
        %v4624 = vrot.slane %v4622, 1
        %v4625 = vor.u32 %v4620, %v4624
        %v4627 = vshll.u32 %v4135, 16
        %v4629 = vrot.slane %v4627, 1
        %v4630 = vsel %vm498, %v4625, %v4629
        %v4631 = vshrl.u32 %v4135, 16
        %v4633 = vor.u32 %v4631, %v4629
        %v4635 = vshll.u32 %v4136, 16
        %v4637 = vrot.slane %v4635, 1
        %v4638 = vsel %vm498, %v4633, %v4637
        %v4639 = vshrl.u32 %v4136, 16
        %v4641 = vor.u32 %v4639, %v4637
        %v4643 = vshll.u32 %v4137, 16
        %v4645 = vrot.slane %v4643, 1
        %v4646 = vsel %vm498, %v4641, %v4645
        %v4647 = vshrl.u32 %v4137, 16
        %v4649 = vor.u32 %v4647, %v4645
        %v4651 = vshll.u32 %v4138, 16
        %v4653 = vrot.slane %v4651, 1
        %v4654 = vsel %vm498, %v4649, %v4653
        %v4655 = vshrl.u32 %v4138, 16
        %v4657 = vor.u32 %v4655, %v4653
        %v4659 = vshll.u32 %v4139, 16
        %v4661 = vrot.slane %v4659, 1
        %v4662 = vsel %vm498, %v4657, %v4661
        %v4663 = vshrl.u32 %v4139, 16
        %v4665 = vor.u32 %v4663, %v4661
        %v4667 = vshll.u32 %v4140, 16
        %v4669 = vrot.slane %v4667, 1
        %v4670 = vsel %vm498, %v4665, %v4669
        %v4671 = vshrl.u32 %v4140, 16
        %v4673 = vor.u32 %v4671, %v4669
        %v4675 = vshll.u32 %v4141, 16
        %v4677 = vrot.slane %v4675, 1
        %v4678 = vsel %vm498, %v4673, %v4677
        %v4679 = vshrl.u32 %v4141, 16
        %v4681 = vor.u32 %v4679, %v4677
        %v4683 = vshll.u32 %v4142, 16
        %v4685 = vrot.slane %v4683, 1
        %v4686 = vsel %vm498, %v4681, %v4685
        %v4687 = vshrl.u32 %v4142, 16
        %v4689 = vor.u32 %v4687, %v4685
        %v4691 = vshll.u32 %v4143, 16
        %v4693 = vrot.slane %v4691, 1
        %v4694 = vsel %vm498, %v4689, %v4693
        %v4695 = vshrl.u32 %v4143, 16
        %v4697 = vor.u32 %v4695, %v4693
        %v4699 = vshll.u32 %v4144, 16
        %v4701 = vrot.slane %v4699, 1
        %v4702 = vsel %vm498, %v4697, %v4701
        %v4703 = vshrl.u32 %v4144, 16
        %v4705 = vor.u32 %v4703, %v4701
        %v4707 = vshll.u32 %v4145, 16
        %v4709 = vrot.slane %v4707, 1
        %v4710 = vsel %vm498, %v4705, %v4709
        %v4711 = vshrl.u32 %v4145, 16
        %v4713 = vor.u32 %v4711, %v4709
        %v4715 = vshll.u32 %v4146, 16
        %v4717 = vrot.slane %v4715, 1
        %v4718 = vsel %vm498, %v4713, %v4717
        %v4719 = vshrl.u32 %v4146, 16
        %v4721 = vor.u32 %v4719, %v4717
        %v4723 = vshll.u32 %v4147, 16
        %v4725 = vrot.slane %v4723, 1
        %v4726 = vsel %vm498, %v4721, %v4725
        %v4727 = vshrl.u32 %v4147, 16
        %v4729 = vor.u32 %v4727, %v4725
        %v4731 = vshll.u32 %v4148, 16
        %v4733 = vrot.slane %v4731, 1
        %v4734 = vsel %vm498, %v4729, %v4733
        %v4735 = vshrl.u32 %v4148, 16
        %v4737 = vor.u32 %v4735, %v4733
        %v4739 = vshll.u32 %v4149, 16
        %v4741 = vrot.slane %v4739, 1
        %v4742 = vsel %vm498, %v4737, %v4741
        %v4743 = vshrl.u32 %v4149, 16
        %v4745 = vor.u32 %v4743, %v4741
        %v4747 = vshll.u32 %v4150, 16
        %v4749 = vrot.slane %v4747, 1
        %v4750 = vsel %vm498, %v4745, %v4749
        %v4751 = vshrl.u32 %v4150, 16
        %v4753 = vor.u32 %v4751, %v4749
        %v4755 = vshll.u32 %v4151, 16
        %v4757 = vrot.slane %v4755, 1
        %v4758 = vsel %vm498, %v4753, %v4757
        %v4759 = vshrl.u32 %v4151, 16
        %v4761 = vor.u32 %v4759, %v4757
        %v4763 = vshll.u32 %v4152, 16
        %v4765 = vrot.slane %v4763, 1
        %v4766 = vsel %vm498, %v4761, %v4765
        %v4767 = vshrl.u32 %v4152, 16
        %v4769 = vor.u32 %v4767, %v4765
        %v4771 = vshll.u32 %v4153, 16
        %v4773 = vrot.slane %v4771, 1
        %v4774 = vsel %vm498, %v4769, %v4773
        %v4775 = vshrl.u32 %v4153, 16
        %v4777 = vor.u32 %v4775, %v4773
        %v4779 = vshll.u32 %v4154, 16
        %v4781 = vrot.slane %v4779, 1
        %v4782 = vsel %vm498, %v4777, %v4781
        %v4783 = vshrl.u32 %v4154, 16
        %v4785 = vor.u32 %v4783, %v4781
        %v4787 = vshll.u32 %v4155, 16
        %v4789 = vrot.slane %v4787, 1
        %v4790 = vsel %vm498, %v4785, %v4789
        %v4791 = vshrl.u32 %v4155, 16
        %v4793 = vor.u32 %v4791, %v4789
        %v4795 = vshll.u32 %v4156, 16
        %v4797 = vrot.slane %v4795, 1
        %v4798 = vsel %vm498, %v4793, %v4797
        %v4799 = vshrl.u32 %v4156, 16
        %v4801 = vor.u32 %v4799, %v4797
        %v4803 = vshll.u32 %v4157, 16
        %v4805 = vrot.slane %v4803, 1
        %v4806 = vsel %vm498, %v4801, %v4805
        %v4807 = vshrl.u32 %v4157, 16
        %v4809 = vor.u32 %v4807, %v4805
        %v4811 = vshll.u32 %v4158, 16
        %v4813 = vrot.slane %v4811, 1
        %v4814 = vsel %vm498, %v4809, %v4813
        %v4815 = vshrl.u32 %v4158, 16
        %v4817 = vor.u32 %v4815, %v4813
        %v4819 = vshll.u32 %v4159, 16
        %v4821 = vrot.slane %v4819, 1
        %v4822 = vsel %vm498, %v4817, %v4821
        %v4823 = vshrl.u32 %v4159, 16
        %v4825 = vor.u32 %v4823, %v4821
        %v4827 = vshll.u32 %v4160, 16
        %v4829 = vrot.slane %v4827, 1
        %v4830 = vsel %vm498, %v4825, %v4829
        %v4831 = vshrl.u32 %v4160, 16
        %v4833 = vor.u32 %v4831, %v4829
        %v4835 = vshll.u32 %v4161, 16
        %v4837 = vrot.slane %v4835, 1
        %v4838 = vsel %vm498, %v4833, %v4837
        %v4839 = vshrl.u32 %v4161, 16
        %v4841 = vor.u32 %v4839, %v4837
        %v4843 = vshll.u32 %v4162, 16
        %v4845 = vrot.slane %v4843, 1
        %v4846 = vsel %vm498, %v4841, %v4845
        %v4847 = vshrl.u32 %v4162, 16
        %v4849 = vor.u32 %v4847, %v4845
        %v4851 = vshll.u32 %v4163, 16
        %v4853 = vrot.slane %v4851, 1
        %v4854 = vsel %vm498, %v4849, %v4853
        %v4855 = vshrl.u32 %v4163, 16
        %v4857 = vor.u32 %v4855, %v4853
        %v4859 = vshll.u32 %v4164, 16
        %v4861 = vrot.slane %v4859, 1
        %v4862 = vsel %vm498, %v4857, %v4861
        %v4863 = vshrl.u32 %v4164, 16
        %v4865 = vor.u32 %v4863, %v4861
        %v4867 = vshll.u32 %v4165, 16
        %v4869 = vrot.slane %v4867, 1
        %v4870 = vsel %vm498, %v4865, %v4869
        %v4871 = vshrl.u32 %v4165, 16
        %v4873 = vor.u32 %v4871, %v4869
        %v4875 = vshll.u32 %v4618, 16
        %v4877 = vrot.slane %v4875, 1
        %v4878 = vsel %vm498, %v4873, %v4877
        %v4927 = vunpack.c.l.b16 %v4600
        %v4928 = vunpack.c.l.b16 %v4601
        %v4929 = vunpack.c.l.b16 %v4602
        %v4930 = vunpack.c.l.b16 %v4603
        %v4931 = vunpack.c.l.b16 %v4604
        %v4932 = vunpack.c.l.b16 %v4605
        %v4933 = vunpack.c.l.b16 %v4606
        %v4934 = vunpack.c.l.b16 %v4607
        %v4935 = vunpack.c.l.b16 %v4608
        %v4936 = vunpack.c.l.b16 %v4609
        %v4937 = vunpack.c.l.b16 %v4610
        %v4938 = vunpack.c.l.b16 %v4611
        %v4939 = vunpack.c.l.b16 %v4612
        %v4940 = vunpack.c.l.b16 %v4613
        %v4941 = vunpack.c.l.b16 %v4614
        %v4942 = vunpack.c.l.b16 %v4615
        %v4943 = vpack.c.b16 %v4928, %v4927
        %v4944 = vpack.c.b16 %v4930, %v4929
        %v4945 = vpack.c.b16 %v4932, %v4931
        %v4946 = vpack.c.b16 %v4934, %v4933
        %v4947 = vpack.c.b16 %v4936, %v4935
        %v4948 = vpack.c.b16 %v4938, %v4937
        %v4949 = vpack.c.b16 %v4940, %v4939
        %v4950 = vpack.c.b16 %v4942, %v4941
        %4959 = vmatprep.subr.bf16.mxu0 0
        %4960 = vmatpush1.bf16.msra.mxu0 %v4950
        %4961 = vmatprep.subr.bf16.mxu0 0
        %4962 = vmatpush1.bf16.msra.mxu0 %v4949
        %4963 = vmatprep.subr.bf16.mxu0 0
        %4964 = vmatpush1.bf16.msra.mxu0 %v4948
        %4965 = vmatprep.subr.bf16.mxu0 0
        %4966 = vmatpush1.bf16.msra.mxu0 %v4947
        %4967 = vmatprep.subr.bf16.mxu0 0
        %4968 = vmatpush1.bf16.msra.mxu0 %v4946
        %4969 = vmatprep.subr.bf16.mxu0 0
        %4970 = vmatpush1.bf16.msra.mxu0 %v4945
        %4971 = vmatprep.subr.bf16.mxu0 0
        %4972 = vmatpush1.bf16.msra.mxu0 %v4944
        %4973 = vmatprep.subr.bf16.mxu0 0
        %4974 = vmatpush1.bf16.msra.mxu0 %v4943
        %4975 = vmatprep.subr.bf16.mxu0 0
        %4976 = vmatpush2.bf16.msra.mxu0 0
        %4977 = vmatprep.subr.bf16.mxu0 0
        %4978 = vmatpush2.bf16.msra.mxu0 0
        %4979 = vmatprep.subr.bf16.mxu0 0
        %4980 = vmatpush2.bf16.msra.mxu0 0
        %4981 = vmatprep.subr.bf16.mxu0 0
        %4982 = vmatpush2.bf16.msra.mxu0 0
        %4983 = vmatprep.subr.bf16.mxu0 0
        %4984 = vmatpush2.bf16.msra.mxu0 0
        %4985 = vmatprep.subr.bf16.mxu0 0
        %4986 = vmatpush2.bf16.msra.mxu0 0
        %4987 = vmatprep.subr.bf16.mxu0 0
        %4988 = vmatpush2.bf16.msra.mxu0 0
        %4989 = vmatprep.subr.bf16.mxu0 0
        %4990 = vmatpush2.bf16.msra.mxu0 0
        %4991 = vmatprep.mubr.bf16.mxu0 0
        %4992 = vmatmul.mubr.bf16.gmra.mxu0 %v4630
        %v4993 = vpop.f32.mrf.mxu0
        %v4994 = vadd.f32 0.0, %v4993
        %v4995 = vpop.f32.mrf.mxu0
        %v4996 = vpop.f32.mrf.mxu0
        %v4997 = vadd.f32 0.0, %v4996
        %v4998 = vpop.f32.mrf.mxu0
        %4999 = vmatprep.mubr.bf16.mxu0 0
        %5000 = vmatmul.mubr.bf16.gmra.mxu0 %v4638
        %v5001 = vpop.f32.mrf.mxu0
        %v5002 = vadd.f32 0.0, %v5001
        %v5003 = vpop.f32.mrf.mxu0
        %v5004 = vpop.f32.mrf.mxu0
        %v5005 = vadd.f32 0.0, %v5004
        %v5006 = vpop.f32.mrf.mxu0
        %5007 = vmatprep.mubr.bf16.mxu0 0
        %5008 = vmatmul.mubr.bf16.gmra.mxu0 %v4646
        %v5009 = vpop.f32.mrf.mxu0
        %v5010 = vadd.f32 0.0, %v5009
        %v5011 = vpop.f32.mrf.mxu0
        %v5012 = vpop.f32.mrf.mxu0
        %v5013 = vadd.f32 0.0, %v5012
        %v5014 = vpop.f32.mrf.mxu0
        %5015 = vmatprep.mubr.bf16.mxu0 0
        %5016 = vmatmul.mubr.bf16.gmra.mxu0 %v4654
        %v5017 = vpop.f32.mrf.mxu0
        %v5018 = vadd.f32 0.0, %v5017
        %v5019 = vpop.f32.mrf.mxu0
        %v5020 = vpop.f32.mrf.mxu0
        %v5021 = vadd.f32 0.0, %v5020
        %v5022 = vpop.f32.mrf.mxu0
        %5023 = vmatprep.mubr.bf16.mxu0 0
        %5024 = vmatmul.mubr.bf16.gmra.mxu0 %v4662
        %v5025 = vpop.f32.mrf.mxu0
        %v5026 = vadd.f32 0.0, %v5025
        %v5027 = vpop.f32.mrf.mxu0
        %v5028 = vpop.f32.mrf.mxu0
        %v5029 = vadd.f32 0.0, %v5028
        %v5030 = vpop.f32.mrf.mxu0
        %5031 = vmatprep.mubr.bf16.mxu0 0
        %5032 = vmatmul.mubr.bf16.gmra.mxu0 %v4670
        %v5033 = vpop.f32.mrf.mxu0
        %v5034 = vadd.f32 0.0, %v5033
        %v5035 = vpop.f32.mrf.mxu0
        %v5036 = vpop.f32.mrf.mxu0
        %v5037 = vadd.f32 0.0, %v5036
        %v5038 = vpop.f32.mrf.mxu0
        %5039 = vmatprep.mubr.bf16.mxu0 0
        %5040 = vmatmul.mubr.bf16.gmra.mxu0 %v4678
        %v5041 = vpop.f32.mrf.mxu0
        %v5042 = vadd.f32 0.0, %v5041
        %v5043 = vpop.f32.mrf.mxu0
        %v5044 = vpop.f32.mrf.mxu0
        %v5045 = vadd.f32 0.0, %v5044
        %v5046 = vpop.f32.mrf.mxu0
        %5047 = vmatprep.mubr.bf16.mxu0 0
        %5048 = vmatmul.mubr.bf16.gmra.mxu0 %v4686
        %v5049 = vpop.f32.mrf.mxu0
        %v5050 = vadd.f32 0.0, %v5049
        %v5051 = vpop.f32.mrf.mxu0
        %v5052 = vpop.f32.mrf.mxu0
        %v5053 = vadd.f32 0.0, %v5052
        %v5054 = vpop.f32.mrf.mxu0
        %5055 = vmatprep.mubr.bf16.mxu0 0
        %5056 = vmatmul.mubr.bf16.gmra.mxu0 %v4694
        %v5057 = vpop.f32.mrf.mxu0
        %v5058 = vadd.f32 0.0, %v5057
        %v5059 = vpop.f32.mrf.mxu0
        %v5060 = vpop.f32.mrf.mxu0
        %v5061 = vadd.f32 0.0, %v5060
        %v5062 = vpop.f32.mrf.mxu0
        %5063 = vmatprep.mubr.bf16.mxu0 0
        %5064 = vmatmul.mubr.bf16.gmra.mxu0 %v4702
        %v5065 = vpop.f32.mrf.mxu0
        %v5066 = vadd.f32 0.0, %v5065
        %v5067 = vpop.f32.mrf.mxu0
        %v5068 = vpop.f32.mrf.mxu0
        %v5069 = vadd.f32 0.0, %v5068
        %v5070 = vpop.f32.mrf.mxu0
        %5071 = vmatprep.mubr.bf16.mxu0 0
        %5072 = vmatmul.mubr.bf16.gmra.mxu0 %v4710
        %v5073 = vpop.f32.mrf.mxu0
        %v5074 = vadd.f32 0.0, %v5073
        %v5075 = vpop.f32.mrf.mxu0
        %v5076 = vpop.f32.mrf.mxu0
        %v5077 = vadd.f32 0.0, %v5076
        %v5078 = vpop.f32.mrf.mxu0
        %5079 = vmatprep.mubr.bf16.mxu0 0
        %5080 = vmatmul.mubr.bf16.gmra.mxu0 %v4718
        %v5081 = vpop.f32.mrf.mxu0
        %v5082 = vadd.f32 0.0, %v5081
        %v5083 = vpop.f32.mrf.mxu0
        %v5084 = vpop.f32.mrf.mxu0
        %v5085 = vadd.f32 0.0, %v5084
        %v5086 = vpop.f32.mrf.mxu0
        %5087 = vmatprep.mubr.bf16.mxu0 0
        %5088 = vmatmul.mubr.bf16.gmra.mxu0 %v4726
        %v5089 = vpop.f32.mrf.mxu0
        %v5090 = vadd.f32 0.0, %v5089
        %v5091 = vpop.f32.mrf.mxu0
        %v5092 = vpop.f32.mrf.mxu0
        %v5093 = vadd.f32 0.0, %v5092
        %v5094 = vpop.f32.mrf.mxu0
        %5095 = vmatprep.mubr.bf16.mxu0 0
        %5096 = vmatmul.mubr.bf16.gmra.mxu0 %v4734
        %v5097 = vpop.f32.mrf.mxu0
        %v5098 = vadd.f32 0.0, %v5097
        %v5099 = vpop.f32.mrf.mxu0
        %v5100 = vpop.f32.mrf.mxu0
        %v5101 = vadd.f32 0.0, %v5100
        %v5102 = vpop.f32.mrf.mxu0
        %5103 = vmatprep.mubr.bf16.mxu0 0
        %5104 = vmatmul.mubr.bf16.gmra.mxu0 %v4742
        %v5105 = vpop.f32.mrf.mxu0
        %v5106 = vadd.f32 0.0, %v5105
        %v5107 = vpop.f32.mrf.mxu0
        %v5108 = vpop.f32.mrf.mxu0
        %v5109 = vadd.f32 0.0, %v5108
        %v5110 = vpop.f32.mrf.mxu0
        %5111 = vmatprep.mubr.bf16.mxu0 0
        %5112 = vmatmul.mubr.bf16.gmra.mxu0 %v4750
        %v5113 = vpop.f32.mrf.mxu0
        %v5114 = vadd.f32 0.0, %v5113
        %v5115 = vpop.f32.mrf.mxu0
        %v5116 = vpop.f32.mrf.mxu0
        %v5117 = vadd.f32 0.0, %v5116
        %v5118 = vpop.f32.mrf.mxu0
        %5119 = vmatprep.mubr.bf16.mxu0 0
        %5120 = vmatmul.mubr.bf16.gmra.mxu0 %v4758
        %v5121 = vpop.f32.mrf.mxu0
        %v5122 = vadd.f32 0.0, %v5121
        %v5123 = vpop.f32.mrf.mxu0
        %v5124 = vpop.f32.mrf.mxu0
        %v5125 = vadd.f32 0.0, %v5124
        %v5126 = vpop.f32.mrf.mxu0
        %5127 = vmatprep.mubr.bf16.mxu0 0
        %5128 = vmatmul.mubr.bf16.gmra.mxu0 %v4766
        %v5129 = vpop.f32.mrf.mxu0
        %v5130 = vadd.f32 0.0, %v5129
        %v5131 = vpop.f32.mrf.mxu0
        %v5132 = vpop.f32.mrf.mxu0
        %v5133 = vadd.f32 0.0, %v5132
        %v5134 = vpop.f32.mrf.mxu0
        %5135 = vmatprep.mubr.bf16.mxu0 0
        %5136 = vmatmul.mubr.bf16.gmra.mxu0 %v4774
        %v5137 = vpop.f32.mrf.mxu0
        %v5138 = vadd.f32 0.0, %v5137
        %v5139 = vpop.f32.mrf.mxu0
        %v5140 = vpop.f32.mrf.mxu0
        %v5141 = vadd.f32 0.0, %v5140
        %v5142 = vpop.f32.mrf.mxu0
        %5143 = vmatprep.mubr.bf16.mxu0 0
        %5144 = vmatmul.mubr.bf16.gmra.mxu0 %v4782
        %v5145 = vpop.f32.mrf.mxu0
        %v5146 = vadd.f32 0.0, %v5145
        %v5147 = vpop.f32.mrf.mxu0
        %v5148 = vpop.f32.mrf.mxu0
        %v5149 = vadd.f32 0.0, %v5148
        %v5150 = vpop.f32.mrf.mxu0
        %5151 = vmatprep.mubr.bf16.mxu0 0
        %5152 = vmatmul.mubr.bf16.gmra.mxu0 %v4790
        %v5153 = vpop.f32.mrf.mxu0
        %v5154 = vadd.f32 0.0, %v5153
        %v5155 = vpop.f32.mrf.mxu0
        %v5156 = vpop.f32.mrf.mxu0
        %v5157 = vadd.f32 0.0, %v5156
        %v5158 = vpop.f32.mrf.mxu0
        %5159 = vmatprep.mubr.bf16.mxu0 0
        %5160 = vmatmul.mubr.bf16.gmra.mxu0 %v4798
        %v5161 = vpop.f32.mrf.mxu0
        %v5162 = vadd.f32 0.0, %v5161
        %v5163 = vpop.f32.mrf.mxu0
        %v5164 = vpop.f32.mrf.mxu0
        %v5165 = vadd.f32 0.0, %v5164
        %v5166 = vpop.f32.mrf.mxu0
        %5167 = vmatprep.mubr.bf16.mxu0 0
        %5168 = vmatmul.mubr.bf16.gmra.mxu0 %v4806
        %v5169 = vpop.f32.mrf.mxu0
        %v5170 = vadd.f32 0.0, %v5169
        %v5171 = vpop.f32.mrf.mxu0
        %v5172 = vpop.f32.mrf.mxu0
        %v5173 = vadd.f32 0.0, %v5172
        %v5174 = vpop.f32.mrf.mxu0
        %5175 = vmatprep.mubr.bf16.mxu0 0
        %5176 = vmatmul.mubr.bf16.gmra.mxu0 %v4814
        %v5177 = vpop.f32.mrf.mxu0
        %v5178 = vadd.f32 0.0, %v5177
        %v5179 = vpop.f32.mrf.mxu0
        %v5180 = vpop.f32.mrf.mxu0
        %v5181 = vadd.f32 0.0, %v5180
        %v5182 = vpop.f32.mrf.mxu0
        %5183 = vmatprep.mubr.bf16.mxu0 0
        %5184 = vmatmul.mubr.bf16.gmra.mxu0 %v4822
        %v5185 = vpop.f32.mrf.mxu0
        %v5186 = vadd.f32 0.0, %v5185
        %v5187 = vpop.f32.mrf.mxu0
        %v5188 = vpop.f32.mrf.mxu0
        %v5189 = vadd.f32 0.0, %v5188
        %v5190 = vpop.f32.mrf.mxu0
        %5191 = vmatprep.mubr.bf16.mxu0 0
        %5192 = vmatmul.mubr.bf16.gmra.mxu0 %v4830
        %v5193 = vpop.f32.mrf.mxu0
        %v5194 = vadd.f32 0.0, %v5193
        %v5195 = vpop.f32.mrf.mxu0
        %v5196 = vpop.f32.mrf.mxu0
        %v5197 = vadd.f32 0.0, %v5196
        %v5198 = vpop.f32.mrf.mxu0
        %5199 = vmatprep.mubr.bf16.mxu0 0
        %5200 = vmatmul.mubr.bf16.gmra.mxu0 %v4838
        %v5201 = vpop.f32.mrf.mxu0
        %v5202 = vadd.f32 0.0, %v5201
        %v5203 = vpop.f32.mrf.mxu0
        %v5204 = vpop.f32.mrf.mxu0
        %v5205 = vadd.f32 0.0, %v5204
        %v5206 = vpop.f32.mrf.mxu0
        %5207 = vmatprep.mubr.bf16.mxu0 0
        %5208 = vmatmul.mubr.bf16.gmra.mxu0 %v4846
        %v5209 = vpop.f32.mrf.mxu0
        %v5210 = vadd.f32 0.0, %v5209
        %v5211 = vpop.f32.mrf.mxu0
        %v5212 = vpop.f32.mrf.mxu0
        %v5213 = vadd.f32 0.0, %v5212
        %v5214 = vpop.f32.mrf.mxu0
        %5215 = vmatprep.mubr.bf16.mxu0 0
        %5216 = vmatmul.mubr.bf16.gmra.mxu0 %v4854
        %v5217 = vpop.f32.mrf.mxu0
        %v5218 = vadd.f32 0.0, %v5217
        %v5219 = vpop.f32.mrf.mxu0
        %v5220 = vpop.f32.mrf.mxu0
        %v5221 = vadd.f32 0.0, %v5220
        %v5222 = vpop.f32.mrf.mxu0
        %5223 = vmatprep.mubr.bf16.mxu0 0
        %5224 = vmatmul.mubr.bf16.gmra.mxu0 %v4862
        %v5225 = vpop.f32.mrf.mxu0
        %v5226 = vadd.f32 0.0, %v5225
        %v5227 = vpop.f32.mrf.mxu0
        %v5228 = vpop.f32.mrf.mxu0
        %v5229 = vadd.f32 0.0, %v5228
        %v5230 = vpop.f32.mrf.mxu0
        %5231 = vmatprep.mubr.bf16.mxu0 0
        %5232 = vmatmul.mubr.bf16.gmra.mxu0 %v4870
        %v5233 = vpop.f32.mrf.mxu0
        %v5234 = vadd.f32 0.0, %v5233
        %v5235 = vpop.f32.mrf.mxu0
        %v5236 = vpop.f32.mrf.mxu0
        %v5237 = vadd.f32 0.0, %v5236
        %v5238 = vpop.f32.mrf.mxu0
        %5239 = vmatprep.mubr.bf16.mxu0 0
        %5240 = vmatmul.mubr.bf16.gmra.mxu0 %v4878
        %v5241 = vpop.f32.mrf.mxu0
        %v5242 = vadd.f32 0.0, %v5241
        %v5243 = vpop.f32.mrf.mxu0
        %v5244 = vpop.f32.mrf.mxu0
        %v5245 = vadd.f32 0.0, %v5244
        %v5246 = vpop.f32.mrf.mxu0
        %5247 = vdwg.mxu0
        %v5248 = vadd.f32 %v4535, %v4994
        %v5249 = vadd.f32 %v4536, %v4997
        %v5250 = vadd.f32 %v4537, %v5002
        %v5251 = vadd.f32 %v4538, %v5005
        %v5252 = vadd.f32 %v4539, %v5010
        %v5253 = vadd.f32 %v4540, %v5013
        %v5254 = vadd.f32 %v4541, %v5018
        %v5255 = vadd.f32 %v4542, %v5021
        %v5256 = vadd.f32 %v4543, %v5026
        %v5257 = vadd.f32 %v4544, %v5029
        %v5258 = vadd.f32 %v4545, %v5034
        %v5259 = vadd.f32 %v4546, %v5037
        %v5260 = vadd.f32 %v4547, %v5042
        %v5261 = vadd.f32 %v4548, %v5045
        %v5262 = vadd.f32 %v4549, %v5050
        %v5263 = vadd.f32 %v4550, %v5053
        %v5264 = vadd.f32 %v4551, %v5058
        %v5265 = vadd.f32 %v4552, %v5061
        %v5266 = vadd.f32 %v4553, %v5066
        %v5267 = vadd.f32 %v4554, %v5069
        %v5268 = vadd.f32 %v4555, %v5074
        %v5269 = vadd.f32 %v4556, %v5077
        %v5270 = vadd.f32 %v4557, %v5082
        %v5271 = vadd.f32 %v4558, %v5085
        %v5272 = vadd.f32 %v4559, %v5090
        %v5273 = vadd.f32 %v4560, %v5093
        %v5274 = vadd.f32 %v4561, %v5098
        %v5275 = vadd.f32 %v4562, %v5101
        %v5276 = vadd.f32 %v4563, %v5106
        %v5277 = vadd.f32 %v4564, %v5109
        %v5278 = vadd.f32 %v4565, %v5114
        %v5279 = vadd.f32 %v4566, %v5117
        %v5280 = vadd.f32 %v4567, %v5122
        %v5281 = vadd.f32 %v4568, %v5125
        %v5282 = vadd.f32 %v4569, %v5130
        %v5283 = vadd.f32 %v4570, %v5133
        %v5284 = vadd.f32 %v4571, %v5138
        %v5285 = vadd.f32 %v4572, %v5141
        %v5286 = vadd.f32 %v4573, %v5146
        %v5287 = vadd.f32 %v4574, %v5149
        %v5288 = vadd.f32 %v4575, %v5154
        %v5289 = vadd.f32 %v4576, %v5157
        %v5290 = vadd.f32 %v4577, %v5162
        %v5291 = vadd.f32 %v4578, %v5165
        %v5292 = vadd.f32 %v4579, %v5170
        %v5293 = vadd.f32 %v4580, %v5173
        %v5294 = vadd.f32 %v4581, %v5178
        %v5295 = vadd.f32 %v4582, %v5181
        %v5296 = vadd.f32 %v4583, %v5186
        %v5297 = vadd.f32 %v4584, %v5189
        %v5298 = vadd.f32 %v4585, %v5194
        %v5299 = vadd.f32 %v4586, %v5197
        %v5300 = vadd.f32 %v4587, %v5202
        %v5301 = vadd.f32 %v4588, %v5205
        %v5302 = vadd.f32 %v4589, %v5210
        %v5303 = vadd.f32 %v4590, %v5213
        %v5304 = vadd.f32 %v4591, %v5218
        %v5305 = vadd.f32 %v4592, %v5221
        %v5306 = vadd.f32 %v4593, %v5226
        %v5307 = vadd.f32 %v4594, %v5229
        %v5308 = vadd.f32 %v4595, %v5234
        %v5309 = vadd.f32 %v4596, %v5237
        %v5310 = vadd.f32 %v4597, %v5242
        %v5311 = vadd.f32 %v4598, %v5245
        %s5312 = scalar_lea.vmem [#allocation5], 512
        %v5313 = vld [vmem:[%s5312] sm:$0xf]
        %v5314 = vld [vmem:[%s5312 + $0x4] sm:$0xf]
        %v5315 = vld [vmem:[%s5312 + $0x8] sm:$0xf]
        %v5316 = vld [vmem:[%s5312 + $0xc] sm:$0xf]
        %v5317 = vld [vmem:[%s5312 + $0x10] sm:$0xf]
        %v5318 = vld [vmem:[%s5312 + $0x14] sm:$0xf]
        %v5319 = vld [vmem:[%s5312 + $0x18] sm:$0xf]
        %v5320 = vld [vmem:[%s5312 + $0x1c] sm:$0xf]
        %v5321 = vld [vmem:[%s5312 + $0x20] sm:$0xf]
        %v5322 = vld [vmem:[%s5312 + $0x24] sm:$0xf]
        %v5323 = vld [vmem:[%s5312 + $0x28] sm:$0xf]
        %v5324 = vld [vmem:[%s5312 + $0x2c] sm:$0xf]
        %v5325 = vld [vmem:[%s5312 + $0x30] sm:$0xf]
        %v5326 = vld [vmem:[%s5312 + $0x34] sm:$0xf]
        %v5327 = vld [vmem:[%s5312 + $0x38] sm:$0xf]
        %v5328 = vld [vmem:[%s5312 + $0x3c] sm:$0xf]
        %v5329 = vrot.slane %v4134, 1
        %v5330 = vrot.slane %v4135, 1
        %v5331 = vsel %vm1514, %v5329, %v5330
        %v5332 = vrot.slane %v4136, 1
        %v5333 = vsel %vm1514, %v5330, %v5332
        %v5334 = vrot.slane %v4137, 1
        %v5335 = vsel %vm1514, %v5332, %v5334
        %v5336 = vrot.slane %v4138, 1
        %v5337 = vsel %vm1514, %v5334, %v5336
        %v5338 = vrot.slane %v4139, 1
        %v5339 = vsel %vm1514, %v5336, %v5338
        %v5340 = vrot.slane %v4140, 1
        %v5341 = vsel %vm1514, %v5338, %v5340
        %v5342 = vrot.slane %v4141, 1
        %v5343 = vsel %vm1514, %v5340, %v5342
        %v5344 = vrot.slane %v4142, 1
        %v5345 = vsel %vm1514, %v5342, %v5344
        %v5346 = vrot.slane %v4143, 1
        %v5347 = vsel %vm1514, %v5344, %v5346
        %v5348 = vrot.slane %v4144, 1
        %v5349 = vsel %vm1514, %v5346, %v5348
        %v5350 = vrot.slane %v4145, 1
        %v5351 = vsel %vm1514, %v5348, %v5350
        %v5352 = vrot.slane %v4146, 1
        %v5353 = vsel %vm1514, %v5350, %v5352
        %v5354 = vrot.slane %v4147, 1
        %v5355 = vsel %vm1514, %v5352, %v5354
        %v5356 = vrot.slane %v4148, 1
        %v5357 = vsel %vm1514, %v5354, %v5356
        %v5358 = vrot.slane %v4149, 1
        %v5359 = vsel %vm1514, %v5356, %v5358
        %v5360 = vrot.slane %v4150, 1
        %v5361 = vsel %vm1514, %v5358, %v5360
        %v5362 = vrot.slane %v4151, 1
        %v5363 = vsel %vm1514, %v5360, %v5362
        %v5364 = vrot.slane %v4152, 1
        %v5365 = vsel %vm1514, %v5362, %v5364
        %v5366 = vrot.slane %v4153, 1
        %v5367 = vsel %vm1514, %v5364, %v5366
        %v5368 = vrot.slane %v4154, 1
        %v5369 = vsel %vm1514, %v5366, %v5368
        %v5370 = vrot.slane %v4155, 1
        %v5371 = vsel %vm1514, %v5368, %v5370
        %v5372 = vrot.slane %v4156, 1
        %v5373 = vsel %vm1514, %v5370, %v5372
        %v5374 = vrot.slane %v4157, 1
        %v5375 = vsel %vm1514, %v5372, %v5374
        %v5376 = vrot.slane %v4158, 1
        %v5377 = vsel %vm1514, %v5374, %v5376
        %v5378 = vrot.slane %v4159, 1
        %v5379 = vsel %vm1514, %v5376, %v5378
        %v5380 = vrot.slane %v4160, 1
        %v5381 = vsel %vm1514, %v5378, %v5380
        %v5382 = vrot.slane %v4161, 1
        %v5383 = vsel %vm1514, %v5380, %v5382
        %v5384 = vrot.slane %v4162, 1
        %v5385 = vsel %vm1514, %v5382, %v5384
        %v5386 = vrot.slane %v4163, 1
        %v5387 = vsel %vm1514, %v5384, %v5386
        %v5388 = vrot.slane %v4164, 1
        %v5389 = vsel %vm1514, %v5386, %v5388
        %v5390 = vrot.slane %v4165, 1
        %v5391 = vsel %vm1514, %v5388, %v5390
        %v5392 = vrot.slane %v4618, 1
        %v5393 = vsel %vm1514, %v5390, %v5392
        %v5442 = vunpack.c.l.b16 %v5313
        %v5443 = vunpack.c.l.b16 %v5314
        %v5444 = vunpack.c.l.b16 %v5315
        %v5445 = vunpack.c.l.b16 %v5316
        %v5446 = vunpack.c.l.b16 %v5317
        %v5447 = vunpack.c.l.b16 %v5318
        %v5448 = vunpack.c.l.b16 %v5319
        %v5449 = vunpack.c.l.b16 %v5320
        %v5450 = vunpack.c.l.b16 %v5321
        %v5451 = vunpack.c.l.b16 %v5322
        %v5452 = vunpack.c.l.b16 %v5323
        %v5453 = vunpack.c.l.b16 %v5324
        %v5454 = vunpack.c.l.b16 %v5325
        %v5455 = vunpack.c.l.b16 %v5326
        %v5456 = vunpack.c.l.b16 %v5327
        %v5457 = vunpack.c.l.b16 %v5328
        %v5458 = vpack.c.b16 %v5443, %v5442
        %v5459 = vpack.c.b16 %v5445, %v5444
        %v5460 = vpack.c.b16 %v5447, %v5446
        %v5461 = vpack.c.b16 %v5449, %v5448
        %v5462 = vpack.c.b16 %v5451, %v5450
        %v5463 = vpack.c.b16 %v5453, %v5452
        %v5464 = vpack.c.b16 %v5455, %v5454
        %v5465 = vpack.c.b16 %v5457, %v5456
        %5474 = vmatprep.subr.bf16.mxu0 0
        %5475 = vmatpush1.bf16.msra.mxu0 %v5465
        %5476 = vmatprep.subr.bf16.mxu0 0
        %5477 = vmatpush1.bf16.msra.mxu0 %v5464
        %5478 = vmatprep.subr.bf16.mxu0 0
        %5479 = vmatpush1.bf16.msra.mxu0 %v5463
        %5480 = vmatprep.subr.bf16.mxu0 0
        %5481 = vmatpush1.bf16.msra.mxu0 %v5462
        %5482 = vmatprep.subr.bf16.mxu0 0
        %5483 = vmatpush1.bf16.msra.mxu0 %v5461
        %5484 = vmatprep.subr.bf16.mxu0 0
        %5485 = vmatpush1.bf16.msra.mxu0 %v5460
        %5486 = vmatprep.subr.bf16.mxu0 0
        %5487 = vmatpush1.bf16.msra.mxu0 %v5459
        %5488 = vmatprep.subr.bf16.mxu0 0
        %5489 = vmatpush1.bf16.msra.mxu0 %v5458
        %5490 = vmatprep.subr.bf16.mxu0 0
        %5491 = vmatpush2.bf16.msra.mxu0 0
        %5492 = vmatprep.subr.bf16.mxu0 0
        %5493 = vmatpush2.bf16.msra.mxu0 0
        %5494 = vmatprep.subr.bf16.mxu0 0
        %5495 = vmatpush2.bf16.msra.mxu0 0
        %5496 = vmatprep.subr.bf16.mxu0 0
        %5497 = vmatpush2.bf16.msra.mxu0 0
        %5498 = vmatprep.subr.bf16.mxu0 0
        %5499 = vmatpush2.bf16.msra.mxu0 0
        %5500 = vmatprep.subr.bf16.mxu0 0
        %5501 = vmatpush2.bf16.msra.mxu0 0
        %5502 = vmatprep.subr.bf16.mxu0 0
        %5503 = vmatpush2.bf16.msra.mxu0 0
        %5504 = vmatprep.subr.bf16.mxu0 0
        %5505 = vmatpush2.bf16.msra.mxu0 0
        %5506 = vmatprep.mubr.bf16.mxu0 0
        %5507 = vmatmul.mubr.bf16.gmra.mxu0 %v5331
        %v5508 = vpop.f32.mrf.mxu0
        %v5509 = vadd.f32 0.0, %v5508
        %v5510 = vpop.f32.mrf.mxu0
        %v5511 = vpop.f32.mrf.mxu0
        %v5512 = vadd.f32 0.0, %v5511
        %v5513 = vpop.f32.mrf.mxu0
        %5514 = vmatprep.mubr.bf16.mxu0 0
        %5515 = vmatmul.mubr.bf16.gmra.mxu0 %v5333
        %v5516 = vpop.f32.mrf.mxu0
        %v5517 = vadd.f32 0.0, %v5516
        %v5518 = vpop.f32.mrf.mxu0
        %v5519 = vpop.f32.mrf.mxu0
        %v5520 = vadd.f32 0.0, %v5519
        %v5521 = vpop.f32.mrf.mxu0
        %5522 = vmatprep.mubr.bf16.mxu0 0
        %5523 = vmatmul.mubr.bf16.gmra.mxu0 %v5335
        %v5524 = vpop.f32.mrf.mxu0
        %v5525 = vadd.f32 0.0, %v5524
        %v5526 = vpop.f32.mrf.mxu0
        %v5527 = vpop.f32.mrf.mxu0
        %v5528 = vadd.f32 0.0, %v5527
        %v5529 = vpop.f32.mrf.mxu0
        %5530 = vmatprep.mubr.bf16.mxu0 0
        %5531 = vmatmul.mubr.bf16.gmra.mxu0 %v5337
        %v5532 = vpop.f32.mrf.mxu0
        %v5533 = vadd.f32 0.0, %v5532
        %v5534 = vpop.f32.mrf.mxu0
        %v5535 = vpop.f32.mrf.mxu0
        %v5536 = vadd.f32 0.0, %v5535
        %v5537 = vpop.f32.mrf.mxu0
        %5538 = vmatprep.mubr.bf16.mxu0 0
        %5539 = vmatmul.mubr.bf16.gmra.mxu0 %v5339
        %v5540 = vpop.f32.mrf.mxu0
        %v5541 = vadd.f32 0.0, %v5540
        %v5542 = vpop.f32.mrf.mxu0
        %v5543 = vpop.f32.mrf.mxu0
        %v5544 = vadd.f32 0.0, %v5543
        %v5545 = vpop.f32.mrf.mxu0
        %5546 = vmatprep.mubr.bf16.mxu0 0
        %5547 = vmatmul.mubr.bf16.gmra.mxu0 %v5341
        %v5548 = vpop.f32.mrf.mxu0
        %v5549 = vadd.f32 0.0, %v5548
        %v5550 = vpop.f32.mrf.mxu0
        %v5551 = vpop.f32.mrf.mxu0
        %v5552 = vadd.f32 0.0, %v5551
        %v5553 = vpop.f32.mrf.mxu0
        %5554 = vmatprep.mubr.bf16.mxu0 0
        %5555 = vmatmul.mubr.bf16.gmra.mxu0 %v5343
        %v5556 = vpop.f32.mrf.mxu0
        %v5557 = vadd.f32 0.0, %v5556
        %v5558 = vpop.f32.mrf.mxu0
        %v5559 = vpop.f32.mrf.mxu0
        %v5560 = vadd.f32 0.0, %v5559
        %v5561 = vpop.f32.mrf.mxu0
        %5562 = vmatprep.mubr.bf16.mxu0 0
        %5563 = vmatmul.mubr.bf16.gmra.mxu0 %v5345
        %v5564 = vpop.f32.mrf.mxu0
        %v5565 = vadd.f32 0.0, %v5564
        %v5566 = vpop.f32.mrf.mxu0
        %v5567 = vpop.f32.mrf.mxu0
        %v5568 = vadd.f32 0.0, %v5567
        %v5569 = vpop.f32.mrf.mxu0
        %5570 = vmatprep.mubr.bf16.mxu0 0
        %5571 = vmatmul.mubr.bf16.gmra.mxu0 %v5347
        %v5572 = vpop.f32.mrf.mxu0
        %v5573 = vadd.f32 0.0, %v5572
        %v5574 = vpop.f32.mrf.mxu0
        %v5575 = vpop.f32.mrf.mxu0
        %v5576 = vadd.f32 0.0, %v5575
        %v5577 = vpop.f32.mrf.mxu0
        %5578 = vmatprep.mubr.bf16.mxu0 0
        %5579 = vmatmul.mubr.bf16.gmra.mxu0 %v5349
        %v5580 = vpop.f32.mrf.mxu0
        %v5581 = vadd.f32 0.0, %v5580
        %v5582 = vpop.f32.mrf.mxu0
        %v5583 = vpop.f32.mrf.mxu0
        %v5584 = vadd.f32 0.0, %v5583
        %v5585 = vpop.f32.mrf.mxu0
        %5586 = vmatprep.mubr.bf16.mxu0 0
        %5587 = vmatmul.mubr.bf16.gmra.mxu0 %v5351
        %v5588 = vpop.f32.mrf.mxu0
        %v5589 = vadd.f32 0.0, %v5588
        %v5590 = vpop.f32.mrf.mxu0
        %v5591 = vpop.f32.mrf.mxu0
        %v5592 = vadd.f32 0.0, %v5591
        %v5593 = vpop.f32.mrf.mxu0
        %5594 = vmatprep.mubr.bf16.mxu0 0
        %5595 = vmatmul.mubr.bf16.gmra.mxu0 %v5353
        %v5596 = vpop.f32.mrf.mxu0
        %v5597 = vadd.f32 0.0, %v5596
        %v5598 = vpop.f32.mrf.mxu0
        %v5599 = vpop.f32.mrf.mxu0
        %v5600 = vadd.f32 0.0, %v5599
        %v5601 = vpop.f32.mrf.mxu0
        %5602 = vmatprep.mubr.bf16.mxu0 0
        %5603 = vmatmul.mubr.bf16.gmra.mxu0 %v5355
        %v5604 = vpop.f32.mrf.mxu0
        %v5605 = vadd.f32 0.0, %v5604
        %v5606 = vpop.f32.mrf.mxu0
        %v5607 = vpop.f32.mrf.mxu0
        %v5608 = vadd.f32 0.0, %v5607
        %v5609 = vpop.f32.mrf.mxu0
        %5610 = vmatprep.mubr.bf16.mxu0 0
        %5611 = vmatmul.mubr.bf16.gmra.mxu0 %v5357
        %v5612 = vpop.f32.mrf.mxu0
        %v5613 = vadd.f32 0.0, %v5612
        %v5614 = vpop.f32.mrf.mxu0
        %v5615 = vpop.f32.mrf.mxu0
        %v5616 = vadd.f32 0.0, %v5615
        %v5617 = vpop.f32.mrf.mxu0
        %5618 = vmatprep.mubr.bf16.mxu0 0
        %5619 = vmatmul.mubr.bf16.gmra.mxu0 %v5359
        %v5620 = vpop.f32.mrf.mxu0
        %v5621 = vadd.f32 0.0, %v5620
        %v5622 = vpop.f32.mrf.mxu0
        %v5623 = vpop.f32.mrf.mxu0
        %v5624 = vadd.f32 0.0, %v5623
        %v5625 = vpop.f32.mrf.mxu0
        %5626 = vmatprep.mubr.bf16.mxu0 0
        %5627 = vmatmul.mubr.bf16.gmra.mxu0 %v5361
        %v5628 = vpop.f32.mrf.mxu0
        %v5629 = vadd.f32 0.0, %v5628
        %v5630 = vpop.f32.mrf.mxu0
        %v5631 = vpop.f32.mrf.mxu0
        %v5632 = vadd.f32 0.0, %v5631
        %v5633 = vpop.f32.mrf.mxu0
        %5634 = vmatprep.mubr.bf16.mxu0 0
        %5635 = vmatmul.mubr.bf16.gmra.mxu0 %v5363
        %v5636 = vpop.f32.mrf.mxu0
        %v5637 = vadd.f32 0.0, %v5636
        %v5638 = vpop.f32.mrf.mxu0
        %v5639 = vpop.f32.mrf.mxu0
        %v5640 = vadd.f32 0.0, %v5639
        %v5641 = vpop.f32.mrf.mxu0
        %5642 = vmatprep.mubr.bf16.mxu0 0
        %5643 = vmatmul.mubr.bf16.gmra.mxu0 %v5365
        %v5644 = vpop.f32.mrf.mxu0
        %v5645 = vadd.f32 0.0, %v5644
        %v5646 = vpop.f32.mrf.mxu0
        %v5647 = vpop.f32.mrf.mxu0
        %v5648 = vadd.f32 0.0, %v5647
        %v5649 = vpop.f32.mrf.mxu0
        %5650 = vmatprep.mubr.bf16.mxu0 0
        %5651 = vmatmul.mubr.bf16.gmra.mxu0 %v5367
        %v5652 = vpop.f32.mrf.mxu0
        %v5653 = vadd.f32 0.0, %v5652
        %v5654 = vpop.f32.mrf.mxu0
        %v5655 = vpop.f32.mrf.mxu0
        %v5656 = vadd.f32 0.0, %v5655
        %v5657 = vpop.f32.mrf.mxu0
        %5658 = vmatprep.mubr.bf16.mxu0 0
        %5659 = vmatmul.mubr.bf16.gmra.mxu0 %v5369
        %v5660 = vpop.f32.mrf.mxu0
        %v5661 = vadd.f32 0.0, %v5660
        %v5662 = vpop.f32.mrf.mxu0
        %v5663 = vpop.f32.mrf.mxu0
        %v5664 = vadd.f32 0.0, %v5663
        %v5665 = vpop.f32.mrf.mxu0
        %5666 = vmatprep.mubr.bf16.mxu0 0
        %5667 = vmatmul.mubr.bf16.gmra.mxu0 %v5371
        %v5668 = vpop.f32.mrf.mxu0
        %v5669 = vadd.f32 0.0, %v5668
        %v5670 = vpop.f32.mrf.mxu0
        %v5671 = vpop.f32.mrf.mxu0
        %v5672 = vadd.f32 0.0, %v5671
        %v5673 = vpop.f32.mrf.mxu0
        %5674 = vmatprep.mubr.bf16.mxu0 0
        %5675 = vmatmul.mubr.bf16.gmra.mxu0 %v5373
        %v5676 = vpop.f32.mrf.mxu0
        %v5677 = vadd.f32 0.0, %v5676
        %v5678 = vpop.f32.mrf.mxu0
        %v5679 = vpop.f32.mrf.mxu0
        %v5680 = vadd.f32 0.0, %v5679
        %v5681 = vpop.f32.mrf.mxu0
        %5682 = vmatprep.mubr.bf16.mxu0 0
        %5683 = vmatmul.mubr.bf16.gmra.mxu0 %v5375
        %v5684 = vpop.f32.mrf.mxu0
        %v5685 = vadd.f32 0.0, %v5684
        %v5686 = vpop.f32.mrf.mxu0
        %v5687 = vpop.f32.mrf.mxu0
        %v5688 = vadd.f32 0.0, %v5687
        %v5689 = vpop.f32.mrf.mxu0
        %5690 = vmatprep.mubr.bf16.mxu0 0
        %5691 = vmatmul.mubr.bf16.gmra.mxu0 %v5377
        %v5692 = vpop.f32.mrf.mxu0
        %v5693 = vadd.f32 0.0, %v5692
        %v5694 = vpop.f32.mrf.mxu0
        %v5695 = vpop.f32.mrf.mxu0
        %v5696 = vadd.f32 0.0, %v5695
        %v5697 = vpop.f32.mrf.mxu0
        %5698 = vmatprep.mubr.bf16.mxu0 0
        %5699 = vmatmul.mubr.bf16.gmra.mxu0 %v5379
        %v5700 = vpop.f32.mrf.mxu0
        %v5701 = vadd.f32 0.0, %v5700
        %v5702 = vpop.f32.mrf.mxu0
        %v5703 = vpop.f32.mrf.mxu0
        %v5704 = vadd.f32 0.0, %v5703
        %v5705 = vpop.f32.mrf.mxu0
        %5706 = vmatprep.mubr.bf16.mxu0 0
        %5707 = vmatmul.mubr.bf16.gmra.mxu0 %v5381
        %v5708 = vpop.f32.mrf.mxu0
        %v5709 = vadd.f32 0.0, %v5708
        %v5710 = vpop.f32.mrf.mxu0
        %v5711 = vpop.f32.mrf.mxu0
        %v5712 = vadd.f32 0.0, %v5711
        %v5713 = vpop.f32.mrf.mxu0
        %5714 = vmatprep.mubr.bf16.mxu0 0
        %5715 = vmatmul.mubr.bf16.gmra.mxu0 %v5383
        %v5716 = vpop.f32.mrf.mxu0
        %v5717 = vadd.f32 0.0, %v5716
        %v5718 = vpop.f32.mrf.mxu0
        %v5719 = vpop.f32.mrf.mxu0
        %v5720 = vadd.f32 0.0, %v5719
        %v5721 = vpop.f32.mrf.mxu0
        %5722 = vmatprep.mubr.bf16.mxu0 0
        %5723 = vmatmul.mubr.bf16.gmra.mxu0 %v5385
        %v5724 = vpop.f32.mrf.mxu0
        %v5725 = vadd.f32 0.0, %v5724
        %v5726 = vpop.f32.mrf.mxu0
        %v5727 = vpop.f32.mrf.mxu0
        %v5728 = vadd.f32 0.0, %v5727
        %v5729 = vpop.f32.mrf.mxu0
        %5730 = vmatprep.mubr.bf16.mxu0 0
        %5731 = vmatmul.mubr.bf16.gmra.mxu0 %v5387
        %v5732 = vpop.f32.mrf.mxu0
        %v5733 = vadd.f32 0.0, %v5732
        %v5734 = vpop.f32.mrf.mxu0
        %v5735 = vpop.f32.mrf.mxu0
        %v5736 = vadd.f32 0.0, %v5735
        %v5737 = vpop.f32.mrf.mxu0
        %5738 = vmatprep.mubr.bf16.mxu0 0
        %5739 = vmatmul.mubr.bf16.gmra.mxu0 %v5389
        %v5740 = vpop.f32.mrf.mxu0
        %v5741 = vadd.f32 0.0, %v5740
        %v5742 = vpop.f32.mrf.mxu0
        %v5743 = vpop.f32.mrf.mxu0
        %v5744 = vadd.f32 0.0, %v5743
        %v5745 = vpop.f32.mrf.mxu0
        %5746 = vmatprep.mubr.bf16.mxu0 0
        %5747 = vmatmul.mubr.bf16.gmra.mxu0 %v5391
        %v5748 = vpop.f32.mrf.mxu0
        %v5749 = vadd.f32 0.0, %v5748
        %v5750 = vpop.f32.mrf.mxu0
        %v5751 = vpop.f32.mrf.mxu0
        %v5752 = vadd.f32 0.0, %v5751
        %v5753 = vpop.f32.mrf.mxu0
        %5754 = vmatprep.mubr.bf16.mxu0 0
        %5755 = vmatmul.mubr.bf16.gmra.mxu0 %v5393
        %v5756 = vpop.f32.mrf.mxu0
        %v5757 = vadd.f32 0.0, %v5756
        %v5758 = vpop.f32.mrf.mxu0
        %v5759 = vpop.f32.mrf.mxu0
        %v5760 = vadd.f32 0.0, %v5759
        %v5761 = vpop.f32.mrf.mxu0
        %5762 = vdwg.mxu0
        %v5763 = vadd.f32 %v5248, %v5509
        %v5764 = vadd.f32 %v5249, %v5512
        %v5765 = vadd.f32 %v5250, %v5517
        %v5766 = vadd.f32 %v5251, %v5520
        %v5767 = vadd.f32 %v5252, %v5525
        %v5768 = vadd.f32 %v5253, %v5528
        %v5769 = vadd.f32 %v5254, %v5533
        %v5770 = vadd.f32 %v5255, %v5536
        %v5771 = vadd.f32 %v5256, %v5541
        %v5772 = vadd.f32 %v5257, %v5544
        %v5773 = vadd.f32 %v5258, %v5549
        %v5774 = vadd.f32 %v5259, %v5552
        %v5775 = vadd.f32 %v5260, %v5557
        %v5776 = vadd.f32 %v5261, %v5560
        %v5777 = vadd.f32 %v5262, %v5565
        %v5778 = vadd.f32 %v5263, %v5568
        %v5779 = vadd.f32 %v5264, %v5573
        %v5780 = vadd.f32 %v5265, %v5576
        %v5781 = vadd.f32 %v5266, %v5581
        %v5782 = vadd.f32 %v5267, %v5584
        %v5783 = vadd.f32 %v5268, %v5589
        %v5784 = vadd.f32 %v5269, %v5592
        %v5785 = vadd.f32 %v5270, %v5597
        %v5786 = vadd.f32 %v5271, %v5600
        %v5787 = vadd.f32 %v5272, %v5605
        %v5788 = vadd.f32 %v5273, %v5608
        %v5789 = vadd.f32 %v5274, %v5613
        %v5790 = vadd.f32 %v5275, %v5616
        %v5791 = vadd.f32 %v5276, %v5621
        %v5792 = vadd.f32 %v5277, %v5624
        %v5793 = vadd.f32 %v5278, %v5629
        %v5794 = vadd.f32 %v5279, %v5632
        %v5795 = vadd.f32 %v5280, %v5637
        %v5796 = vadd.f32 %v5281, %v5640
        %v5797 = vadd.f32 %v5282, %v5645
        %v5798 = vadd.f32 %v5283, %v5648
        %v5799 = vadd.f32 %v5284, %v5653
        %v5800 = vadd.f32 %v5285, %v5656
        %v5801 = vadd.f32 %v5286, %v5661
        %v5802 = vadd.f32 %v5287, %v5664
        %v5803 = vadd.f32 %v5288, %v5669
        %v5804 = vadd.f32 %v5289, %v5672
        %v5805 = vadd.f32 %v5290, %v5677
        %v5806 = vadd.f32 %v5291, %v5680
        %v5807 = vadd.f32 %v5292, %v5685
        %v5808 = vadd.f32 %v5293, %v5688
        %v5809 = vadd.f32 %v5294, %v5693
        %v5810 = vadd.f32 %v5295, %v5696
        %v5811 = vadd.f32 %v5296, %v5701
        %v5812 = vadd.f32 %v5297, %v5704
        %v5813 = vadd.f32 %v5298, %v5709
        %v5814 = vadd.f32 %v5299, %v5712
        %v5815 = vadd.f32 %v5300, %v5717
        %v5816 = vadd.f32 %v5301, %v5720
        %v5817 = vadd.f32 %v5302, %v5725
        %v5818 = vadd.f32 %v5303, %v5728
        %v5819 = vadd.f32 %v5304, %v5733
        %v5820 = vadd.f32 %v5305, %v5736
        %v5821 = vadd.f32 %v5306, %v5741
        %v5822 = vadd.f32 %v5307, %v5744
        %v5823 = vadd.f32 %v5308, %v5749
        %v5824 = vadd.f32 %v5309, %v5752
        %v5825 = vadd.f32 %v5310, %v5757
        %v5826 = vadd.f32 %v5311, %v5760
        %v5827 = vpack.c.bf16 %v5764, %v5763
        %v5828 = vpack.c.bf16 %v5766, %v5765
        %v5829 = vpack.c.bf16 %v5768, %v5767
        %v5830 = vpack.c.bf16 %v5770, %v5769
        %v5831 = vpack.c.bf16 %v5772, %v5771
        %v5832 = vpack.c.bf16 %v5774, %v5773
        %v5833 = vpack.c.bf16 %v5776, %v5775
        %v5834 = vpack.c.bf16 %v5778, %v5777
        %v5835 = vpack.c.bf16 %v5780, %v5779
        %v5836 = vpack.c.bf16 %v5782, %v5781
        %v5837 = vpack.c.bf16 %v5784, %v5783
        %v5838 = vpack.c.bf16 %v5786, %v5785
        %v5839 = vpack.c.bf16 %v5788, %v5787
        %v5840 = vpack.c.bf16 %v5790, %v5789
        %v5841 = vpack.c.bf16 %v5792, %v5791
        %v5842 = vpack.c.bf16 %v5794, %v5793
        %v5843 = vpack.c.bf16 %v5796, %v5795
        %v5844 = vpack.c.bf16 %v5798, %v5797
        %v5845 = vpack.c.bf16 %v5800, %v5799
        %v5846 = vpack.c.bf16 %v5802, %v5801
        %v5847 = vpack.c.bf16 %v5804, %v5803
        %v5848 = vpack.c.bf16 %v5806, %v5805
        %v5849 = vpack.c.bf16 %v5808, %v5807
        %v5850 = vpack.c.bf16 %v5810, %v5809
        %v5851 = vpack.c.bf16 %v5812, %v5811
        %v5852 = vpack.c.bf16 %v5814, %v5813
        %v5853 = vpack.c.bf16 %v5816, %v5815
        %v5854 = vpack.c.bf16 %v5818, %v5817
        %v5855 = vpack.c.bf16 %v5820, %v5819
        %v5856 = vpack.c.bf16 %v5822, %v5821
        %v5857 = vpack.c.bf16 %v5824, %v5823
        %v5858 = vpack.c.bf16 %v5826, %v5825
        %v5891 = vunpack.c.l.b16 %v5827
        %v5892 = vunpack.c.h.b16 %v5827
        %v5893 = vunpack.c.l.b16 %v5828
        %v5894 = vunpack.c.h.b16 %v5828
        %v5895 = vunpack.c.l.b16 %v5829
        %v5896 = vunpack.c.h.b16 %v5829
        %v5897 = vunpack.c.l.b16 %v5830
        %v5898 = vunpack.c.h.b16 %v5830
        %v5899 = vunpack.c.l.b16 %v5831
        %v5900 = vunpack.c.h.b16 %v5831
        %v5901 = vunpack.c.l.b16 %v5832
        %v5902 = vunpack.c.h.b16 %v5832
        %v5903 = vunpack.c.l.b16 %v5833
        %v5904 = vunpack.c.h.b16 %v5833
        %v5905 = vunpack.c.l.b16 %v5834
        %v5906 = vunpack.c.h.b16 %v5834
        %v5907 = vunpack.c.l.b16 %v5835
        %v5908 = vunpack.c.h.b16 %v5835
        %v5909 = vunpack.c.l.b16 %v5836
        %v5910 = vunpack.c.h.b16 %v5836
        %v5911 = vunpack.c.l.b16 %v5837
        %v5912 = vunpack.c.h.b16 %v5837
        %v5913 = vunpack.c.l.b16 %v5838
        %v5914 = vunpack.c.h.b16 %v5838
        %v5915 = vunpack.c.l.b16 %v5839
        %v5916 = vunpack.c.h.b16 %v5839
        %v5917 = vunpack.c.l.b16 %v5840
        %v5918 = vunpack.c.h.b16 %v5840
        %v5919 = vunpack.c.l.b16 %v5841
        %v5920 = vunpack.c.h.b16 %v5841
        %v5921 = vunpack.c.l.b16 %v5842
        %v5922 = vunpack.c.h.b16 %v5842
        %v5923 = vunpack.c.l.b16 %v5843
        %v5924 = vunpack.c.h.b16 %v5843
        %v5925 = vunpack.c.l.b16 %v5844
        %v5926 = vunpack.c.h.b16 %v5844
        %v5927 = vunpack.c.l.b16 %v5845
        %v5928 = vunpack.c.h.b16 %v5845
        %v5929 = vunpack.c.l.b16 %v5846
        %v5930 = vunpack.c.h.b16 %v5846
        %v5931 = vunpack.c.l.b16 %v5847
        %v5932 = vunpack.c.h.b16 %v5847
        %v5933 = vunpack.c.l.b16 %v5848
        %v5934 = vunpack.c.h.b16 %v5848
        %v5935 = vunpack.c.l.b16 %v5849
        %v5936 = vunpack.c.h.b16 %v5849
        %v5937 = vunpack.c.l.b16 %v5850
        %v5938 = vunpack.c.h.b16 %v5850
        %v5939 = vunpack.c.l.b16 %v5851
        %v5940 = vunpack.c.h.b16 %v5851
        %v5941 = vunpack.c.l.b16 %v5852
        %v5942 = vunpack.c.h.b16 %v5852
        %v5943 = vunpack.c.l.b16 %v5853
        %v5944 = vunpack.c.h.b16 %v5853
        %v5945 = vunpack.c.l.b16 %v5854
        %v5946 = vunpack.c.h.b16 %v5854
        %v5947 = vunpack.c.l.b16 %v5855
        %v5948 = vunpack.c.h.b16 %v5855
        %v5949 = vunpack.c.l.b16 %v5856
        %v5950 = vunpack.c.h.b16 %v5856
        %v5951 = vunpack.c.l.b16 %v5857
        %v5952 = vunpack.c.h.b16 %v5857
        %v5953 = vunpack.c.l.b16 %v5858
        %v5954 = vunpack.c.h.b16 %v5858
        %v5955 = vpack.c.b16 %v5891, %v5891
        %v5956 = vpack.c.b16 %v5892, %v5892
        %v5957 = vpack.c.b16 %v5893, %v5893
        %v5958 = vpack.c.b16 %v5894, %v5894
        %v5959 = vpack.c.b16 %v5895, %v5895
        %v5960 = vpack.c.b16 %v5896, %v5896
        %v5961 = vpack.c.b16 %v5897, %v5897
        %v5962 = vpack.c.b16 %v5898, %v5898
        %v5963 = vpack.c.b16 %v5899, %v5899
        %v5964 = vpack.c.b16 %v5900, %v5900
        %v5965 = vpack.c.b16 %v5901, %v5901
        %v5966 = vpack.c.b16 %v5902, %v5902
        %v5967 = vpack.c.b16 %v5903, %v5903
        %v5968 = vpack.c.b16 %v5904, %v5904
        %v5969 = vpack.c.b16 %v5905, %v5905
        %v5970 = vpack.c.b16 %v5906, %v5906
        %v5971 = vpack.c.b16 %v5907, %v5907
        %v5972 = vpack.c.b16 %v5908, %v5908
        %v5973 = vpack.c.b16 %v5909, %v5909
        %v5974 = vpack.c.b16 %v5910, %v5910
        %v5975 = vpack.c.b16 %v5911, %v5911
        %v5976 = vpack.c.b16 %v5912, %v5912
        %v5977 = vpack.c.b16 %v5913, %v5913
        %v5978 = vpack.c.b16 %v5914, %v5914
        %v5979 = vpack.c.b16 %v5915, %v5915
        %v5980 = vpack.c.b16 %v5916, %v5916
        %v5981 = vpack.c.b16 %v5917, %v5917
        %v5982 = vpack.c.b16 %v5918, %v5918
        %v5983 = vpack.c.b16 %v5919, %v5919
        %v5984 = vpack.c.b16 %v5920, %v5920
        %v5985 = vpack.c.b16 %v5921, %v5921
        %v5986 = vpack.c.b16 %v5922, %v5922
        %v5987 = vpack.c.b16 %v5923, %v5923
        %v5988 = vpack.c.b16 %v5924, %v5924
        %v5989 = vpack.c.b16 %v5925, %v5925
        %v5990 = vpack.c.b16 %v5926, %v5926
        %v5991 = vpack.c.b16 %v5927, %v5927
        %v5992 = vpack.c.b16 %v5928, %v5928
        %v5993 = vpack.c.b16 %v5929, %v5929
        %v5994 = vpack.c.b16 %v5930, %v5930
        %v5995 = vpack.c.b16 %v5931, %v5931
        %v5996 = vpack.c.b16 %v5932, %v5932
        %v5997 = vpack.c.b16 %v5933, %v5933
        %v5998 = vpack.c.b16 %v5934, %v5934
        %v5999 = vpack.c.b16 %v5935, %v5935
        %v6000 = vpack.c.b16 %v5936, %v5936
        %v6001 = vpack.c.b16 %v5937, %v5937
        %v6002 = vpack.c.b16 %v5938, %v5938
        %v6003 = vpack.c.b16 %v5939, %v5939
        %v6004 = vpack.c.b16 %v5940, %v5940
        %v6005 = vpack.c.b16 %v5941, %v5941
        %v6006 = vpack.c.b16 %v5942, %v5942
        %v6007 = vpack.c.b16 %v5943, %v5943
        %v6008 = vpack.c.b16 %v5944, %v5944
        %v6009 = vpack.c.b16 %v5945, %v5945
        %v6010 = vpack.c.b16 %v5946, %v5946
        %v6011 = vpack.c.b16 %v5947, %v5947
        %v6012 = vpack.c.b16 %v5948, %v5948
        %v6013 = vpack.c.b16 %v5949, %v5949
        %v6014 = vpack.c.b16 %v5950, %v5950
        %v6015 = vpack.c.b16 %v5951, %v5951
        %v6016 = vpack.c.b16 %v5952, %v5952
        %v6017 = vpack.c.b16 %v5953, %v5953
        %v6018 = vpack.c.b16 %v5954, %v5954
        %6083 = vst [vmem:[%s223] sm:$0xf] %v5955
        %6084 = vst [vmem:[%s223 + $0x4] sm:$0xf] %v5956
        %6085 = vst [vmem:[%s223 + $0x8] sm:$0xf] %v5957
        %6086 = vst [vmem:[%s223 + $0xc] sm:$0xf] %v5958
        %6087 = vst [vmem:[%s223 + $0x10] sm:$0xf] %v5959
        %6088 = vst [vmem:[%s223 + $0x14] sm:$0xf] %v5960
        %6089 = vst [vmem:[%s223 + $0x18] sm:$0xf] %v5961
        %6090 = vst [vmem:[%s223 + $0x1c] sm:$0xf] %v5962
        %6091 = vst [vmem:[%s223 + $0x20] sm:$0xf] %v5963
        %6092 = vst [vmem:[%s223 + $0x24] sm:$0xf] %v5964
        %6093 = vst [vmem:[%s223 + $0x28] sm:$0xf] %v5965
        %6094 = vst [vmem:[%s223 + $0x2c] sm:$0xf] %v5966
        %6095 = vst [vmem:[%s223 + $0x30] sm:$0xf] %v5967
        %6096 = vst [vmem:[%s223 + $0x34] sm:$0xf] %v5968
        %6097 = vst [vmem:[%s223 + $0x38] sm:$0xf] %v5969
        %6098 = vst [vmem:[%s223 + $0x3c] sm:$0xf] %v5970
        %6099 = vst [vmem:[%s223 + $0x40] sm:$0xf] %v5971
        %6100 = vst [vmem:[%s223 + $0x44] sm:$0xf] %v5972
        %6101 = vst [vmem:[%s223 + $0x48] sm:$0xf] %v5973
        %6102 = vst [vmem:[%s223 + $0x4c] sm:$0xf] %v5974
        %6103 = vst [vmem:[%s223 + $0x50] sm:$0xf] %v5975
        %6104 = vst [vmem:[%s223 + $0x54] sm:$0xf] %v5976
        %6105 = vst [vmem:[%s223 + $0x58] sm:$0xf] %v5977
        %6106 = vst [vmem:[%s223 + $0x5c] sm:$0xf] %v5978
        %6107 = vst [vmem:[%s223 + $0x60] sm:$0xf] %v5979
        %6108 = vst [vmem:[%s223 + $0x64] sm:$0xf] %v5980
        %6109 = vst [vmem:[%s223 + $0x68] sm:$0xf] %v5981
        %6110 = vst [vmem:[%s223 + $0x6c] sm:$0xf] %v5982
        %6111 = vst [vmem:[%s223 + $0x70] sm:$0xf] %v5983
        %6112 = vst [vmem:[%s223 + $0x74] sm:$0xf] %v5984
        %6113 = vst [vmem:[%s223 + $0x78] sm:$0xf] %v5985
        %6114 = vst [vmem:[%s223 + $0x7c] sm:$0xf] %v5986
        %6115 = vst [vmem:[%s223 + $0x80] sm:$0xf] %v5987
        %6116 = vst [vmem:[%s223 + $0x84] sm:$0xf] %v5988
        %6117 = vst [vmem:[%s223 + $0x88] sm:$0xf] %v5989
        %6118 = vst [vmem:[%s223 + $0x8c] sm:$0xf] %v5990
        %6119 = vst [vmem:[%s223 + $0x90] sm:$0xf] %v5991
        %6120 = vst [vmem:[%s223 + $0x94] sm:$0xf] %v5992
        %6121 = vst [vmem:[%s223 + $0x98] sm:$0xf] %v5993
        %6122 = vst [vmem:[%s223 + $0x9c] sm:$0xf] %v5994
        %6123 = vst [vmem:[%s223 + $0xa0] sm:$0xf] %v5995
        %6124 = vst [vmem:[%s223 + $0xa4] sm:$0xf] %v5996
        %6125 = vst [vmem:[%s223 + $0xa8] sm:$0xf] %v5997
        %6126 = vst [vmem:[%s223 + $0xac] sm:$0xf] %v5998
        %6127 = vst [vmem:[%s223 + $0xb0] sm:$0xf] %v5999
        %6128 = vst [vmem:[%s223 + $0xb4] sm:$0xf] %v6000
        %6129 = vst [vmem:[%s223 + $0xb8] sm:$0xf] %v6001
        %6130 = vst [vmem:[%s223 + $0xbc] sm:$0xf] %v6002
        %6131 = vst [vmem:[%s223 + $0xc0] sm:$0xf] %v6003
        %6132 = vst [vmem:[%s223 + $0xc4] sm:$0xf] %v6004
        %6133 = vst [vmem:[%s223 + $0xc8] sm:$0xf] %v6005
        %6134 = vst [vmem:[%s223 + $0xcc] sm:$0xf] %v6006
        %6135 = vst [vmem:[%s223 + $0xd0] sm:$0xf] %v6007
        %6136 = vst [vmem:[%s223 + $0xd4] sm:$0xf] %v6008
        %6137 = vst [vmem:[%s223 + $0xd8] sm:$0xf] %v6009
        %6138 = vst [vmem:[%s223 + $0xdc] sm:$0xf] %v6010
        %6139 = vst [vmem:[%s223 + $0xe0] sm:$0xf] %v6011
        %6140 = vst [vmem:[%s223 + $0xe4] sm:$0xf] %v6012
        %6141 = vst [vmem:[%s223 + $0xe8] sm:$0xf] %v6013
        %6142 = vst [vmem:[%s223 + $0xec] sm:$0xf] %v6014
        %6143 = vst [vmem:[%s223 + $0xf0] sm:$0xf] %v6015
        %6144 = vst [vmem:[%s223 + $0xf4] sm:$0xf] %v6016
        %6145 = vst [vmem:[%s223 + $0xf8] sm:$0xf] %v6017
        %6146 = vst [vmem:[%s223 + $0xfc] sm:$0xf] %v6018
        %v6147 = vlaneseq
        %v6148 = vshrl.u32 %v6147, 7
        %v6149 = vadd.s32 %v6148, 8
        %v6150 = vadd.s32 %v6148, 16
        %v6151 = vadd.s32 %v6148, 24
        %v6152 = vstv %s233
        %v6153 = vadd.s32 %v6152, 1
        %v6154 = vadd.s32 %v6152, 2
        %v6155 = vadd.s32 %v6152, 3
        %v6156 = vadd.s32 %v6152, 4
        %v6157 = vadd.s32 %v6152, 5
        %v6158 = vadd.s32 %v6152, 6
        %v6159 = vadd.s32 %v6152, 7
        %v6160 = vadd.s32 %v6152, 8
        %v6161 = vadd.s32 %v6152, 9
        %v6162 = vadd.s32 %v6152, 10
        %v6163 = vadd.s32 %v6152, 11
        %v6164 = vadd.s32 %v6152, 12
        %v6165 = vadd.s32 %v6152, 13
        %v6166 = vadd.s32 %v6152, 14
        %v6167 = vadd.s32 %v6152, 15
        %vm6168 = vcmp.lt.s32.totalorder %v6152, 16
        %vm6169 = vcmp.lt.s32.totalorder %v6153, 16
        %vm6170 = vcmp.lt.s32.totalorder %v6154, 16
        %vm6171 = vcmp.lt.s32.totalorder %v6155, 16
        %vm6172 = vcmp.lt.s32.totalorder %v6156, 16
        %vm6173 = vcmp.lt.s32.totalorder %v6157, 16
        %vm6174 = vcmp.lt.s32.totalorder %v6158, 16
        %vm6175 = vcmp.lt.s32.totalorder %v6159, 16
        %vm6176 = vcmp.lt.s32.totalorder %v6160, 16
        %vm6177 = vcmp.lt.s32.totalorder %v6161, 16
        %vm6178 = vcmp.lt.s32.totalorder %v6162, 16
        %vm6179 = vcmp.lt.s32.totalorder %v6163, 16
        %vm6180 = vcmp.lt.s32.totalorder %v6164, 16
        %vm6181 = vcmp.lt.s32.totalorder %v6165, 16
        %vm6182 = vcmp.lt.s32.totalorder %v6166, 16
        %vm6183 = vcmp.lt.s32.totalorder %v6167, 16
        %vm6184 = vcmp.lt.s32.totalorder %v6148, 16
        %vm6185 = vcmp.lt.s32.totalorder %v6149, 16
        %vm6186 = vcmp.lt.s32.totalorder %v6150, 16
        %vm6187 = vcmp.lt.s32.totalorder %v6151, 16
        %vm6188 = vmand %vm6168, %vm6184
        %vm6189 = vmand %vm6168, %vm6185
        %vm6190 = vmand %vm6168, %vm6186
        %vm6191 = vmand %vm6168, %vm6187
        %vm6192 = vmand %vm6169, %vm6184
        %vm6193 = vmand %vm6169, %vm6185
        %vm6194 = vmand %vm6169, %vm6186
        %vm6195 = vmand %vm6169, %vm6187
        %vm6196 = vmand %vm6170, %vm6184
        %vm6197 = vmand %vm6170, %vm6185
        %vm6198 = vmand %vm6170, %vm6186
        %vm6199 = vmand %vm6170, %vm6187
        %vm6200 = vmand %vm6171, %vm6184
        %vm6201 = vmand %vm6171, %vm6185
        %vm6202 = vmand %vm6171, %vm6186
        %vm6203 = vmand %vm6171, %vm6187
        %vm6204 = vmand %vm6172, %vm6184
        %vm6205 = vmand %vm6172, %vm6185
        %vm6206 = vmand %vm6172, %vm6186
        %vm6207 = vmand %vm6172, %vm6187
        %vm6208 = vmand %vm6173, %vm6184
        %vm6209 = vmand %vm6173, %vm6185
        %vm6210 = vmand %vm6173, %vm6186
        %vm6211 = vmand %vm6173, %vm6187
        %vm6212 = vmand %vm6174, %vm6184
        %vm6213 = vmand %vm6174, %vm6185
        %vm6214 = vmand %vm6174, %vm6186
        %vm6215 = vmand %vm6174, %vm6187
        %vm6216 = vmand %vm6175, %vm6184
        %vm6217 = vmand %vm6175, %vm6185
        %vm6218 = vmand %vm6175, %vm6186
        %vm6219 = vmand %vm6175, %vm6187
        %vm6220 = vmand %vm6176, %vm6184
        %vm6221 = vmand %vm6176, %vm6185
        %vm6222 = vmand %vm6176, %vm6186
        %vm6223 = vmand %vm6176, %vm6187
        %vm6224 = vmand %vm6177, %vm6184
        %vm6225 = vmand %vm6177, %vm6185
        %vm6226 = vmand %vm6177, %vm6186
        %vm6227 = vmand %vm6177, %vm6187
        %vm6228 = vmand %vm6178, %vm6184
        %vm6229 = vmand %vm6178, %vm6185
        %vm6230 = vmand %vm6178, %vm6186
        %vm6231 = vmand %vm6178, %vm6187
        %vm6232 = vmand %vm6179, %vm6184
        %vm6233 = vmand %vm6179, %vm6185
        %vm6234 = vmand %vm6179, %vm6186
        %vm6235 = vmand %vm6179, %vm6187
        %vm6236 = vmand %vm6180, %vm6184
        %vm6237 = vmand %vm6180, %vm6185
        %vm6238 = vmand %vm6180, %vm6186
        %vm6239 = vmand %vm6180, %vm6187
        %vm6240 = vmand %vm6181, %vm6184
        %vm6241 = vmand %vm6181, %vm6185
        %vm6242 = vmand %vm6181, %vm6186
        %vm6243 = vmand %vm6181, %vm6187
        %vm6244 = vmand %vm6182, %vm6184
        %vm6245 = vmand %vm6182, %vm6185
        %vm6246 = vmand %vm6182, %vm6186
        %vm6247 = vmand %vm6182, %vm6187
        %vm6248 = vmand %vm6183, %vm6184
        %vm6249 = vmand %vm6183, %vm6185
        %vm6250 = vmand %vm6183, %vm6186
        %vm6251 = vmand %vm6183, %vm6187
        %v6252 = vsel %vm6188, %v5763, 0.0
        %v6253 = vsel %vm6189, %v5764, 0.0
        %v6254 = vsel %vm6190, %v5765, 0.0
        %v6255 = vsel %vm6191, %v5766, 0.0
        %v6256 = vsel %vm6192, %v5767, 0.0
        %v6257 = vsel %vm6193, %v5768, 0.0
        %v6258 = vsel %vm6194, %v5769, 0.0
        %v6259 = vsel %vm6195, %v5770, 0.0
        %v6260 = vsel %vm6196, %v5771, 0.0
        %v6261 = vsel %vm6197, %v5772, 0.0
        %v6262 = vsel %vm6198, %v5773, 0.0
        %v6263 = vsel %vm6199, %v5774, 0.0
        %v6264 = vsel %vm6200, %v5775, 0.0
        %v6265 = vsel %vm6201, %v5776, 0.0
        %v6266 = vsel %vm6202, %v5777, 0.0
        %v6267 = vsel %vm6203, %v5778, 0.0
        %v6268 = vsel %vm6204, %v5779, 0.0
        %v6269 = vsel %vm6205, %v5780, 0.0
        %v6270 = vsel %vm6206, %v5781, 0.0
        %v6271 = vsel %vm6207, %v5782, 0.0
        %v6272 = vsel %vm6208, %v5783, 0.0
        %v6273 = vsel %vm6209, %v5784, 0.0
        %v6274 = vsel %vm6210, %v5785, 0.0
        %v6275 = vsel %vm6211, %v5786, 0.0
        %v6276 = vsel %vm6212, %v5787, 0.0
        %v6277 = vsel %vm6213, %v5788, 0.0
        %v6278 = vsel %vm6214, %v5789, 0.0
        %v6279 = vsel %vm6215, %v5790, 0.0
        %v6280 = vsel %vm6216, %v5791, 0.0
        %v6281 = vsel %vm6217, %v5792, 0.0
        %v6282 = vsel %vm6218, %v5793, 0.0
        %v6283 = vsel %vm6219, %v5794, 0.0
        %v6284 = vsel %vm6220, %v5795, 0.0
        %v6285 = vsel %vm6221, %v5796, 0.0
        %v6286 = vsel %vm6222, %v5797, 0.0
        %v6287 = vsel %vm6223, %v5798, 0.0
        %v6288 = vsel %vm6224, %v5799, 0.0
        %v6289 = vsel %vm6225, %v5800, 0.0
        %v6290 = vsel %vm6226, %v5801, 0.0
        %v6291 = vsel %vm6227, %v5802, 0.0
        %v6292 = vsel %vm6228, %v5803, 0.0
        %v6293 = vsel %vm6229, %v5804, 0.0
        %v6294 = vsel %vm6230, %v5805, 0.0
        %v6295 = vsel %vm6231, %v5806, 0.0
        %v6296 = vsel %vm6232, %v5807, 0.0
        %v6297 = vsel %vm6233, %v5808, 0.0
        %v6298 = vsel %vm6234, %v5809, 0.0
        %v6299 = vsel %vm6235, %v5810, 0.0
        %v6300 = vsel %vm6236, %v5811, 0.0
        %v6301 = vsel %vm6237, %v5812, 0.0
        %v6302 = vsel %vm6238, %v5813, 0.0
        %v6303 = vsel %vm6239, %v5814, 0.0
        %v6304 = vsel %vm6240, %v5815, 0.0
        %v6305 = vsel %vm6241, %v5816, 0.0
        %v6306 = vsel %vm6242, %v5817, 0.0
        %v6307 = vsel %vm6243, %v5818, 0.0
        %v6308 = vsel %vm6244, %v5819, 0.0
        %v6309 = vsel %vm6245, %v5820, 0.0
        %v6310 = vsel %vm6246, %v5821, 0.0
        %v6311 = vsel %vm6247, %v5822, 0.0
        %v6312 = vsel %vm6248, %v5823, 0.0
        %v6313 = vsel %vm6249, %v5824, 0.0
        %v6314 = vsel %vm6250, %v5825, 0.0
        %v6315 = vsel %vm6251, %v5826, 0.0
        %v6316 = vadd.f32 %v6252, %v6253
        %v6317 = vadd.f32 %v6316, %v6254
        %v6318 = vadd.f32 %v6317, %v6255
        %v6319 = vadd.f32 %v6318, %v6256
        %v6320 = vadd.f32 %v6319, %v6257
        %v6321 = vadd.f32 %v6320, %v6258
        %v6322 = vadd.f32 %v6321, %v6259
        %v6323 = vadd.f32 %v6322, %v6260
        %v6324 = vadd.f32 %v6323, %v6261
        %v6325 = vadd.f32 %v6324, %v6262
        %v6326 = vadd.f32 %v6325, %v6263
        %v6327 = vadd.f32 %v6326, %v6264
        %v6328 = vadd.f32 %v6327, %v6265
        %v6329 = vadd.f32 %v6328, %v6266
        %v6330 = vadd.f32 %v6329, %v6267
        %v6331 = vadd.f32 %v6330, %v6268
        %v6332 = vadd.f32 %v6331, %v6269
        %v6333 = vadd.f32 %v6332, %v6270
        %v6334 = vadd.f32 %v6333, %v6271
        %v6335 = vadd.f32 %v6334, %v6272
        %v6336 = vadd.f32 %v6335, %v6273
        %v6337 = vadd.f32 %v6336, %v6274
        %v6338 = vadd.f32 %v6337, %v6275
        %v6339 = vadd.f32 %v6338, %v6276
        %v6340 = vadd.f32 %v6339, %v6277
        %v6341 = vadd.f32 %v6340, %v6278
        %v6342 = vadd.f32 %v6341, %v6279
        %v6343 = vadd.f32 %v6342, %v6280
        %v6344 = vadd.f32 %v6343, %v6281
        %v6345 = vadd.f32 %v6344, %v6282
        %v6346 = vadd.f32 %v6345, %v6283
        %v6347 = vadd.f32 %v6346, %v6284
        %v6348 = vadd.f32 %v6347, %v6285
        %v6349 = vadd.f32 %v6348, %v6286
        %v6350 = vadd.f32 %v6349, %v6287
        %v6351 = vadd.f32 %v6350, %v6288
        %v6352 = vadd.f32 %v6351, %v6289
        %v6353 = vadd.f32 %v6352, %v6290
        %v6354 = vadd.f32 %v6353, %v6291
        %v6355 = vadd.f32 %v6354, %v6292
        %v6356 = vadd.f32 %v6355, %v6293
        %v6357 = vadd.f32 %v6356, %v6294
        %v6358 = vadd.f32 %v6357, %v6295
        %v6359 = vadd.f32 %v6358, %v6296
        %v6360 = vadd.f32 %v6359, %v6297
        %v6361 = vadd.f32 %v6360, %v6298
        %v6362 = vadd.f32 %v6361, %v6299
        %v6363 = vadd.f32 %v6362, %v6300
        %v6364 = vadd.f32 %v6363, %v6301
        %v6365 = vadd.f32 %v6364, %v6302
        %v6366 = vadd.f32 %v6365, %v6303
        %v6367 = vadd.f32 %v6366, %v6304
        %v6368 = vadd.f32 %v6367, %v6305
        %v6369 = vadd.f32 %v6368, %v6306
        %v6370 = vadd.f32 %v6369, %v6307
        %v6371 = vadd.f32 %v6370, %v6308
        %v6372 = vadd.f32 %v6371, %v6309
        %v6373 = vadd.f32 %v6372, %v6310
        %v6374 = vadd.f32 %v6373, %v6311
        %v6375 = vadd.f32 %v6374, %v6312
        %v6376 = vadd.f32 %v6375, %v6313
        %v6377 = vadd.f32 %v6376, %v6314
        %v6378 = vadd.f32 %v6377, %v6315
        %v6379 = vrot.slane %v6378, 4
        %v6380 = vadd.f32 %v6378, %v6379
        %v6381 = vrot.slane %v6380, 2
        %v6382 = vadd.f32 %v6380, %v6381
        %v6383 = vrot.slane %v6382, 1
        %v6384 = vadd.f32 %v6382, %v6383
        %6385 = vst [vmem:[%s230] sm:$0x1] %v6384
        %v6386 = vmul.f32 %v6252, %v5763
        %v6387 = vmul.f32 %v6253, %v5764
        %v6388 = vmul.f32 %v6254, %v5765
        %v6389 = vmul.f32 %v6255, %v5766
        %v6390 = vmul.f32 %v6256, %v5767
        %v6391 = vmul.f32 %v6257, %v5768
        %v6392 = vmul.f32 %v6258, %v5769
        %v6393 = vmul.f32 %v6259, %v5770
        %v6394 = vmul.f32 %v6260, %v5771
        %v6395 = vmul.f32 %v6261, %v5772
        %v6396 = vmul.f32 %v6262, %v5773
        %v6397 = vmul.f32 %v6263, %v5774
        %v6398 = vmul.f32 %v6264, %v5775
        %v6399 = vmul.f32 %v6265, %v5776
        %v6400 = vmul.f32 %v6266, %v5777
        %v6401 = vmul.f32 %v6267, %v5778
        %v6402 = vmul.f32 %v6268, %v5779
        %v6403 = vmul.f32 %v6269, %v5780
        %v6404 = vmul.f32 %v6270, %v5781
        %v6405 = vmul.f32 %v6271, %v5782
        %v6406 = vmul.f32 %v6272, %v5783
        %v6407 = vmul.f32 %v6273, %v5784
        %v6408 = vmul.f32 %v6274, %v5785
        %v6409 = vmul.f32 %v6275, %v5786
        %v6410 = vmul.f32 %v6276, %v5787
        %v6411 = vmul.f32 %v6277, %v5788
        %v6412 = vmul.f32 %v6278, %v5789
        %v6413 = vmul.f32 %v6279, %v5790
        %v6414 = vmul.f32 %v6280, %v5791
        %v6415 = vmul.f32 %v6281, %v5792
        %v6416 = vmul.f32 %v6282, %v5793
        %v6417 = vmul.f32 %v6283, %v5794
        %v6418 = vmul.f32 %v6284, %v5795
        %v6419 = vmul.f32 %v6285, %v5796
        %v6420 = vmul.f32 %v6286, %v5797
        %v6421 = vmul.f32 %v6287, %v5798
        %v6422 = vmul.f32 %v6288, %v5799
        %v6423 = vmul.f32 %v6289, %v5800
        %v6424 = vmul.f32 %v6290, %v5801
        %v6425 = vmul.f32 %v6291, %v5802
        %v6426 = vmul.f32 %v6292, %v5803
        %v6427 = vmul.f32 %v6293, %v5804
        %v6428 = vmul.f32 %v6294, %v5805
        %v6429 = vmul.f32 %v6295, %v5806
        %v6430 = vmul.f32 %v6296, %v5807
        %v6431 = vmul.f32 %v6297, %v5808
        %v6432 = vmul.f32 %v6298, %v5809
        %v6433 = vmul.f32 %v6299, %v5810
        %v6434 = vmul.f32 %v6300, %v5811
        %v6435 = vmul.f32 %v6301, %v5812
        %v6436 = vmul.f32 %v6302, %v5813
        %v6437 = vmul.f32 %v6303, %v5814
        %v6438 = vmul.f32 %v6304, %v5815
        %v6439 = vmul.f32 %v6305, %v5816
        %v6440 = vmul.f32 %v6306, %v5817
        %v6441 = vmul.f32 %v6307, %v5818
        %v6442 = vmul.f32 %v6308, %v5819
        %v6443 = vmul.f32 %v6309, %v5820
        %v6444 = vmul.f32 %v6310, %v5821
        %v6445 = vmul.f32 %v6311, %v5822
        %v6446 = vmul.f32 %v6312, %v5823
        %v6447 = vmul.f32 %v6313, %v5824
        %v6448 = vmul.f32 %v6314, %v5825
        %v6449 = vmul.f32 %v6315, %v5826
        %v6450 = vadd.f32 %v6386, %v6387
        %v6451 = vadd.f32 %v6450, %v6388
        %v6452 = vadd.f32 %v6451, %v6389
        %v6453 = vadd.f32 %v6452, %v6390
        %v6454 = vadd.f32 %v6453, %v6391
        %v6455 = vadd.f32 %v6454, %v6392
        %v6456 = vadd.f32 %v6455, %v6393
        %v6457 = vadd.f32 %v6456, %v6394
        %v6458 = vadd.f32 %v6457, %v6395
        %v6459 = vadd.f32 %v6458, %v6396
        %v6460 = vadd.f32 %v6459, %v6397
        %v6461 = vadd.f32 %v6460, %v6398
        %v6462 = vadd.f32 %v6461, %v6399
        %v6463 = vadd.f32 %v6462, %v6400
        %v6464 = vadd.f32 %v6463, %v6401
        %v6465 = vadd.f32 %v6464, %v6402
        %v6466 = vadd.f32 %v6465, %v6403
        %v6467 = vadd.f32 %v6466, %v6404
        %v6468 = vadd.f32 %v6467, %v6405
        %v6469 = vadd.f32 %v6468, %v6406
        %v6470 = vadd.f32 %v6469, %v6407
        %v6471 = vadd.f32 %v6470, %v6408
        %v6472 = vadd.f32 %v6471, %v6409
        %v6473 = vadd.f32 %v6472, %v6410
        %v6474 = vadd.f32 %v6473, %v6411
        %v6475 = vadd.f32 %v6474, %v6412
        %v6476 = vadd.f32 %v6475, %v6413
        %v6477 = vadd.f32 %v6476, %v6414
        %v6478 = vadd.f32 %v6477, %v6415
        %v6479 = vadd.f32 %v6478, %v6416
        %v6480 = vadd.f32 %v6479, %v6417
        %v6481 = vadd.f32 %v6480, %v6418
        %v6482 = vadd.f32 %v6481, %v6419
        %v6483 = vadd.f32 %v6482, %v6420
        %v6484 = vadd.f32 %v6483, %v6421
        %v6485 = vadd.f32 %v6484, %v6422
        %v6486 = vadd.f32 %v6485, %v6423
        %v6487 = vadd.f32 %v6486, %v6424
        %v6488 = vadd.f32 %v6487, %v6425
        %v6489 = vadd.f32 %v6488, %v6426
        %v6490 = vadd.f32 %v6489, %v6427
        %v6491 = vadd.f32 %v6490, %v6428
        %v6492 = vadd.f32 %v6491, %v6429
        %v6493 = vadd.f32 %v6492, %v6430
        %v6494 = vadd.f32 %v6493, %v6431
        %v6495 = vadd.f32 %v6494, %v6432
        %v6496 = vadd.f32 %v6495, %v6433
        %v6497 = vadd.f32 %v6496, %v6434
        %v6498 = vadd.f32 %v6497, %v6435
        %v6499 = vadd.f32 %v6498, %v6436
        %v6500 = vadd.f32 %v6499, %v6437
        %v6501 = vadd.f32 %v6500, %v6438
        %v6502 = vadd.f32 %v6501, %v6439
        %v6503 = vadd.f32 %v6502, %v6440
        %v6504 = vadd.f32 %v6503, %v6441
        %v6505 = vadd.f32 %v6504, %v6442
        %v6506 = vadd.f32 %v6505, %v6443
        %v6507 = vadd.f32 %v6506, %v6444
        %v6508 = vadd.f32 %v6507, %v6445
        %v6509 = vadd.f32 %v6508, %v6446
        %v6510 = vadd.f32 %v6509, %v6447
        %v6511 = vadd.f32 %v6510, %v6448
        %v6512 = vadd.f32 %v6511, %v6449
        %v6513 = vrot.slane %v6512, 4
        %v6514 = vadd.f32 %v6512, %v6513
        %v6515 = vrot.slane %v6514, 2
        %v6516 = vadd.f32 %v6514, %v6515
        %v6517 = vrot.slane %v6516, 1
        %v6518 = vadd.f32 %v6516, %v6517
        %6519 = vst [vmem:[%s230 + $0x1] sm:$0x1] %v6518
        %s6520 = sand.u32 %s94, 1
        %s6521 = scalar_lea.sflag [#allocation4], %s6520
        %s6522 = sand.u32 %s94, 1
        %s6523 = smul.addr %s6522, 256
        %s6524 = scalar_lea.vmem [#allocation7], %s6523
        %s6525 = sand.u32 %s122, 1
        %s6526 = scalar_lea.sflag [#allocation9], %s6525
        %s6527 = sand.u32 %s122, 1
        %s6528 = smul.addr %s6527, 2
        %s6529 = scalar_lea.vmem [#allocation8], %s6528
        // Predicated region
        $region37: #{tpu_custom_call.1} parent=27 // pred_check
          %p6530 = pneg %p104
        $region38: #{tpu_custom_call.1} parent=27 // pred_check_branch
          %6532 = sbr.rel (%p6530) target = $region40
        $region39: #{tpu_custom_call.1} parent=27 // pred_region
          %s6533 = smul.u32 64, %s30
          %s6535 = ssub.s32 4096, 4096
          %6536 = vsyncadd %s6521, %s6535
          %s6537 = smul.addr %s29, 64
          %s6538 = sadd.s32 %s6533, %s6537
          %s6539 = smul.addr %s6538, 64
          %s6540 = scalar_lea.hbm %s2, %s6539
          %s6541 = sshll.u32 %s6524, 4
          %s6542 = int_to_ptr.vmem [resolvable:$true] %s6541
          %6547 = dma.vmem_to_hbm [thread:$0]  %s6542, 4096, %s6540, %s6521, 64, 64, 4
        $region40: #{tpu_custom_call.1} parent=27 // pred_fallthru
          _
        // Predicated region
        $region41: #{tpu_custom_call.1} parent=27 // pred_check
          %p6548 = pneg %p132
        $region42: #{tpu_custom_call.1} parent=27 // pred_check_branch
          %6550 = sbr.rel (%p6548) target = $region44
        $region43: #{tpu_custom_call.1} parent=27 // pred_region
          %s6552 = ssub.s32 32, 32
          %6553 = vsyncadd %s6526, %s6552
          %s6554 = sadd.s32 %s30, %s29
          %s6555 = smul.addr %s6554, 32
          %s6556 = scalar_lea.hbm %s3, %s6555
          %s6558 = sshll.u32 %s6529, 4
          %s6559 = int_to_ptr.vmem [resolvable:$true] %s6558
          %6561 = dma.vmem_to_hbm [thread:$0]  %s6559, 32, %s6556, %s6526
        $region44: #{tpu_custom_call.1} parent=27 // pred_fallthru
          _
      $region28: #{tpu_custom_call.1} parent=5 // pred_fallthru
        _
      %p6562 = scmp.le.s32.totalorder 2, %s20
      // Predicated region
      $region45: #{tpu_custom_call.1} parent=5 // pred_check
        %p6563 = pneg %p6562
      $region46: #{tpu_custom_call.1} parent=5 // pred_check_branch
        %6565 = sbr.rel (%p6563) target = $region48
      $region47: #{tpu_custom_call.1} parent=5 // pred_region
        %s6566 = ssub.s32 %s20, 2
        // Predicated region
        $region49: #{tpu_custom_call.1} parent=47 // pred_check
          %p6567 = pneg %p110
        $region50: #{tpu_custom_call.1} parent=47 // pred_check_branch
          %6569 = sbr.rel (%p6567) target = $region52
        $region51: #{tpu_custom_call.1} parent=47 // pred_region
          %s6570 = sand.u32 %s95, 1
          %s6571 = scalar_lea.sflag [#allocation4], %s6570
          %s6572 = sand.u32 %s95, 1
          %s6573 = smul.addr %s6572, 256
          %s6574 = scalar_lea.vmem [#allocation7], %s6573
          %6575 = dma.done %s6571, 4096
        $region52: #{tpu_custom_call.1} parent=47 // pred_fallthru
          _
        // Predicated region
        $region53: #{tpu_custom_call.1} parent=47 // pred_check
          %p6576 = pneg %p138
        $region54: #{tpu_custom_call.1} parent=47 // pred_check_branch
          %6578 = sbr.rel (%p6576) target = $region56
        $region55: #{tpu_custom_call.1} parent=47 // pred_region
          %s6579 = sand.u32 %s123, 1
          %s6580 = scalar_lea.sflag [#allocation9], %s6579
          %s6581 = sand.u32 %s123, 1
          %s6582 = smul.addr %s6581, 2
          %s6583 = scalar_lea.vmem [#allocation8], %s6582
          %6584 = dma.done %s6580, 32
        $region56: #{tpu_custom_call.1} parent=47 // pred_fallthru
          _
      $region48: #{tpu_custom_call.1} parent=5 // pred_fallthru
        _
    $region6: #{tpu_custom_call.1} parent=1 // loop_footer
      %s24 = sadd.s32 1, %s20
    $region7: #{tpu_custom_call.1} parent=1 // loop_footer_branch
      %19 = sbr.rel target = $region3
    $region8: #{tpu_custom_call.1} parent=1 // loop_exit
      _
    %6585 = vsyncpa [#allocation3], 1
    %s6586 = scalar_lea.sflag [#allocation3], 1
    %6587 = vsyncpa %s6586, 1
    %6588 = vsyncpa [#allocation6], 1
    %6589 = vsyncpa [#allocation4], 1
    %s6590 = scalar_lea.sflag [#allocation4], 1
    %6591 = vsyncpa %s6590, 1
    %6592 = vsyncpa [#allocation9], 1
    %s6593 = scalar_lea.sflag [#allocation9], 1
    %6594 = vsyncpa %s6593, 1

</llo_original>
